<compile_context>
chip_gen: v5e
topology: v5e:2x2
jax: 0.10.0
libtpu: 0.0.40
codegen_flags: <defaults>
</compile_context>

<pallas_src>
import functools

import jax
import jax.numpy as jnp
from jax.experimental import pallas as pl
from jax.experimental.pallas import tpu as pltpu


# ---------------------------------------------------------------------------
# Fused kernel
# ---------------------------------------------------------------------------
def _deep_classifier_kernel(*refs, num_layers, hidden, seq_len, batch):
    H = hidden
    Hb = H // 2            # per-direction hidden of the bidirectional stack
    Hd = H // 4            # hidden of the deep stack
    F = H + Hb             # width of the forward-time group (uni + bi-fwd)
    Ht = 2 * H             # merged state width: [uni H | bifwd Hb | bibwd Hb]
    Gm = 4 * Ht            # merged gate width: [i | f | o | g] blocks of Ht
    T, B, L = seq_len, batch, num_layers

    x_ref, lens_ref = refs[0], refs[1]
    merged = refs[2:2 + 3 * L]
    deep = refs[2 + 3 * L:2 + 6 * L]
    wr_ref, br_ref = refs[2 + 6 * L], refs[2 + 6 * L + 1]
    out_ref = refs[2 + 6 * L + 2]

    def mm(a, b):
        return jnp.dot(a, b, preferred_element_type=jnp.float32)

    lens = lens_ref[...]                                     # (B, 1) int32
    # Hoisted packed-sequence validity masks (deep stack uses these directly).
    masks = [t < lens for t in range(T)]                     # each (B, 1) bool

    # Lane predicates: which state / gate lanes belong to forward-time
    # directions (uni + bi-fwd) vs the backward direction (bi-bwd). Hoisted.
    st_lane = jax.lax.broadcasted_iota(jnp.int32, (1, Ht), 1)
    st_is_fwd = st_lane < F                                  # (1, Ht) bool
    g_lane = jax.lax.broadcasted_iota(jnp.int32, (1, Gm), 1)
    g_is_fwd = (g_lane % Ht) < F                             # (1, Gm) bool

    # --- stage 1 + 2: uni stack and bidirectional stack, merged per layer ----
    x_m = x_ref[...]                                         # (T*B, E)
    for l in range(L):
        wih = merged[3 * l][...]
        whh = merged[3 * l + 1][...]
        bias = merged[3 * l + 2][...]
        gx = mm(x_m, wih) + bias                             # hoisted input GEMM
        h = jnp.zeros((B, Ht), jnp.float32)                  # [uni|bifwd|bibwd]
        c = jnp.zeros((B, Ht), jnp.float32)
        outs_f = [None] * T
        outs_b = [None] * T
        for s in range(T):
            tf, tb = s, T - 1 - s
            rf, rb = tf * B, tb * B
            # forward-time lanes read gx at t=tf, backward lanes at t=tb
            gx_s = jnp.where(g_is_fwd, gx[rf:rf + B, :], gx[rb:rb + B, :])
            g = gx_s + mm(h, whh)                            # one block-diag matmul
            sig = jax.nn.sigmoid(g[:, :3 * Ht])              # i|f|o in one EUP call
            gg = jnp.tanh(g[:, 3 * Ht:])
            c_new = sig[:, Ht:2 * Ht] * c + sig[:, :Ht] * gg
            h_new = sig[:, 2 * Ht:3 * Ht] * jnp.tanh(c_new)
            # per-lane time index -> per-lane validity (B, Ht)
            t_lane = jnp.where(st_is_fwd, tf, tb)
            m = t_lane < lens
            c = jnp.where(m, c_new, c)
            h = jnp.where(m, h_new, h)
            h_out = jnp.where(m, h_new, 0.0)                 # zero padded steps
            outs_f[tf] = jnp.where(st_is_fwd, h_out, 0.0)    # uni + bifwd lanes
            outs_b[tb] = jnp.where(st_is_fwd, 0.0, h_out)    # bibwd lanes
        # Next-layer / deep-stack input: per step [uni | bifwd | bibwd] lanes,
        # assembled once (disjoint lane support -> elementwise add, no lane concat).
        x_m = jnp.concatenate([outs_f[t] + outs_b[t] for t in range(T)], axis=0)

    # --- stage 3: deep unidirectional stack -----------------------------------
    x_d = x_m                                                # (T*B, 2H)
    for l in range(L):
        wih = deep[3 * l][...]
        whh = deep[3 * l + 1][...]
        bias = deep[3 * l + 2][...]
        gx = mm(x_d, wih) + bias                             # (T*B, 4*Hd)
        h = jnp.zeros((B, Hd), jnp.float32)
        c = jnp.zeros((B, Hd), jnp.float32)
        outs = [None] * T
        for s in range(T):
            r = s * B
            g = gx[r:r + B, :] + mm(h, whh)
            sig = jax.nn.sigmoid(g[:, :3 * Hd])
            gg = jnp.tanh(g[:, 3 * Hd:])
            c_new = sig[:, Hd:2 * Hd] * c + sig[:, :Hd] * gg
            h_new = sig[:, 2 * Hd:3 * Hd] * jnp.tanh(c_new)
            m = masks[s]
            c = jnp.where(m, c_new, c)
            h = jnp.where(m, h_new, h)
            outs[s] = jnp.where(m, h_new, 0.0)
        x_d = jnp.concatenate(outs, axis=0)

    # --- fused h2r linear + sigmoid, single output write ----------------------
    out_ref[...] = jax.nn.sigmoid(mm(x_d, wr_ref[...]) + br_ref[...])


# ---------------------------------------------------------------------------
# pallas_call wrapper
# ---------------------------------------------------------------------------
def deep_classifier_forward(x, lengths, packed, *, hidden, num_layers):
    """x: (B, T, E) batch-first; lengths: (B,) sorted descending, max == T.

    Returns the padded (B, T, R) result (per-sample trimming happens on host).
    """
    B, T, E = x.shape
    R = packed["h2r_w"].shape[1]
    # Single boundary layout change: batch-first -> flat time-major (T*B, E).
    x_flat = jnp.transpose(x, (1, 0, 2)).reshape(T * B, E)
    lens2 = lengths.astype(jnp.int32).reshape(B, 1)

    operands = [x_flat, lens2]
    for wih, whh, b in packed["merged"]:
        operands += [wih, whh, b]
    for wih, whh, b in packed["deep"]:
        operands += [wih, whh, b]
    operands += [packed["h2r_w"], packed["h2r_b"]]

    kernel = functools.partial(_deep_classifier_kernel, num_layers=num_layers,
                               hidden=hidden, seq_len=T, batch=B)
    in_specs = [pl.BlockSpec(op.shape, lambda i: (0, 0)) for op in operands]

    out = pl.pallas_call(
        kernel,
        out_shape=jax.ShapeDtypeStruct((T * B, R), jnp.float32),
        grid=(1,),
        in_specs=in_specs,
        out_specs=pl.BlockSpec((T * B, R), lambda i: (0, 0)),
        compiler_params=pltpu.CompilerParams(
            dimension_semantics=("arbitrary",)),
    )(*operands)
    return out.reshape(T, B, R).transpose(1, 0, 2)           # padded (B, T, R)


# ---------------------------------------------------------------------------
# Parameter init (PyTorch nn.LSTM / nn.Linear default U(-1/sqrt(H), 1/sqrt(H)))
# kept in raw PyTorch layout; pack_params builds the fused-kernel layout.
# ---------------------------------------------------------------------------
def _init_lstm_cell(key, in_size, hid):
    k = jax.random.split(key, 4)
    s = 1.0 / float(hid) ** 0.5
    return {
        "w_ih": jax.random.uniform(k[0], (4 * hid, in_size), jnp.float32, -s, s),
        "w_hh": jax.random.uniform(k[1], (4 * hid, hid), jnp.float32, -s, s),
        "b_ih": jax.random.uniform(k[2], (4 * hid,), jnp.float32, -s, s),
        "b_hh": jax.random.uniform(k[3], (4 * hid,), jnp.float32, -s, s),
    }


def init_raw_params(key, hidden, embedding, reduction, num_layers):
    assert hidden % 4 == 0
    hb, hd = hidden // 2, hidden // 4
    raw = {"lstm": [], "bilstm": [], "deeplstm": []}
    for l in range(num_layers):
        key, k = jax.random.split(key)
        raw["lstm"].append(
            _init_lstm_cell(k, embedding if l == 0 else hidden, hidden))
    for l in range(num_layers):
        key, kf, kb = jax.random.split(key, 3)
        in_size = embedding if l == 0 else 2 * hb
        raw["bilstm"].append({"fwd": _init_lstm_cell(kf, in_size, hb),
                              "bwd": _init_lstm_cell(kb, in_size, hb)})
    for l in range(num_layers):
        key, k = jax.random.split(key)
        raw["deeplstm"].append(
            _init_lstm_cell(k, 2 * hidden if l == 0 else hd, hd))
    key, kw, kb = jax.random.split(key, 3)
    s = 1.0 / float(hd) ** 0.5
    raw["h2r_w"] = jax.random.uniform(kw, (reduction, hd), jnp.float32, -s, s)
    raw["h2r_b"] = jax.random.uniform(kb, (reduction,), jnp.float32, -s, s)
    return raw


def _perm_ifog(wt, h):
    """Reorder gate column blocks from PyTorch (i, f, g, o) to kernel (i, f, o, g)."""
    return jnp.concatenate(
        [wt[:, 0:h], wt[:, h:2 * h], wt[:, 3 * h:4 * h], wt[:, 2 * h:3 * h]],
        axis=1)


def _place(dst, row0, wt, col_starts, width):
    n = wt.shape[0]
    for k in range(4):
        dst = dst.at[row0:row0 + n,
                     col_starts[k]:col_starts[k] + width].set(
                         wt[:, k * width:(k + 1) * width])
    return dst


def pack_params(raw, *, hidden, embedding, num_layers):
    """Build block-diagonal, gate-permuted weights for the fused kernel.

    Merged (uni + bi-fwd + bi-bwd) layer column layout:
      [ i(2H) | f(2H) | o(2H) | g(2H) ],  within each gate: [uni H | bifwd H/2 | bibwd H/2]
    so each unrolled step needs one recurrent matmul, one sigmoid over the first
    3/4 of the gate lanes and one tanh over the rest.
    """
    H = hidden
    Hb = H // 2
    Hd = H // 4
    Ht = 2 * H
    Gm = 4 * Ht
    col_u = tuple(k * Ht for k in range(4))
    col_bf = tuple(k * Ht + H for k in range(4))
    col_bb = tuple(k * Ht + H + Hb for k in range(4))

    packed = {"merged": [], "deep": []}
    for l in range(num_layers):
        pu = raw["lstm"][l]
        pf = raw["bilstm"][l]["fwd"]
        pb = raw["bilstm"][l]["bwd"]
        e_in = embedding if l == 0 else 2 * H
        bi_row = 0 if l == 0 else H           # rows of the bi-stack input slab
        wih = jnp.zeros((e_in, Gm), jnp.float32)
        whh = jnp.zeros((Ht, Gm), jnp.float32)
        bias = jnp.zeros((1, Gm), jnp.float32)
        for p, cols, width, ih_row, hh_row in (
                (pu, col_u, H, 0, 0),
                (pf, col_bf, Hb, bi_row, H),
                (pb, col_bb, Hb, bi_row, H + Hb)):
            wih = _place(wih, ih_row, _perm_ifog(p["w_ih"].T, width), cols, width)
            whh = _place(whh, hh_row, _perm_ifog(p["w_hh"].T, width), cols, width)
            bias = _place(bias, 0,
                          _perm_ifog((p["b_ih"] + p["b_hh"])[None, :], width),
                          cols, width)
        packed["merged"].append((wih, whh, bias))

    for l in range(num_layers):
        p = raw["deeplstm"][l]
        packed["deep"].append((
            _perm_ifog(p["w_ih"].T, Hd),
            _perm_ifog(p["w_hh"].T, Hd),
            _perm_ifog((p["b_ih"] + p["b_hh"])[None, :], Hd)))

    packed["h2r_w"] = raw["h2r_w"].T                         # (Hd, R)
    packed["h2r_b"] = raw["h2r_b"][None, :]                  # (1, R)
    return packed


# ---------------------------------------------------------------------------
# Pure-JAX reference (PyTorch gate order / layouts) for a value check
# ---------------------------------------------------------------------------
def _lstm_layer_ref(x_tbe, lens2, p, reverse):
    T, B, _ = x_tbe.shape
    Hc = p["w_hh"].shape[1]
    hp = jax.lax.Precision.HIGHEST
    h = jnp.zeros((B, Hc), jnp.float32)
    c = jnp.zeros((B, Hc), jnp.float32)
    outs = [None] * T
    order = range(T - 1, -1, -1) if reverse else range(T)
    for t in order:
        g = (jnp.dot(x_tbe[t], p["w_ih"].T, precision=hp) + p["b_ih"] +
             jnp.dot(h, p["w_hh"].T, precision=hp) + p["b_hh"])
        i = jax.nn.sigmoid(g[:, 0 * Hc:1 * Hc])
        f = jax.nn.sigmoid(g[:, 1 * Hc:2 * Hc])
        gg = jnp.tanh(g[:, 2 * Hc:3 * Hc])
        o = jax.nn.sigmoid(g[:, 3 * Hc:4 * Hc])
        c_new = f * c + i * gg
        h_new = o * jnp.tanh(c_new)
        m = t < lens2
        c = jnp.where(m, c_new, c)
        h = jnp.where(m, h_new, h)
        outs[t] = jnp.where(m, h_new, 0.0)
    return jnp.stack(outs, axis=0)


def reference_forward(x, lengths, raw):
    B, T, _ = x.shape
    xt = jnp.transpose(x, (1, 0, 2))
    lens2 = lengths.astype(jnp.int32).reshape(B, 1)
    h = xt
    for p in raw["lstm"]:
        h = _lstm_layer_ref(h, lens2, p, False)
    lstm_out = h
    h = xt
    for p in raw["bilstm"]:
        hf = _lstm_layer_ref(h, lens2, p["fwd"], False)
        hb = _lstm_layer_ref(h, lens2, p["bwd"], True)
        h = jnp.concatenate([hf, hb], axis=-1)
    h = jnp.concatenate([lstm_out, h], axis=-1)
    for p in raw["deeplstm"]:
        h = _lstm_layer_ref(h, lens2, p, False)
    red = jax.nn.sigmoid(
        jnp.dot(h, raw["h2r_w"].T, precision=jax.lax.Precision.HIGHEST)
        + raw["h2r_b"])
    return jnp.transpose(red, (1, 0, 2))


# ---------------------------------------------------------------------------
# Demo
# ---------------------------------------------------------------------------
if __name__ == "__main__":
    hidden_size = 32
    embedding_size = 16
    reduction_size = 8
    num_layers = 2
    B, T = 2, 8

    key = jax.random.PRNGKey(0)
    key, kp = jax.random.split(key)
    raw = init_raw_params(kp, hidden_size, embedding_size, reduction_size,
                          num_layers)
    packed = pack_params(raw, hidden=hidden_size, embedding=embedding_size,
                         num_layers=num_layers)

    key, kx = jax.random.split(key)
    x = jax.random.normal(kx, (B, T, embedding_size), dtype=jnp.float32)
    lengths = jnp.array([8, 5], dtype=jnp.int32)   # sorted descending, max == T
    # pack_padded_sequence never reads padded positions; zero them for clarity.
    t_ids = jnp.arange(T)[None, :, None]
    x = jnp.where(t_ids < lengths[:, None, None], x, 0.0)

    fwd = jax.jit(functools.partial(deep_classifier_forward,
                                    hidden=hidden_size, num_layers=num_layers))
    red = fwd(x, lengths, packed)                  # (B, T, R), one fused kernel
    jax.block_until_ready(red)

    # Value check against the pure-JAX reference (same raw PyTorch-layout weights).
    ref = jax.jit(reference_forward)(x, lengths, raw)
    jax.block_until_ready(ref)
    max_err = float(jnp.max(jnp.abs(red - ref)))
    assert red.shape == (B, T, reduction_size)
    assert max_err < 3e-2, f"kernel/reference mismatch: max_err={max_err}"

    # TODO(synk): the original module returns per-sample .cpu() tensors trimmed
    # to their lengths; that host-side trimming is done outside the jitted graph.
    lengths_host = [int(v) for v in lengths]
    trimmed = [red[i, :lengths_host[i], :] for i in range(B)]
    assert trimmed[0].shape == (8, reduction_size)
    assert trimmed[1].shape == (5, reduction_size)
    print("KERNEL_OK")
</pallas_src>

<mosaic_0001>
module attributes {stable_mosaic.version = 11 : i64} {
  func.func @_deep_classifier_kernel(%arg0: i32, %arg1: memref<16x16xf32, #tpu.memory_space<vmem>>, %arg2: memref<2x1xi32, #tpu.memory_space<vmem>>, %arg3: memref<16x256xf32, #tpu.memory_space<vmem>>, %arg4: memref<64x256xf32, #tpu.memory_space<vmem>>, %arg5: memref<1x256xf32, #tpu.memory_space<vmem>>, %arg6: memref<64x256xf32, #tpu.memory_space<vmem>>, %arg7: memref<64x256xf32, #tpu.memory_space<vmem>>, %arg8: memref<1x256xf32, #tpu.memory_space<vmem>>, %arg9: memref<64x32xf32, #tpu.memory_space<vmem>>, %arg10: memref<8x32xf32, #tpu.memory_space<vmem>>, %arg11: memref<1x32xf32, #tpu.memory_space<vmem>>, %arg12: memref<8x32xf32, #tpu.memory_space<vmem>>, %arg13: memref<8x32xf32, #tpu.memory_space<vmem>>, %arg14: memref<1x32xf32, #tpu.memory_space<vmem>>, %arg15: memref<8x8xf32, #tpu.memory_space<vmem>>, %arg16: memref<1x8xf32, #tpu.memory_space<vmem>>, %arg17: memref<16x8xf32, #tpu.memory_space<vmem>>) attributes {dimension_semantics = [#tpu.dimension_semantics<arbitrary>], iteration_bounds = array<i64: 1>, scalar_prefetch = 0 : i64, scratch_operands = 0 : i64, tpu.core_type = #tpu.core_type<tc>, window_params = [{pipeline_mode = #tpu.pipeline_mode<synchronous>, transform_indices = @transform_0, window_bounds = array<i64: 16, 16>}, {pipeline_mode = #tpu.pipeline_mode<synchronous>, transform_indices = @transform_1, window_bounds = array<i64: 2, 1>}, {pipeline_mode = #tpu.pipeline_mode<synchronous>, transform_indices = @transform_2, window_bounds = array<i64: 16, 256>}, {pipeline_mode = #tpu.pipeline_mode<synchronous>, transform_indices = @transform_3, window_bounds = array<i64: 64, 256>}, {pipeline_mode = #tpu.pipeline_mode<synchronous>, transform_indices = @transform_4, window_bounds = array<i64: 1, 256>}, {pipeline_mode = #tpu.pipeline_mode<synchronous>, transform_indices = @transform_5, window_bounds = array<i64: 64, 256>}, {pipeline_mode = #tpu.pipeline_mode<synchronous>, transform_indices = @transform_6, window_bounds = array<i64: 64, 256>}, {pipeline_mode = #tpu.pipeline_mode<synchronous>, transform_indices = @transform_7, window_bounds = array<i64: 1, 256>}, {pipeline_mode = #tpu.pipeline_mode<synchronous>, transform_indices = @transform_8, window_bounds = array<i64: 64, 32>}, {pipeline_mode = #tpu.pipeline_mode<synchronous>, transform_indices = @transform_9, window_bounds = array<i64: 8, 32>}, {pipeline_mode = #tpu.pipeline_mode<synchronous>, transform_indices = @transform_10, window_bounds = array<i64: 1, 32>}, {pipeline_mode = #tpu.pipeline_mode<synchronous>, transform_indices = @transform_11, window_bounds = array<i64: 8, 32>}, {pipeline_mode = #tpu.pipeline_mode<synchronous>, transform_indices = @transform_12, window_bounds = array<i64: 8, 32>}, {pipeline_mode = #tpu.pipeline_mode<synchronous>, transform_indices = @transform_13, window_bounds = array<i64: 1, 32>}, {pipeline_mode = #tpu.pipeline_mode<synchronous>, transform_indices = @transform_14, window_bounds = array<i64: 8, 8>}, {pipeline_mode = #tpu.pipeline_mode<synchronous>, transform_indices = @transform_15, window_bounds = array<i64: 1, 8>}, {pipeline_mode = #tpu.pipeline_mode<synchronous>, transform_indices = @transform_16, window_bounds = array<i64: 16, 8>}]} {
    %c0 = arith.constant 0 : index
    %c0_0 = arith.constant 0 : index
    %0 = vector.load %arg2[%c0, %c0_0] : memref<2x1xi32, #tpu.memory_space<vmem>>, vector<2x1xi32>
    %c0_i32 = arith.constant 0 : i32
    %1 = vector.broadcast %c0_i32 : i32 to vector<2x1xi32>
    %2 = arith.cmpi sgt, %0, %1 : vector<2x1xi32>
    %c1_i32 = arith.constant 1 : i32
    %3 = vector.broadcast %c1_i32 : i32 to vector<2x1xi32>
    %4 = arith.cmpi sgt, %0, %3 : vector<2x1xi32>
    %c2_i32 = arith.constant 2 : i32
    %5 = vector.broadcast %c2_i32 : i32 to vector<2x1xi32>
    %6 = arith.cmpi sgt, %0, %5 : vector<2x1xi32>
    %c3_i32 = arith.constant 3 : i32
    %7 = vector.broadcast %c3_i32 : i32 to vector<2x1xi32>
    %8 = arith.cmpi sgt, %0, %7 : vector<2x1xi32>
    %c4_i32 = arith.constant 4 : i32
    %9 = vector.broadcast %c4_i32 : i32 to vector<2x1xi32>
    %10 = arith.cmpi sgt, %0, %9 : vector<2x1xi32>
    %c5_i32 = arith.constant 5 : i32
    %11 = vector.broadcast %c5_i32 : i32 to vector<2x1xi32>
    %12 = arith.cmpi sgt, %0, %11 : vector<2x1xi32>
    %c6_i32 = arith.constant 6 : i32
    %13 = vector.broadcast %c6_i32 : i32 to vector<2x1xi32>
    %14 = arith.cmpi sgt, %0, %13 : vector<2x1xi32>
    %c7_i32 = arith.constant 7 : i32
    %15 = vector.broadcast %c7_i32 : i32 to vector<2x1xi32>
    %16 = arith.cmpi sgt, %0, %15 : vector<2x1xi32>
    %17 = tpu.iota {dimensions = array<i32: 1>} : vector<1x64xi32>
    %c48_i32 = arith.constant 48 : i32
    %18 = vector.broadcast %c48_i32 : i32 to vector<1x64xi32>
    %19 = arith.cmpi slt, %17, %18 : vector<1x64xi32>
    %20 = tpu.iota {dimensions = array<i32: 1>} : vector<1x256xi32>
    %c64_i32 = arith.constant 64 : i32
    %c0_i32_1 = arith.constant 0 : i32
    %21 = arith.cmpi eq, %c64_i32, %c0_i32_1 : i32
    %c1_i32_2 = arith.constant 1 : i32
    %22 = arith.select %21, %c1_i32_2, %c64_i32 : i32
    %23 = vector.broadcast %22 : i32 to vector<1x256xi32>
    %24 = arith.remsi %20, %23 : vector<1x256xi32>
    %c0_i32_3 = arith.constant 0 : i32
    %25 = vector.broadcast %c0_i32_3 : i32 to vector<1x256xi32>
    %26 = arith.cmpi ne, %24, %25 : vector<1x256xi32>
    %c0_i32_4 = arith.constant 0 : i32
    %27 = vector.broadcast %c0_i32_4 : i32 to vector<1x256xi32>
    %28 = arith.cmpi slt, %24, %27 : vector<1x256xi32>
    %c0_i32_5 = arith.constant 0 : i32
    %29 = arith.cmpi slt, %22, %c0_i32_5 : i32
    %30 = vector.broadcast %29 : i1 to vector<1x256xi1>
    %31 = vector.broadcast %30 : vector<1x256xi1> to vector<1x256xi1>
    %32 = arith.xori %28, %31 : vector<1x256xi1>
    %33 = arith.andi %32, %26 : vector<1x256xi1>
    %34 = vector.broadcast %22 : i32 to vector<1x256xi32>
    %35 = arith.addi %24, %34 : vector<1x256xi32>
    %36 = arith.select %33, %35, %24 : vector<1x256xi1>, vector<1x256xi32>
    %c48_i32_6 = arith.constant 48 : i32
    %37 = vector.broadcast %c48_i32_6 : i32 to vector<1x256xi32>
    %38 = arith.cmpi slt, %36, %37 : vector<1x256xi32>
    %c0_7 = arith.constant 0 : index
    %c0_8 = arith.constant 0 : index
    %39 = vector.load %arg1[%c0_7, %c0_8] : memref<16x16xf32, #tpu.memory_space<vmem>>, vector<16x16xf32>
    %c0_9 = arith.constant 0 : index
    %c0_10 = arith.constant 0 : index
    %40 = vector.load %arg3[%c0_9, %c0_10] : memref<16x256xf32, #tpu.memory_space<vmem>>, vector<16x256xf32>
    %c0_11 = arith.constant 0 : index
    %c0_12 = arith.constant 0 : index
    %41 = vector.load %arg4[%c0_11, %c0_12] : memref<64x256xf32, #tpu.memory_space<vmem>>, vector<64x256xf32>
    %c0_13 = arith.constant 0 : index
    %c0_14 = arith.constant 0 : index
    %42 = vector.load %arg5[%c0_13, %c0_14] : memref<1x256xf32, #tpu.memory_space<vmem>>, vector<1x256xf32>
    %cst = arith.constant dense<0.000000e+00> : vector<16x256xf32>
    %43 = tpu.matmul %39, %40, %cst {dimension_numbers = #tpu.dot_dimension_numbers<[1], [0], [0], [1], [0, 0, 1, 1], [], []>} : vector<16x16xf32>, vector<16x256xf32>, vector<16x256xf32> -> vector<16x256xf32>
    %44 = vector.broadcast %42 : vector<1x256xf32> to vector<16x256xf32>
    %45 = arith.addf %43, %44 : vector<16x256xf32>
    %cst_15 = arith.constant 0.000000e+00 : f32
    %46 = vector.broadcast %cst_15 : f32 to vector<2x64xf32>
    %cst_16 = arith.constant 0.000000e+00 : f32
    %47 = vector.broadcast %cst_16 : f32 to vector<2x64xf32>
    %48 = vector.extract_strided_slice %45 {offsets = [0, 0], sizes = [2, 256], strides = [1, 1]} : vector<16x256xf32> to vector<2x256xf32>
    %49 = vector.extract_strided_slice %45 {offsets = [14, 0], sizes = [2, 256], strides = [1, 1]} : vector<16x256xf32> to vector<2x256xf32>
    %50 = vector.shape_cast %38 : vector<1x256xi1> to vector<1x256xi1>
    %51 = vector.broadcast %50 : vector<1x256xi1> to vector<2x256xi1>
    %52 = arith.select %51, %48, %49 : vector<2x256xi1>, vector<2x256xf32>
    %cst_17 = arith.constant dense<0.000000e+00> : vector<2x256xf32>
    %53 = tpu.matmul %46, %41, %cst_17 {dimension_numbers = #tpu.dot_dimension_numbers<[1], [0], [0], [1], [0, 0, 1, 1], [], []>} : vector<2x64xf32>, vector<64x256xf32>, vector<2x256xf32> -> vector<2x256xf32>
    %54 = arith.addf %52, %53 : vector<2x256xf32>
    %55 = vector.extract_strided_slice %54 {offsets = [0, 0], sizes = [2, 192], strides = [1, 1]} : vector<2x256xf32> to vector<2x192xf32>
    %56 = arith.negf %55 : vector<2x192xf32>
    %57 = math.exp %56 : vector<2x192xf32>
    %cst_18 = arith.constant 1.000000e+00 : f32
    %58 = vector.broadcast %cst_18 : f32 to vector<2x192xf32>
    %59 = arith.addf %58, %57 : vector<2x192xf32>
    %60 = arith.divf %58, %59 : vector<2x192xf32>
    %61 = vector.extract_strided_slice %54 {offsets = [0, 192], sizes = [2, 64], strides = [1, 1]} : vector<2x256xf32> to vector<2x64xf32>
    %62 = math.tanh %61 : vector<2x64xf32>
    %63 = vector.extract_strided_slice %60 {offsets = [0, 64], sizes = [2, 64], strides = [1, 1]} : vector<2x192xf32> to vector<2x64xf32>
    %64 = arith.mulf %63, %47 : vector<2x64xf32>
    %65 = vector.extract_strided_slice %60 {offsets = [0, 0], sizes = [2, 64], strides = [1, 1]} : vector<2x192xf32> to vector<2x64xf32>
    %66 = arith.mulf %65, %62 : vector<2x64xf32>
    %67 = arith.addf %64, %66 : vector<2x64xf32>
    %68 = vector.extract_strided_slice %60 {offsets = [0, 128], sizes = [2, 64], strides = [1, 1]} : vector<2x192xf32> to vector<2x64xf32>
    %69 = math.tanh %67 : vector<2x64xf32>
    %70 = arith.mulf %68, %69 : vector<2x64xf32>
    %c0_i32_19 = arith.constant 0 : i32
    %c7_i32_20 = arith.constant 7 : i32
    %71 = vector.broadcast %c0_i32_19 : i32 to vector<1x64xi32>
    %72 = vector.broadcast %c7_i32_20 : i32 to vector<1x64xi32>
    %73 = arith.select %19, %71, %72 : vector<1x64xi1>, vector<1x64xi32>
    %74 = vector.broadcast %73 : vector<1x64xi32> to vector<2x64xi32>
    %75 = vector.broadcast %0 : vector<2x1xi32> to vector<2x64xi32>
    %76 = arith.cmpi slt, %74, %75 : vector<2x64xi32>
    %77 = arith.select %76, %67, %47 : vector<2x64xi1>, vector<2x64xf32>
    %78 = arith.select %76, %70, %46 : vector<2x64xi1>, vector<2x64xf32>
    %cst_21 = arith.constant 0.000000e+00 : f32
    %79 = vector.broadcast %cst_21 : f32 to vector<2x64xf32>
    %80 = arith.select %76, %70, %79 : vector<2x64xi1>, vector<2x64xf32>
    %cst_22 = arith.constant 0.000000e+00 : f32
    %81 = vector.shape_cast %19 : vector<1x64xi1> to vector<1x64xi1>
    %82 = vector.broadcast %81 : vector<1x64xi1> to vector<2x64xi1>
    %83 = vector.broadcast %cst_22 : f32 to vector<2x64xf32>
    %84 = arith.select %82, %80, %83 : vector<2x64xi1>, vector<2x64xf32>
    %cst_23 = arith.constant 0.000000e+00 : f32
    %85 = vector.shape_cast %19 : vector<1x64xi1> to vector<1x64xi1>
    %86 = vector.broadcast %85 : vector<1x64xi1> to vector<2x64xi1>
    %87 = vector.broadcast %cst_23 : f32 to vector<2x64xf32>
    %88 = arith.select %86, %87, %80 : vector<2x64xi1>, vector<2x64xf32>
    %89 = vector.extract_strided_slice %45 {offsets = [2, 0], sizes = [2, 256], strides = [1, 1]} : vector<16x256xf32> to vector<2x256xf32>
    %90 = vector.extract_strided_slice %45 {offsets = [12, 0], sizes = [2, 256], strides = [1, 1]} : vector<16x256xf32> to vector<2x256xf32>
    %91 = vector.shape_cast %38 : vector<1x256xi1> to vector<1x256xi1>
    %92 = vector.broadcast %91 : vector<1x256xi1> to vector<2x256xi1>
    %93 = arith.select %92, %89, %90 : vector<2x256xi1>, vector<2x256xf32>
    %cst_24 = arith.constant dense<0.000000e+00> : vector<2x256xf32>
    %94 = tpu.matmul %78, %41, %cst_24 {dimension_numbers = #tpu.dot_dimension_numbers<[1], [0], [0], [1], [0, 0, 1, 1], [], []>} : vector<2x64xf32>, vector<64x256xf32>, vector<2x256xf32> -> vector<2x256xf32>
    %95 = arith.addf %93, %94 : vector<2x256xf32>
    %96 = vector.extract_strided_slice %95 {offsets = [0, 0], sizes = [2, 192], strides = [1, 1]} : vector<2x256xf32> to vector<2x192xf32>
    %97 = arith.negf %96 : vector<2x192xf32>
    %98 = math.exp %97 : vector<2x192xf32>
    %cst_25 = arith.constant 1.000000e+00 : f32
    %99 = vector.broadcast %cst_25 : f32 to vector<2x192xf32>
    %100 = arith.addf %99, %98 : vector<2x192xf32>
    %101 = arith.divf %99, %100 : vector<2x192xf32>
    %102 = vector.extract_strided_slice %95 {offsets = [0, 192], sizes = [2, 64], strides = [1, 1]} : vector<2x256xf32> to vector<2x64xf32>
    %103 = math.tanh %102 : vector<2x64xf32>
    %104 = vector.extract_strided_slice %101 {offsets = [0, 64], sizes = [2, 64], strides = [1, 1]} : vector<2x192xf32> to vector<2x64xf32>
    %105 = arith.mulf %104, %77 : vector<2x64xf32>
    %106 = vector.extract_strided_slice %101 {offsets = [0, 0], sizes = [2, 64], strides = [1, 1]} : vector<2x192xf32> to vector<2x64xf32>
    %107 = arith.mulf %106, %103 : vector<2x64xf32>
    %108 = arith.addf %105, %107 : vector<2x64xf32>
    %109 = vector.extract_strided_slice %101 {offsets = [0, 128], sizes = [2, 64], strides = [1, 1]} : vector<2x192xf32> to vector<2x64xf32>
    %110 = math.tanh %108 : vector<2x64xf32>
    %111 = arith.mulf %109, %110 : vector<2x64xf32>
    %c1_i32_26 = arith.constant 1 : i32
    %c6_i32_27 = arith.constant 6 : i32
    %112 = vector.broadcast %c1_i32_26 : i32 to vector<1x64xi32>
    %113 = vector.broadcast %c6_i32_27 : i32 to vector<1x64xi32>
    %114 = arith.select %19, %112, %113 : vector<1x64xi1>, vector<1x64xi32>
    %115 = vector.broadcast %114 : vector<1x64xi32> to vector<2x64xi32>
    %116 = vector.broadcast %0 : vector<2x1xi32> to vector<2x64xi32>
    %117 = arith.cmpi slt, %115, %116 : vector<2x64xi32>
    %118 = arith.select %117, %108, %77 : vector<2x64xi1>, vector<2x64xf32>
    %119 = arith.select %117, %111, %78 : vector<2x64xi1>, vector<2x64xf32>
    %cst_28 = arith.constant 0.000000e+00 : f32
    %120 = vector.broadcast %cst_28 : f32 to vector<2x64xf32>
    %121 = arith.select %117, %111, %120 : vector<2x64xi1>, vector<2x64xf32>
    %cst_29 = arith.constant 0.000000e+00 : f32
    %122 = vector.shape_cast %19 : vector<1x64xi1> to vector<1x64xi1>
    %123 = vector.broadcast %122 : vector<1x64xi1> to vector<2x64xi1>
    %124 = vector.broadcast %cst_29 : f32 to vector<2x64xf32>
    %125 = arith.select %123, %121, %124 : vector<2x64xi1>, vector<2x64xf32>
    %cst_30 = arith.constant 0.000000e+00 : f32
    %126 = vector.shape_cast %19 : vector<1x64xi1> to vector<1x64xi1>
    %127 = vector.broadcast %126 : vector<1x64xi1> to vector<2x64xi1>
    %128 = vector.broadcast %cst_30 : f32 to vector<2x64xf32>
    %129 = arith.select %127, %128, %121 : vector<2x64xi1>, vector<2x64xf32>
    %130 = vector.extract_strided_slice %45 {offsets = [4, 0], sizes = [2, 256], strides = [1, 1]} : vector<16x256xf32> to vector<2x256xf32>
    %131 = vector.extract_strided_slice %45 {offsets = [10, 0], sizes = [2, 256], strides = [1, 1]} : vector<16x256xf32> to vector<2x256xf32>
    %132 = vector.shape_cast %38 : vector<1x256xi1> to vector<1x256xi1>
    %133 = vector.broadcast %132 : vector<1x256xi1> to vector<2x256xi1>
    %134 = arith.select %133, %130, %131 : vector<2x256xi1>, vector<2x256xf32>
    %cst_31 = arith.constant dense<0.000000e+00> : vector<2x256xf32>
    %135 = tpu.matmul %119, %41, %cst_31 {dimension_numbers = #tpu.dot_dimension_numbers<[1], [0], [0], [1], [0, 0, 1, 1], [], []>} : vector<2x64xf32>, vector<64x256xf32>, vector<2x256xf32> -> vector<2x256xf32>
    %136 = arith.addf %134, %135 : vector<2x256xf32>
    %137 = vector.extract_strided_slice %136 {offsets = [0, 0], sizes = [2, 192], strides = [1, 1]} : vector<2x256xf32> to vector<2x192xf32>
    %138 = arith.negf %137 : vector<2x192xf32>
    %139 = math.exp %138 : vector<2x192xf32>
    %cst_32 = arith.constant 1.000000e+00 : f32
    %140 = vector.broadcast %cst_32 : f32 to vector<2x192xf32>
    %141 = arith.addf %140, %139 : vector<2x192xf32>
    %142 = arith.divf %140, %141 : vector<2x192xf32>
    %143 = vector.extract_strided_slice %136 {offsets = [0, 192], sizes = [2, 64], strides = [1, 1]} : vector<2x256xf32> to vector<2x64xf32>
    %144 = math.tanh %143 : vector<2x64xf32>
    %145 = vector.extract_strided_slice %142 {offsets = [0, 64], sizes = [2, 64], strides = [1, 1]} : vector<2x192xf32> to vector<2x64xf32>
    %146 = arith.mulf %145, %118 : vector<2x64xf32>
    %147 = vector.extract_strided_slice %142 {offsets = [0, 0], sizes = [2, 64], strides = [1, 1]} : vector<2x192xf32> to vector<2x64xf32>
    %148 = arith.mulf %147, %144 : vector<2x64xf32>
    %149 = arith.addf %146, %148 : vector<2x64xf32>
    %150 = vector.extract_strided_slice %142 {offsets = [0, 128], sizes = [2, 64], strides = [1, 1]} : vector<2x192xf32> to vector<2x64xf32>
    %151 = math.tanh %149 : vector<2x64xf32>
    %152 = arith.mulf %150, %151 : vector<2x64xf32>
    %c2_i32_33 = arith.constant 2 : i32
    %c5_i32_34 = arith.constant 5 : i32
    %153 = vector.broadcast %c2_i32_33 : i32 to vector<1x64xi32>
    %154 = vector.broadcast %c5_i32_34 : i32 to vector<1x64xi32>
    %155 = arith.select %19, %153, %154 : vector<1x64xi1>, vector<1x64xi32>
    %156 = vector.broadcast %155 : vector<1x64xi32> to vector<2x64xi32>
    %157 = vector.broadcast %0 : vector<2x1xi32> to vector<2x64xi32>
    %158 = arith.cmpi slt, %156, %157 : vector<2x64xi32>
    %159 = arith.select %158, %149, %118 : vector<2x64xi1>, vector<2x64xf32>
    %160 = arith.select %158, %152, %119 : vector<2x64xi1>, vector<2x64xf32>
    %cst_35 = arith.constant 0.000000e+00 : f32
    %161 = vector.broadcast %cst_35 : f32 to vector<2x64xf32>
    %162 = arith.select %158, %152, %161 : vector<2x64xi1>, vector<2x64xf32>
    %cst_36 = arith.constant 0.000000e+00 : f32
    %163 = vector.shape_cast %19 : vector<1x64xi1> to vector<1x64xi1>
    %164 = vector.broadcast %163 : vector<1x64xi1> to vector<2x64xi1>
    %165 = vector.broadcast %cst_36 : f32 to vector<2x64xf32>
    %166 = arith.select %164, %162, %165 : vector<2x64xi1>, vector<2x64xf32>
    %cst_37 = arith.constant 0.000000e+00 : f32
    %167 = vector.shape_cast %19 : vector<1x64xi1> to vector<1x64xi1>
    %168 = vector.broadcast %167 : vector<1x64xi1> to vector<2x64xi1>
    %169 = vector.broadcast %cst_37 : f32 to vector<2x64xf32>
    %170 = arith.select %168, %169, %162 : vector<2x64xi1>, vector<2x64xf32>
    %171 = vector.extract_strided_slice %45 {offsets = [6, 0], sizes = [2, 256], strides = [1, 1]} : vector<16x256xf32> to vector<2x256xf32>
    %172 = vector.extract_strided_slice %45 {offsets = [8, 0], sizes = [2, 256], strides = [1, 1]} : vector<16x256xf32> to vector<2x256xf32>
    %173 = vector.shape_cast %38 : vector<1x256xi1> to vector<1x256xi1>
    %174 = vector.broadcast %173 : vector<1x256xi1> to vector<2x256xi1>
    %175 = arith.select %174, %171, %172 : vector<2x256xi1>, vector<2x256xf32>
    %cst_38 = arith.constant dense<0.000000e+00> : vector<2x256xf32>
    %176 = tpu.matmul %160, %41, %cst_38 {dimension_numbers = #tpu.dot_dimension_numbers<[1], [0], [0], [1], [0, 0, 1, 1], [], []>} : vector<2x64xf32>, vector<64x256xf32>, vector<2x256xf32> -> vector<2x256xf32>
    %177 = arith.addf %175, %176 : vector<2x256xf32>
    %178 = vector.extract_strided_slice %177 {offsets = [0, 0], sizes = [2, 192], strides = [1, 1]} : vector<2x256xf32> to vector<2x192xf32>
    %179 = arith.negf %178 : vector<2x192xf32>
    %180 = math.exp %179 : vector<2x192xf32>
    %cst_39 = arith.constant 1.000000e+00 : f32
    %181 = vector.broadcast %cst_39 : f32 to vector<2x192xf32>
    %182 = arith.addf %181, %180 : vector<2x192xf32>
    %183 = arith.divf %181, %182 : vector<2x192xf32>
    %184 = vector.extract_strided_slice %177 {offsets = [0, 192], sizes = [2, 64], strides = [1, 1]} : vector<2x256xf32> to vector<2x64xf32>
    %185 = math.tanh %184 : vector<2x64xf32>
    %186 = vector.extract_strided_slice %183 {offsets = [0, 64], sizes = [2, 64], strides = [1, 1]} : vector<2x192xf32> to vector<2x64xf32>
    %187 = arith.mulf %186, %159 : vector<2x64xf32>
    %188 = vector.extract_strided_slice %183 {offsets = [0, 0], sizes = [2, 64], strides = [1, 1]} : vector<2x192xf32> to vector<2x64xf32>
    %189 = arith.mulf %188, %185 : vector<2x64xf32>
    %190 = arith.addf %187, %189 : vector<2x64xf32>
    %191 = vector.extract_strided_slice %183 {offsets = [0, 128], sizes = [2, 64], strides = [1, 1]} : vector<2x192xf32> to vector<2x64xf32>
    %192 = math.tanh %190 : vector<2x64xf32>
    %193 = arith.mulf %191, %192 : vector<2x64xf32>
    %c3_i32_40 = arith.constant 3 : i32
    %c4_i32_41 = arith.constant 4 : i32
    %194 = vector.broadcast %c3_i32_40 : i32 to vector<1x64xi32>
    %195 = vector.broadcast %c4_i32_41 : i32 to vector<1x64xi32>
    %196 = arith.select %19, %194, %195 : vector<1x64xi1>, vector<1x64xi32>
    %197 = vector.broadcast %196 : vector<1x64xi32> to vector<2x64xi32>
    %198 = vector.broadcast %0 : vector<2x1xi32> to vector<2x64xi32>
    %199 = arith.cmpi slt, %197, %198 : vector<2x64xi32>
    %200 = arith.select %199, %190, %159 : vector<2x64xi1>, vector<2x64xf32>
    %201 = arith.select %199, %193, %160 : vector<2x64xi1>, vector<2x64xf32>
    %cst_42 = arith.constant 0.000000e+00 : f32
    %202 = vector.broadcast %cst_42 : f32 to vector<2x64xf32>
    %203 = arith.select %199, %193, %202 : vector<2x64xi1>, vector<2x64xf32>
    %cst_43 = arith.constant 0.000000e+00 : f32
    %204 = vector.shape_cast %19 : vector<1x64xi1> to vector<1x64xi1>
    %205 = vector.broadcast %204 : vector<1x64xi1> to vector<2x64xi1>
    %206 = vector.broadcast %cst_43 : f32 to vector<2x64xf32>
    %207 = arith.select %205, %203, %206 : vector<2x64xi1>, vector<2x64xf32>
    %cst_44 = arith.constant 0.000000e+00 : f32
    %208 = vector.shape_cast %19 : vector<1x64xi1> to vector<1x64xi1>
    %209 = vector.broadcast %208 : vector<1x64xi1> to vector<2x64xi1>
    %210 = vector.broadcast %cst_44 : f32 to vector<2x64xf32>
    %211 = arith.select %209, %210, %203 : vector<2x64xi1>, vector<2x64xf32>
    %212 = vector.extract_strided_slice %45 {offsets = [8, 0], sizes = [2, 256], strides = [1, 1]} : vector<16x256xf32> to vector<2x256xf32>
    %213 = vector.extract_strided_slice %45 {offsets = [6, 0], sizes = [2, 256], strides = [1, 1]} : vector<16x256xf32> to vector<2x256xf32>
    %214 = vector.shape_cast %38 : vector<1x256xi1> to vector<1x256xi1>
    %215 = vector.broadcast %214 : vector<1x256xi1> to vector<2x256xi1>
    %216 = arith.select %215, %212, %213 : vector<2x256xi1>, vector<2x256xf32>
    %cst_45 = arith.constant dense<0.000000e+00> : vector<2x256xf32>
    %217 = tpu.matmul %201, %41, %cst_45 {dimension_numbers = #tpu.dot_dimension_numbers<[1], [0], [0], [1], [0, 0, 1, 1], [], []>} : vector<2x64xf32>, vector<64x256xf32>, vector<2x256xf32> -> vector<2x256xf32>
    %218 = arith.addf %216, %217 : vector<2x256xf32>
    %219 = vector.extract_strided_slice %218 {offsets = [0, 0], sizes = [2, 192], strides = [1, 1]} : vector<2x256xf32> to vector<2x192xf32>
    %220 = arith.negf %219 : vector<2x192xf32>
    %221 = math.exp %220 : vector<2x192xf32>
    %cst_46 = arith.constant 1.000000e+00 : f32
    %222 = vector.broadcast %cst_46 : f32 to vector<2x192xf32>
    %223 = arith.addf %222, %221 : vector<2x192xf32>
    %224 = arith.divf %222, %223 : vector<2x192xf32>
    %225 = vector.extract_strided_slice %218 {offsets = [0, 192], sizes = [2, 64], strides = [1, 1]} : vector<2x256xf32> to vector<2x64xf32>
    %226 = math.tanh %225 : vector<2x64xf32>
    %227 = vector.extract_strided_slice %224 {offsets = [0, 64], sizes = [2, 64], strides = [1, 1]} : vector<2x192xf32> to vector<2x64xf32>
    %228 = arith.mulf %227, %200 : vector<2x64xf32>
    %229 = vector.extract_strided_slice %224 {offsets = [0, 0], sizes = [2, 64], strides = [1, 1]} : vector<2x192xf32> to vector<2x64xf32>
    %230 = arith.mulf %229, %226 : vector<2x64xf32>
    %231 = arith.addf %228, %230 : vector<2x64xf32>
    %232 = vector.extract_strided_slice %224 {offsets = [0, 128], sizes = [2, 64], strides = [1, 1]} : vector<2x192xf32> to vector<2x64xf32>
    %233 = math.tanh %231 : vector<2x64xf32>
    %234 = arith.mulf %232, %233 : vector<2x64xf32>
    %c4_i32_47 = arith.constant 4 : i32
    %c3_i32_48 = arith.constant 3 : i32
    %235 = vector.broadcast %c4_i32_47 : i32 to vector<1x64xi32>
    %236 = vector.broadcast %c3_i32_48 : i32 to vector<1x64xi32>
    %237 = arith.select %19, %235, %236 : vector<1x64xi1>, vector<1x64xi32>
    %238 = vector.broadcast %237 : vector<1x64xi32> to vector<2x64xi32>
    %239 = vector.broadcast %0 : vector<2x1xi32> to vector<2x64xi32>
    %240 = arith.cmpi slt, %238, %239 : vector<2x64xi32>
    %241 = arith.select %240, %231, %200 : vector<2x64xi1>, vector<2x64xf32>
    %242 = arith.select %240, %234, %201 : vector<2x64xi1>, vector<2x64xf32>
    %cst_49 = arith.constant 0.000000e+00 : f32
    %243 = vector.broadcast %cst_49 : f32 to vector<2x64xf32>
    %244 = arith.select %240, %234, %243 : vector<2x64xi1>, vector<2x64xf32>
    %cst_50 = arith.constant 0.000000e+00 : f32
    %245 = vector.shape_cast %19 : vector<1x64xi1> to vector<1x64xi1>
    %246 = vector.broadcast %245 : vector<1x64xi1> to vector<2x64xi1>
    %247 = vector.broadcast %cst_50 : f32 to vector<2x64xf32>
    %248 = arith.select %246, %244, %247 : vector<2x64xi1>, vector<2x64xf32>
    %cst_51 = arith.constant 0.000000e+00 : f32
    %249 = vector.shape_cast %19 : vector<1x64xi1> to vector<1x64xi1>
    %250 = vector.broadcast %249 : vector<1x64xi1> to vector<2x64xi1>
    %251 = vector.broadcast %cst_51 : f32 to vector<2x64xf32>
    %252 = arith.select %250, %251, %244 : vector<2x64xi1>, vector<2x64xf32>
    %253 = vector.extract_strided_slice %45 {offsets = [10, 0], sizes = [2, 256], strides = [1, 1]} : vector<16x256xf32> to vector<2x256xf32>
    %254 = vector.extract_strided_slice %45 {offsets = [4, 0], sizes = [2, 256], strides = [1, 1]} : vector<16x256xf32> to vector<2x256xf32>
    %255 = vector.shape_cast %38 : vector<1x256xi1> to vector<1x256xi1>
    %256 = vector.broadcast %255 : vector<1x256xi1> to vector<2x256xi1>
    %257 = arith.select %256, %253, %254 : vector<2x256xi1>, vector<2x256xf32>
    %cst_52 = arith.constant dense<0.000000e+00> : vector<2x256xf32>
    %258 = tpu.matmul %242, %41, %cst_52 {dimension_numbers = #tpu.dot_dimension_numbers<[1], [0], [0], [1], [0, 0, 1, 1], [], []>} : vector<2x64xf32>, vector<64x256xf32>, vector<2x256xf32> -> vector<2x256xf32>
    %259 = arith.addf %257, %258 : vector<2x256xf32>
    %260 = vector.extract_strided_slice %259 {offsets = [0, 0], sizes = [2, 192], strides = [1, 1]} : vector<2x256xf32> to vector<2x192xf32>
    %261 = arith.negf %260 : vector<2x192xf32>
    %262 = math.exp %261 : vector<2x192xf32>
    %cst_53 = arith.constant 1.000000e+00 : f32
    %263 = vector.broadcast %cst_53 : f32 to vector<2x192xf32>
    %264 = arith.addf %263, %262 : vector<2x192xf32>
    %265 = arith.divf %263, %264 : vector<2x192xf32>
    %266 = vector.extract_strided_slice %259 {offsets = [0, 192], sizes = [2, 64], strides = [1, 1]} : vector<2x256xf32> to vector<2x64xf32>
    %267 = math.tanh %266 : vector<2x64xf32>
    %268 = vector.extract_strided_slice %265 {offsets = [0, 64], sizes = [2, 64], strides = [1, 1]} : vector<2x192xf32> to vector<2x64xf32>
    %269 = arith.mulf %268, %241 : vector<2x64xf32>
    %270 = vector.extract_strided_slice %265 {offsets = [0, 0], sizes = [2, 64], strides = [1, 1]} : vector<2x192xf32> to vector<2x64xf32>
    %271 = arith.mulf %270, %267 : vector<2x64xf32>
    %272 = arith.addf %269, %271 : vector<2x64xf32>
    %273 = vector.extract_strided_slice %265 {offsets = [0, 128], sizes = [2, 64], strides = [1, 1]} : vector<2x192xf32> to vector<2x64xf32>
    %274 = math.tanh %272 : vector<2x64xf32>
    %275 = arith.mulf %273, %274 : vector<2x64xf32>
    %c5_i32_54 = arith.constant 5 : i32
    %c2_i32_55 = arith.constant 2 : i32
    %276 = vector.broadcast %c5_i32_54 : i32 to vector<1x64xi32>
    %277 = vector.broadcast %c2_i32_55 : i32 to vector<1x64xi32>
    %278 = arith.select %19, %276, %277 : vector<1x64xi1>, vector<1x64xi32>
    %279 = vector.broadcast %278 : vector<1x64xi32> to vector<2x64xi32>
    %280 = vector.broadcast %0 : vector<2x1xi32> to vector<2x64xi32>
    %281 = arith.cmpi slt, %279, %280 : vector<2x64xi32>
    %282 = arith.select %281, %272, %241 : vector<2x64xi1>, vector<2x64xf32>
    %283 = arith.select %281, %275, %242 : vector<2x64xi1>, vector<2x64xf32>
    %cst_56 = arith.constant 0.000000e+00 : f32
    %284 = vector.broadcast %cst_56 : f32 to vector<2x64xf32>
    %285 = arith.select %281, %275, %284 : vector<2x64xi1>, vector<2x64xf32>
    %cst_57 = arith.constant 0.000000e+00 : f32
    %286 = vector.shape_cast %19 : vector<1x64xi1> to vector<1x64xi1>
    %287 = vector.broadcast %286 : vector<1x64xi1> to vector<2x64xi1>
    %288 = vector.broadcast %cst_57 : f32 to vector<2x64xf32>
    %289 = arith.select %287, %285, %288 : vector<2x64xi1>, vector<2x64xf32>
    %cst_58 = arith.constant 0.000000e+00 : f32
    %290 = vector.shape_cast %19 : vector<1x64xi1> to vector<1x64xi1>
    %291 = vector.broadcast %290 : vector<1x64xi1> to vector<2x64xi1>
    %292 = vector.broadcast %cst_58 : f32 to vector<2x64xf32>
    %293 = arith.select %291, %292, %285 : vector<2x64xi1>, vector<2x64xf32>
    %294 = vector.extract_strided_slice %45 {offsets = [12, 0], sizes = [2, 256], strides = [1, 1]} : vector<16x256xf32> to vector<2x256xf32>
    %295 = vector.extract_strided_slice %45 {offsets = [2, 0], sizes = [2, 256], strides = [1, 1]} : vector<16x256xf32> to vector<2x256xf32>
    %296 = vector.shape_cast %38 : vector<1x256xi1> to vector<1x256xi1>
    %297 = vector.broadcast %296 : vector<1x256xi1> to vector<2x256xi1>
    %298 = arith.select %297, %294, %295 : vector<2x256xi1>, vector<2x256xf32>
    %cst_59 = arith.constant dense<0.000000e+00> : vector<2x256xf32>
    %299 = tpu.matmul %283, %41, %cst_59 {dimension_numbers = #tpu.dot_dimension_numbers<[1], [0], [0], [1], [0, 0, 1, 1], [], []>} : vector<2x64xf32>, vector<64x256xf32>, vector<2x256xf32> -> vector<2x256xf32>
    %300 = arith.addf %298, %299 : vector<2x256xf32>
    %301 = vector.extract_strided_slice %300 {offsets = [0, 0], sizes = [2, 192], strides = [1, 1]} : vector<2x256xf32> to vector<2x192xf32>
    %302 = arith.negf %301 : vector<2x192xf32>
    %303 = math.exp %302 : vector<2x192xf32>
    %cst_60 = arith.constant 1.000000e+00 : f32
    %304 = vector.broadcast %cst_60 : f32 to vector<2x192xf32>
    %305 = arith.addf %304, %303 : vector<2x192xf32>
    %306 = arith.divf %304, %305 : vector<2x192xf32>
    %307 = vector.extract_strided_slice %300 {offsets = [0, 192], sizes = [2, 64], strides = [1, 1]} : vector<2x256xf32> to vector<2x64xf32>
    %308 = math.tanh %307 : vector<2x64xf32>
    %309 = vector.extract_strided_slice %306 {offsets = [0, 64], sizes = [2, 64], strides = [1, 1]} : vector<2x192xf32> to vector<2x64xf32>
    %310 = arith.mulf %309, %282 : vector<2x64xf32>
    %311 = vector.extract_strided_slice %306 {offsets = [0, 0], sizes = [2, 64], strides = [1, 1]} : vector<2x192xf32> to vector<2x64xf32>
    %312 = arith.mulf %311, %308 : vector<2x64xf32>
    %313 = arith.addf %310, %312 : vector<2x64xf32>
    %314 = vector.extract_strided_slice %306 {offsets = [0, 128], sizes = [2, 64], strides = [1, 1]} : vector<2x192xf32> to vector<2x64xf32>
    %315 = math.tanh %313 : vector<2x64xf32>
    %316 = arith.mulf %314, %315 : vector<2x64xf32>
    %c6_i32_61 = arith.constant 6 : i32
    %c1_i32_62 = arith.constant 1 : i32
    %317 = vector.broadcast %c6_i32_61 : i32 to vector<1x64xi32>
    %318 = vector.broadcast %c1_i32_62 : i32 to vector<1x64xi32>
    %319 = arith.select %19, %317, %318 : vector<1x64xi1>, vector<1x64xi32>
    %320 = vector.broadcast %319 : vector<1x64xi32> to vector<2x64xi32>
    %321 = vector.broadcast %0 : vector<2x1xi32> to vector<2x64xi32>
    %322 = arith.cmpi slt, %320, %321 : vector<2x64xi32>
    %323 = arith.select %322, %313, %282 : vector<2x64xi1>, vector<2x64xf32>
    %324 = arith.select %322, %316, %283 : vector<2x64xi1>, vector<2x64xf32>
    %cst_63 = arith.constant 0.000000e+00 : f32
    %325 = vector.broadcast %cst_63 : f32 to vector<2x64xf32>
    %326 = arith.select %322, %316, %325 : vector<2x64xi1>, vector<2x64xf32>
    %cst_64 = arith.constant 0.000000e+00 : f32
    %327 = vector.shape_cast %19 : vector<1x64xi1> to vector<1x64xi1>
    %328 = vector.broadcast %327 : vector<1x64xi1> to vector<2x64xi1>
    %329 = vector.broadcast %cst_64 : f32 to vector<2x64xf32>
    %330 = arith.select %328, %326, %329 : vector<2x64xi1>, vector<2x64xf32>
    %cst_65 = arith.constant 0.000000e+00 : f32
    %331 = vector.shape_cast %19 : vector<1x64xi1> to vector<1x64xi1>
    %332 = vector.broadcast %331 : vector<1x64xi1> to vector<2x64xi1>
    %333 = vector.broadcast %cst_65 : f32 to vector<2x64xf32>
    %334 = arith.select %332, %333, %326 : vector<2x64xi1>, vector<2x64xf32>
    %335 = vector.extract_strided_slice %45 {offsets = [14, 0], sizes = [2, 256], strides = [1, 1]} : vector<16x256xf32> to vector<2x256xf32>
    %336 = vector.extract_strided_slice %45 {offsets = [0, 0], sizes = [2, 256], strides = [1, 1]} : vector<16x256xf32> to vector<2x256xf32>
    %337 = vector.shape_cast %38 : vector<1x256xi1> to vector<1x256xi1>
    %338 = vector.broadcast %337 : vector<1x256xi1> to vector<2x256xi1>
    %339 = arith.select %338, %335, %336 : vector<2x256xi1>, vector<2x256xf32>
    %cst_66 = arith.constant dense<0.000000e+00> : vector<2x256xf32>
    %340 = tpu.matmul %324, %41, %cst_66 {dimension_numbers = #tpu.dot_dimension_numbers<[1], [0], [0], [1], [0, 0, 1, 1], [], []>} : vector<2x64xf32>, vector<64x256xf32>, vector<2x256xf32> -> vector<2x256xf32>
    %341 = arith.addf %339, %340 : vector<2x256xf32>
    %342 = vector.extract_strided_slice %341 {offsets = [0, 0], sizes = [2, 192], strides = [1, 1]} : vector<2x256xf32> to vector<2x192xf32>
    %343 = arith.negf %342 : vector<2x192xf32>
    %344 = math.exp %343 : vector<2x192xf32>
    %cst_67 = arith.constant 1.000000e+00 : f32
    %345 = vector.broadcast %cst_67 : f32 to vector<2x192xf32>
    %346 = arith.addf %345, %344 : vector<2x192xf32>
    %347 = arith.divf %345, %346 : vector<2x192xf32>
    %348 = vector.extract_strided_slice %341 {offsets = [0, 192], sizes = [2, 64], strides = [1, 1]} : vector<2x256xf32> to vector<2x64xf32>
    %349 = math.tanh %348 : vector<2x64xf32>
    %350 = vector.extract_strided_slice %347 {offsets = [0, 64], sizes = [2, 64], strides = [1, 1]} : vector<2x192xf32> to vector<2x64xf32>
    %351 = arith.mulf %350, %323 : vector<2x64xf32>
    %352 = vector.extract_strided_slice %347 {offsets = [0, 0], sizes = [2, 64], strides = [1, 1]} : vector<2x192xf32> to vector<2x64xf32>
    %353 = arith.mulf %352, %349 : vector<2x64xf32>
    %354 = arith.addf %351, %353 : vector<2x64xf32>
    %355 = vector.extract_strided_slice %347 {offsets = [0, 128], sizes = [2, 64], strides = [1, 1]} : vector<2x192xf32> to vector<2x64xf32>
    %356 = math.tanh %354 : vector<2x64xf32>
    %357 = arith.mulf %355, %356 : vector<2x64xf32>
    %c7_i32_68 = arith.constant 7 : i32
    %c0_i32_69 = arith.constant 0 : i32
    %358 = vector.broadcast %c7_i32_68 : i32 to vector<1x64xi32>
    %359 = vector.broadcast %c0_i32_69 : i32 to vector<1x64xi32>
    %360 = arith.select %19, %358, %359 : vector<1x64xi1>, vector<1x64xi32>
    %361 = vector.broadcast %360 : vector<1x64xi32> to vector<2x64xi32>
    %362 = vector.broadcast %0 : vector<2x1xi32> to vector<2x64xi32>
    %363 = arith.cmpi slt, %361, %362 : vector<2x64xi32>
    %cst_70 = arith.constant 0.000000e+00 : f32
    %364 = vector.broadcast %cst_70 : f32 to vector<2x64xf32>
    %365 = arith.select %363, %357, %364 : vector<2x64xi1>, vector<2x64xf32>
    %cst_71 = arith.constant 0.000000e+00 : f32
    %366 = vector.shape_cast %19 : vector<1x64xi1> to vector<1x64xi1>
    %367 = vector.broadcast %366 : vector<1x64xi1> to vector<2x64xi1>
    %368 = vector.broadcast %cst_71 : f32 to vector<2x64xf32>
    %369 = arith.select %367, %365, %368 : vector<2x64xi1>, vector<2x64xf32>
    %cst_72 = arith.constant 0.000000e+00 : f32
    %370 = vector.shape_cast %19 : vector<1x64xi1> to vector<1x64xi1>
    %371 = vector.broadcast %370 : vector<1x64xi1> to vector<2x64xi1>
    %372 = vector.broadcast %cst_72 : f32 to vector<2x64xf32>
    %373 = arith.select %371, %372, %365 : vector<2x64xi1>, vector<2x64xf32>
    %374 = arith.addf %84, %373 : vector<2x64xf32>
    %375 = arith.addf %125, %334 : vector<2x64xf32>
    %376 = arith.addf %166, %293 : vector<2x64xf32>
    %377 = arith.addf %207, %252 : vector<2x64xf32>
    %378 = arith.addf %248, %211 : vector<2x64xf32>
    %379 = arith.addf %289, %170 : vector<2x64xf32>
    %380 = arith.addf %330, %129 : vector<2x64xf32>
    %381 = arith.addf %369, %88 : vector<2x64xf32>
    %382 = tpu.concatenate %374, %375, %376, %377, %378, %379, %380, %381 in 0 : vector<2x64xf32>, vector<2x64xf32>, vector<2x64xf32>, vector<2x64xf32>, vector<2x64xf32>, vector<2x64xf32>, vector<2x64xf32>, vector<2x64xf32> -> vector<16x64xf32>
    %c0_73 = arith.constant 0 : index
    %c0_74 = arith.constant 0 : index
    %383 = vector.load %arg6[%c0_73, %c0_74] : memref<64x256xf32, #tpu.memory_space<vmem>>, vector<64x256xf32>
    %c0_75 = arith.constant 0 : index
    %c0_76 = arith.constant 0 : index
    %384 = vector.load %arg7[%c0_75, %c0_76] : memref<64x256xf32, #tpu.memory_space<vmem>>, vector<64x256xf32>
    %c0_77 = arith.constant 0 : index
    %c0_78 = arith.constant 0 : index
    %385 = vector.load %arg8[%c0_77, %c0_78] : memref<1x256xf32, #tpu.memory_space<vmem>>, vector<1x256xf32>
    %cst_79 = arith.constant dense<0.000000e+00> : vector<16x256xf32>
    %386 = tpu.matmul %382, %383, %cst_79 {dimension_numbers = #tpu.dot_dimension_numbers<[1], [0], [0], [1], [0, 0, 1, 1], [], []>} : vector<16x64xf32>, vector<64x256xf32>, vector<16x256xf32> -> vector<16x256xf32>
    %387 = vector.broadcast %385 : vector<1x256xf32> to vector<16x256xf32>
    %388 = arith.addf %386, %387 : vector<16x256xf32>
    %cst_80 = arith.constant 0.000000e+00 : f32
    %389 = vector.broadcast %cst_80 : f32 to vector<2x64xf32>
    %cst_81 = arith.constant 0.000000e+00 : f32
    %390 = vector.broadcast %cst_81 : f32 to vector<2x64xf32>
    %391 = vector.extract_strided_slice %388 {offsets = [0, 0], sizes = [2, 256], strides = [1, 1]} : vector<16x256xf32> to vector<2x256xf32>
    %392 = vector.extract_strided_slice %388 {offsets = [14, 0], sizes = [2, 256], strides = [1, 1]} : vector<16x256xf32> to vector<2x256xf32>
    %393 = vector.shape_cast %38 : vector<1x256xi1> to vector<1x256xi1>
    %394 = vector.broadcast %393 : vector<1x256xi1> to vector<2x256xi1>
    %395 = arith.select %394, %391, %392 : vector<2x256xi1>, vector<2x256xf32>
    %cst_82 = arith.constant dense<0.000000e+00> : vector<2x256xf32>
    %396 = tpu.matmul %389, %384, %cst_82 {dimension_numbers = #tpu.dot_dimension_numbers<[1], [0], [0], [1], [0, 0, 1, 1], [], []>} : vector<2x64xf32>, vector<64x256xf32>, vector<2x256xf32> -> vector<2x256xf32>
    %397 = arith.addf %395, %396 : vector<2x256xf32>
    %398 = vector.extract_strided_slice %397 {offsets = [0, 0], sizes = [2, 192], strides = [1, 1]} : vector<2x256xf32> to vector<2x192xf32>
    %399 = arith.negf %398 : vector<2x192xf32>
    %400 = math.exp %399 : vector<2x192xf32>
    %cst_83 = arith.constant 1.000000e+00 : f32
    %401 = vector.broadcast %cst_83 : f32 to vector<2x192xf32>
    %402 = arith.addf %401, %400 : vector<2x192xf32>
    %403 = arith.divf %401, %402 : vector<2x192xf32>
    %404 = vector.extract_strided_slice %397 {offsets = [0, 192], sizes = [2, 64], strides = [1, 1]} : vector<2x256xf32> to vector<2x64xf32>
    %405 = math.tanh %404 : vector<2x64xf32>
    %406 = vector.extract_strided_slice %403 {offsets = [0, 64], sizes = [2, 64], strides = [1, 1]} : vector<2x192xf32> to vector<2x64xf32>
    %407 = arith.mulf %406, %390 : vector<2x64xf32>
    %408 = vector.extract_strided_slice %403 {offsets = [0, 0], sizes = [2, 64], strides = [1, 1]} : vector<2x192xf32> to vector<2x64xf32>
    %409 = arith.mulf %408, %405 : vector<2x64xf32>
    %410 = arith.addf %407, %409 : vector<2x64xf32>
    %411 = vector.extract_strided_slice %403 {offsets = [0, 128], sizes = [2, 64], strides = [1, 1]} : vector<2x192xf32> to vector<2x64xf32>
    %412 = math.tanh %410 : vector<2x64xf32>
    %413 = arith.mulf %411, %412 : vector<2x64xf32>
    %c0_i32_84 = arith.constant 0 : i32
    %c7_i32_85 = arith.constant 7 : i32
    %414 = vector.broadcast %c0_i32_84 : i32 to vector<1x64xi32>
    %415 = vector.broadcast %c7_i32_85 : i32 to vector<1x64xi32>
    %416 = arith.select %19, %414, %415 : vector<1x64xi1>, vector<1x64xi32>
    %417 = vector.broadcast %416 : vector<1x64xi32> to vector<2x64xi32>
    %418 = vector.broadcast %0 : vector<2x1xi32> to vector<2x64xi32>
    %419 = arith.cmpi slt, %417, %418 : vector<2x64xi32>
    %420 = arith.select %419, %410, %390 : vector<2x64xi1>, vector<2x64xf32>
    %421 = arith.select %419, %413, %389 : vector<2x64xi1>, vector<2x64xf32>
    %cst_86 = arith.constant 0.000000e+00 : f32
    %422 = vector.broadcast %cst_86 : f32 to vector<2x64xf32>
    %423 = arith.select %419, %413, %422 : vector<2x64xi1>, vector<2x64xf32>
    %cst_87 = arith.constant 0.000000e+00 : f32
    %424 = vector.shape_cast %19 : vector<1x64xi1> to vector<1x64xi1>
    %425 = vector.broadcast %424 : vector<1x64xi1> to vector<2x64xi1>
    %426 = vector.broadcast %cst_87 : f32 to vector<2x64xf32>
    %427 = arith.select %425, %423, %426 : vector<2x64xi1>, vector<2x64xf32>
    %cst_88 = arith.constant 0.000000e+00 : f32
    %428 = vector.shape_cast %19 : vector<1x64xi1> to vector<1x64xi1>
    %429 = vector.broadcast %428 : vector<1x64xi1> to vector<2x64xi1>
    %430 = vector.broadcast %cst_88 : f32 to vector<2x64xf32>
    %431 = arith.select %429, %430, %423 : vector<2x64xi1>, vector<2x64xf32>
    %432 = vector.extract_strided_slice %388 {offsets = [2, 0], sizes = [2, 256], strides = [1, 1]} : vector<16x256xf32> to vector<2x256xf32>
    %433 = vector.extract_strided_slice %388 {offsets = [12, 0], sizes = [2, 256], strides = [1, 1]} : vector<16x256xf32> to vector<2x256xf32>
    %434 = vector.shape_cast %38 : vector<1x256xi1> to vector<1x256xi1>
    %435 = vector.broadcast %434 : vector<1x256xi1> to vector<2x256xi1>
    %436 = arith.select %435, %432, %433 : vector<2x256xi1>, vector<2x256xf32>
    %cst_89 = arith.constant dense<0.000000e+00> : vector<2x256xf32>
    %437 = tpu.matmul %421, %384, %cst_89 {dimension_numbers = #tpu.dot_dimension_numbers<[1], [0], [0], [1], [0, 0, 1, 1], [], []>} : vector<2x64xf32>, vector<64x256xf32>, vector<2x256xf32> -> vector<2x256xf32>
    %438 = arith.addf %436, %437 : vector<2x256xf32>
    %439 = vector.extract_strided_slice %438 {offsets = [0, 0], sizes = [2, 192], strides = [1, 1]} : vector<2x256xf32> to vector<2x192xf32>
    %440 = arith.negf %439 : vector<2x192xf32>
    %441 = math.exp %440 : vector<2x192xf32>
    %cst_90 = arith.constant 1.000000e+00 : f32
    %442 = vector.broadcast %cst_90 : f32 to vector<2x192xf32>
    %443 = arith.addf %442, %441 : vector<2x192xf32>
    %444 = arith.divf %442, %443 : vector<2x192xf32>
    %445 = vector.extract_strided_slice %438 {offsets = [0, 192], sizes = [2, 64], strides = [1, 1]} : vector<2x256xf32> to vector<2x64xf32>
    %446 = math.tanh %445 : vector<2x64xf32>
    %447 = vector.extract_strided_slice %444 {offsets = [0, 64], sizes = [2, 64], strides = [1, 1]} : vector<2x192xf32> to vector<2x64xf32>
    %448 = arith.mulf %447, %420 : vector<2x64xf32>
    %449 = vector.extract_strided_slice %444 {offsets = [0, 0], sizes = [2, 64], strides = [1, 1]} : vector<2x192xf32> to vector<2x64xf32>
    %450 = arith.mulf %449, %446 : vector<2x64xf32>
    %451 = arith.addf %448, %450 : vector<2x64xf32>
    %452 = vector.extract_strided_slice %444 {offsets = [0, 128], sizes = [2, 64], strides = [1, 1]} : vector<2x192xf32> to vector<2x64xf32>
    %453 = math.tanh %451 : vector<2x64xf32>
    %454 = arith.mulf %452, %453 : vector<2x64xf32>
    %c1_i32_91 = arith.constant 1 : i32
    %c6_i32_92 = arith.constant 6 : i32
    %455 = vector.broadcast %c1_i32_91 : i32 to vector<1x64xi32>
    %456 = vector.broadcast %c6_i32_92 : i32 to vector<1x64xi32>
    %457 = arith.select %19, %455, %456 : vector<1x64xi1>, vector<1x64xi32>
    %458 = vector.broadcast %457 : vector<1x64xi32> to vector<2x64xi32>
    %459 = vector.broadcast %0 : vector<2x1xi32> to vector<2x64xi32>
    %460 = arith.cmpi slt, %458, %459 : vector<2x64xi32>
    %461 = arith.select %460, %451, %420 : vector<2x64xi1>, vector<2x64xf32>
    %462 = arith.select %460, %454, %421 : vector<2x64xi1>, vector<2x64xf32>
    %cst_93 = arith.constant 0.000000e+00 : f32
    %463 = vector.broadcast %cst_93 : f32 to vector<2x64xf32>
    %464 = arith.select %460, %454, %463 : vector<2x64xi1>, vector<2x64xf32>
    %cst_94 = arith.constant 0.000000e+00 : f32
    %465 = vector.shape_cast %19 : vector<1x64xi1> to vector<1x64xi1>
    %466 = vector.broadcast %465 : vector<1x64xi1> to vector<2x64xi1>
    %467 = vector.broadcast %cst_94 : f32 to vector<2x64xf32>
    %468 = arith.select %466, %464, %467 : vector<2x64xi1>, vector<2x64xf32>
    %cst_95 = arith.constant 0.000000e+00 : f32
    %469 = vector.shape_cast %19 : vector<1x64xi1> to vector<1x64xi1>
    %470 = vector.broadcast %469 : vector<1x64xi1> to vector<2x64xi1>
    %471 = vector.broadcast %cst_95 : f32 to vector<2x64xf32>
    %472 = arith.select %470, %471, %464 : vector<2x64xi1>, vector<2x64xf32>
    %473 = vector.extract_strided_slice %388 {offsets = [4, 0], sizes = [2, 256], strides = [1, 1]} : vector<16x256xf32> to vector<2x256xf32>
    %474 = vector.extract_strided_slice %388 {offsets = [10, 0], sizes = [2, 256], strides = [1, 1]} : vector<16x256xf32> to vector<2x256xf32>
    %475 = vector.shape_cast %38 : vector<1x256xi1> to vector<1x256xi1>
    %476 = vector.broadcast %475 : vector<1x256xi1> to vector<2x256xi1>
    %477 = arith.select %476, %473, %474 : vector<2x256xi1>, vector<2x256xf32>
    %cst_96 = arith.constant dense<0.000000e+00> : vector<2x256xf32>
    %478 = tpu.matmul %462, %384, %cst_96 {dimension_numbers = #tpu.dot_dimension_numbers<[1], [0], [0], [1], [0, 0, 1, 1], [], []>} : vector<2x64xf32>, vector<64x256xf32>, vector<2x256xf32> -> vector<2x256xf32>
    %479 = arith.addf %477, %478 : vector<2x256xf32>
    %480 = vector.extract_strided_slice %479 {offsets = [0, 0], sizes = [2, 192], strides = [1, 1]} : vector<2x256xf32> to vector<2x192xf32>
    %481 = arith.negf %480 : vector<2x192xf32>
    %482 = math.exp %481 : vector<2x192xf32>
    %cst_97 = arith.constant 1.000000e+00 : f32
    %483 = vector.broadcast %cst_97 : f32 to vector<2x192xf32>
    %484 = arith.addf %483, %482 : vector<2x192xf32>
    %485 = arith.divf %483, %484 : vector<2x192xf32>
    %486 = vector.extract_strided_slice %479 {offsets = [0, 192], sizes = [2, 64], strides = [1, 1]} : vector<2x256xf32> to vector<2x64xf32>
    %487 = math.tanh %486 : vector<2x64xf32>
    %488 = vector.extract_strided_slice %485 {offsets = [0, 64], sizes = [2, 64], strides = [1, 1]} : vector<2x192xf32> to vector<2x64xf32>
    %489 = arith.mulf %488, %461 : vector<2x64xf32>
    %490 = vector.extract_strided_slice %485 {offsets = [0, 0], sizes = [2, 64], strides = [1, 1]} : vector<2x192xf32> to vector<2x64xf32>
    %491 = arith.mulf %490, %487 : vector<2x64xf32>
    %492 = arith.addf %489, %491 : vector<2x64xf32>
    %493 = vector.extract_strided_slice %485 {offsets = [0, 128], sizes = [2, 64], strides = [1, 1]} : vector<2x192xf32> to vector<2x64xf32>
    %494 = math.tanh %492 : vector<2x64xf32>
    %495 = arith.mulf %493, %494 : vector<2x64xf32>
    %c2_i32_98 = arith.constant 2 : i32
    %c5_i32_99 = arith.constant 5 : i32
    %496 = vector.broadcast %c2_i32_98 : i32 to vector<1x64xi32>
    %497 = vector.broadcast %c5_i32_99 : i32 to vector<1x64xi32>
    %498 = arith.select %19, %496, %497 : vector<1x64xi1>, vector<1x64xi32>
    %499 = vector.broadcast %498 : vector<1x64xi32> to vector<2x64xi32>
    %500 = vector.broadcast %0 : vector<2x1xi32> to vector<2x64xi32>
    %501 = arith.cmpi slt, %499, %500 : vector<2x64xi32>
    %502 = arith.select %501, %492, %461 : vector<2x64xi1>, vector<2x64xf32>
    %503 = arith.select %501, %495, %462 : vector<2x64xi1>, vector<2x64xf32>
    %cst_100 = arith.constant 0.000000e+00 : f32
    %504 = vector.broadcast %cst_100 : f32 to vector<2x64xf32>
    %505 = arith.select %501, %495, %504 : vector<2x64xi1>, vector<2x64xf32>
    %cst_101 = arith.constant 0.000000e+00 : f32
    %506 = vector.shape_cast %19 : vector<1x64xi1> to vector<1x64xi1>
    %507 = vector.broadcast %506 : vector<1x64xi1> to vector<2x64xi1>
    %508 = vector.broadcast %cst_101 : f32 to vector<2x64xf32>
    %509 = arith.select %507, %505, %508 : vector<2x64xi1>, vector<2x64xf32>
    %cst_102 = arith.constant 0.000000e+00 : f32
    %510 = vector.shape_cast %19 : vector<1x64xi1> to vector<1x64xi1>
    %511 = vector.broadcast %510 : vector<1x64xi1> to vector<2x64xi1>
    %512 = vector.broadcast %cst_102 : f32 to vector<2x64xf32>
    %513 = arith.select %511, %512, %505 : vector<2x64xi1>, vector<2x64xf32>
    %514 = vector.extract_strided_slice %388 {offsets = [6, 0], sizes = [2, 256], strides = [1, 1]} : vector<16x256xf32> to vector<2x256xf32>
    %515 = vector.extract_strided_slice %388 {offsets = [8, 0], sizes = [2, 256], strides = [1, 1]} : vector<16x256xf32> to vector<2x256xf32>
    %516 = vector.shape_cast %38 : vector<1x256xi1> to vector<1x256xi1>
    %517 = vector.broadcast %516 : vector<1x256xi1> to vector<2x256xi1>
    %518 = arith.select %517, %514, %515 : vector<2x256xi1>, vector<2x256xf32>
    %cst_103 = arith.constant dense<0.000000e+00> : vector<2x256xf32>
    %519 = tpu.matmul %503, %384, %cst_103 {dimension_numbers = #tpu.dot_dimension_numbers<[1], [0], [0], [1], [0, 0, 1, 1], [], []>} : vector<2x64xf32>, vector<64x256xf32>, vector<2x256xf32> -> vector<2x256xf32>
    %520 = arith.addf %518, %519 : vector<2x256xf32>
    %521 = vector.extract_strided_slice %520 {offsets = [0, 0], sizes = [2, 192], strides = [1, 1]} : vector<2x256xf32> to vector<2x192xf32>
    %522 = arith.negf %521 : vector<2x192xf32>
    %523 = math.exp %522 : vector<2x192xf32>
    %cst_104 = arith.constant 1.000000e+00 : f32
    %524 = vector.broadcast %cst_104 : f32 to vector<2x192xf32>
    %525 = arith.addf %524, %523 : vector<2x192xf32>
    %526 = arith.divf %524, %525 : vector<2x192xf32>
    %527 = vector.extract_strided_slice %520 {offsets = [0, 192], sizes = [2, 64], strides = [1, 1]} : vector<2x256xf32> to vector<2x64xf32>
    %528 = math.tanh %527 : vector<2x64xf32>
    %529 = vector.extract_strided_slice %526 {offsets = [0, 64], sizes = [2, 64], strides = [1, 1]} : vector<2x192xf32> to vector<2x64xf32>
    %530 = arith.mulf %529, %502 : vector<2x64xf32>
    %531 = vector.extract_strided_slice %526 {offsets = [0, 0], sizes = [2, 64], strides = [1, 1]} : vector<2x192xf32> to vector<2x64xf32>
    %532 = arith.mulf %531, %528 : vector<2x64xf32>
    %533 = arith.addf %530, %532 : vector<2x64xf32>
    %534 = vector.extract_strided_slice %526 {offsets = [0, 128], sizes = [2, 64], strides = [1, 1]} : vector<2x192xf32> to vector<2x64xf32>
    %535 = math.tanh %533 : vector<2x64xf32>
    %536 = arith.mulf %534, %535 : vector<2x64xf32>
    %c3_i32_105 = arith.constant 3 : i32
    %c4_i32_106 = arith.constant 4 : i32
    %537 = vector.broadcast %c3_i32_105 : i32 to vector<1x64xi32>
    %538 = vector.broadcast %c4_i32_106 : i32 to vector<1x64xi32>
    %539 = arith.select %19, %537, %538 : vector<1x64xi1>, vector<1x64xi32>
    %540 = vector.broadcast %539 : vector<1x64xi32> to vector<2x64xi32>
    %541 = vector.broadcast %0 : vector<2x1xi32> to vector<2x64xi32>
    %542 = arith.cmpi slt, %540, %541 : vector<2x64xi32>
    %543 = arith.select %542, %533, %502 : vector<2x64xi1>, vector<2x64xf32>
    %544 = arith.select %542, %536, %503 : vector<2x64xi1>, vector<2x64xf32>
    %cst_107 = arith.constant 0.000000e+00 : f32
    %545 = vector.broadcast %cst_107 : f32 to vector<2x64xf32>
    %546 = arith.select %542, %536, %545 : vector<2x64xi1>, vector<2x64xf32>
    %cst_108 = arith.constant 0.000000e+00 : f32
    %547 = vector.shape_cast %19 : vector<1x64xi1> to vector<1x64xi1>
    %548 = vector.broadcast %547 : vector<1x64xi1> to vector<2x64xi1>
    %549 = vector.broadcast %cst_108 : f32 to vector<2x64xf32>
    %550 = arith.select %548, %546, %549 : vector<2x64xi1>, vector<2x64xf32>
    %cst_109 = arith.constant 0.000000e+00 : f32
    %551 = vector.shape_cast %19 : vector<1x64xi1> to vector<1x64xi1>
    %552 = vector.broadcast %551 : vector<1x64xi1> to vector<2x64xi1>
    %553 = vector.broadcast %cst_109 : f32 to vector<2x64xf32>
    %554 = arith.select %552, %553, %546 : vector<2x64xi1>, vector<2x64xf32>
    %555 = vector.extract_strided_slice %388 {offsets = [8, 0], sizes = [2, 256], strides = [1, 1]} : vector<16x256xf32> to vector<2x256xf32>
    %556 = vector.extract_strided_slice %388 {offsets = [6, 0], sizes = [2, 256], strides = [1, 1]} : vector<16x256xf32> to vector<2x256xf32>
    %557 = vector.shape_cast %38 : vector<1x256xi1> to vector<1x256xi1>
    %558 = vector.broadcast %557 : vector<1x256xi1> to vector<2x256xi1>
    %559 = arith.select %558, %555, %556 : vector<2x256xi1>, vector<2x256xf32>
    %cst_110 = arith.constant dense<0.000000e+00> : vector<2x256xf32>
    %560 = tpu.matmul %544, %384, %cst_110 {dimension_numbers = #tpu.dot_dimension_numbers<[1], [0], [0], [1], [0, 0, 1, 1], [], []>} : vector<2x64xf32>, vector<64x256xf32>, vector<2x256xf32> -> vector<2x256xf32>
    %561 = arith.addf %559, %560 : vector<2x256xf32>
    %562 = vector.extract_strided_slice %561 {offsets = [0, 0], sizes = [2, 192], strides = [1, 1]} : vector<2x256xf32> to vector<2x192xf32>
    %563 = arith.negf %562 : vector<2x192xf32>
    %564 = math.exp %563 : vector<2x192xf32>
    %cst_111 = arith.constant 1.000000e+00 : f32
    %565 = vector.broadcast %cst_111 : f32 to vector<2x192xf32>
    %566 = arith.addf %565, %564 : vector<2x192xf32>
    %567 = arith.divf %565, %566 : vector<2x192xf32>
    %568 = vector.extract_strided_slice %561 {offsets = [0, 192], sizes = [2, 64], strides = [1, 1]} : vector<2x256xf32> to vector<2x64xf32>
    %569 = math.tanh %568 : vector<2x64xf32>
    %570 = vector.extract_strided_slice %567 {offsets = [0, 64], sizes = [2, 64], strides = [1, 1]} : vector<2x192xf32> to vector<2x64xf32>
    %571 = arith.mulf %570, %543 : vector<2x64xf32>
    %572 = vector.extract_strided_slice %567 {offsets = [0, 0], sizes = [2, 64], strides = [1, 1]} : vector<2x192xf32> to vector<2x64xf32>
    %573 = arith.mulf %572, %569 : vector<2x64xf32>
    %574 = arith.addf %571, %573 : vector<2x64xf32>
    %575 = vector.extract_strided_slice %567 {offsets = [0, 128], sizes = [2, 64], strides = [1, 1]} : vector<2x192xf32> to vector<2x64xf32>
    %576 = math.tanh %574 : vector<2x64xf32>
    %577 = arith.mulf %575, %576 : vector<2x64xf32>
    %c4_i32_112 = arith.constant 4 : i32
    %c3_i32_113 = arith.constant 3 : i32
    %578 = vector.broadcast %c4_i32_112 : i32 to vector<1x64xi32>
    %579 = vector.broadcast %c3_i32_113 : i32 to vector<1x64xi32>
    %580 = arith.select %19, %578, %579 : vector<1x64xi1>, vector<1x64xi32>
    %581 = vector.broadcast %580 : vector<1x64xi32> to vector<2x64xi32>
    %582 = vector.broadcast %0 : vector<2x1xi32> to vector<2x64xi32>
    %583 = arith.cmpi slt, %581, %582 : vector<2x64xi32>
    %584 = arith.select %583, %574, %543 : vector<2x64xi1>, vector<2x64xf32>
    %585 = arith.select %583, %577, %544 : vector<2x64xi1>, vector<2x64xf32>
    %cst_114 = arith.constant 0.000000e+00 : f32
    %586 = vector.broadcast %cst_114 : f32 to vector<2x64xf32>
    %587 = arith.select %583, %577, %586 : vector<2x64xi1>, vector<2x64xf32>
    %cst_115 = arith.constant 0.000000e+00 : f32
    %588 = vector.shape_cast %19 : vector<1x64xi1> to vector<1x64xi1>
    %589 = vector.broadcast %588 : vector<1x64xi1> to vector<2x64xi1>
    %590 = vector.broadcast %cst_115 : f32 to vector<2x64xf32>
    %591 = arith.select %589, %587, %590 : vector<2x64xi1>, vector<2x64xf32>
    %cst_116 = arith.constant 0.000000e+00 : f32
    %592 = vector.shape_cast %19 : vector<1x64xi1> to vector<1x64xi1>
    %593 = vector.broadcast %592 : vector<1x64xi1> to vector<2x64xi1>
    %594 = vector.broadcast %cst_116 : f32 to vector<2x64xf32>
    %595 = arith.select %593, %594, %587 : vector<2x64xi1>, vector<2x64xf32>
    %596 = vector.extract_strided_slice %388 {offsets = [10, 0], sizes = [2, 256], strides = [1, 1]} : vector<16x256xf32> to vector<2x256xf32>
    %597 = vector.extract_strided_slice %388 {offsets = [4, 0], sizes = [2, 256], strides = [1, 1]} : vector<16x256xf32> to vector<2x256xf32>
    %598 = vector.shape_cast %38 : vector<1x256xi1> to vector<1x256xi1>
    %599 = vector.broadcast %598 : vector<1x256xi1> to vector<2x256xi1>
    %600 = arith.select %599, %596, %597 : vector<2x256xi1>, vector<2x256xf32>
    %cst_117 = arith.constant dense<0.000000e+00> : vector<2x256xf32>
    %601 = tpu.matmul %585, %384, %cst_117 {dimension_numbers = #tpu.dot_dimension_numbers<[1], [0], [0], [1], [0, 0, 1, 1], [], []>} : vector<2x64xf32>, vector<64x256xf32>, vector<2x256xf32> -> vector<2x256xf32>
    %602 = arith.addf %600, %601 : vector<2x256xf32>
    %603 = vector.extract_strided_slice %602 {offsets = [0, 0], sizes = [2, 192], strides = [1, 1]} : vector<2x256xf32> to vector<2x192xf32>
    %604 = arith.negf %603 : vector<2x192xf32>
    %605 = math.exp %604 : vector<2x192xf32>
    %cst_118 = arith.constant 1.000000e+00 : f32
    %606 = vector.broadcast %cst_118 : f32 to vector<2x192xf32>
    %607 = arith.addf %606, %605 : vector<2x192xf32>
    %608 = arith.divf %606, %607 : vector<2x192xf32>
    %609 = vector.extract_strided_slice %602 {offsets = [0, 192], sizes = [2, 64], strides = [1, 1]} : vector<2x256xf32> to vector<2x64xf32>
    %610 = math.tanh %609 : vector<2x64xf32>
    %611 = vector.extract_strided_slice %608 {offsets = [0, 64], sizes = [2, 64], strides = [1, 1]} : vector<2x192xf32> to vector<2x64xf32>
    %612 = arith.mulf %611, %584 : vector<2x64xf32>
    %613 = vector.extract_strided_slice %608 {offsets = [0, 0], sizes = [2, 64], strides = [1, 1]} : vector<2x192xf32> to vector<2x64xf32>
    %614 = arith.mulf %613, %610 : vector<2x64xf32>
    %615 = arith.addf %612, %614 : vector<2x64xf32>
    %616 = vector.extract_strided_slice %608 {offsets = [0, 128], sizes = [2, 64], strides = [1, 1]} : vector<2x192xf32> to vector<2x64xf32>
    %617 = math.tanh %615 : vector<2x64xf32>
    %618 = arith.mulf %616, %617 : vector<2x64xf32>
    %c5_i32_119 = arith.constant 5 : i32
    %c2_i32_120 = arith.constant 2 : i32
    %619 = vector.broadcast %c5_i32_119 : i32 to vector<1x64xi32>
    %620 = vector.broadcast %c2_i32_120 : i32 to vector<1x64xi32>
    %621 = arith.select %19, %619, %620 : vector<1x64xi1>, vector<1x64xi32>
    %622 = vector.broadcast %621 : vector<1x64xi32> to vector<2x64xi32>
    %623 = vector.broadcast %0 : vector<2x1xi32> to vector<2x64xi32>
    %624 = arith.cmpi slt, %622, %623 : vector<2x64xi32>
    %625 = arith.select %624, %615, %584 : vector<2x64xi1>, vector<2x64xf32>
    %626 = arith.select %624, %618, %585 : vector<2x64xi1>, vector<2x64xf32>
    %cst_121 = arith.constant 0.000000e+00 : f32
    %627 = vector.broadcast %cst_121 : f32 to vector<2x64xf32>
    %628 = arith.select %624, %618, %627 : vector<2x64xi1>, vector<2x64xf32>
    %cst_122 = arith.constant 0.000000e+00 : f32
    %629 = vector.shape_cast %19 : vector<1x64xi1> to vector<1x64xi1>
    %630 = vector.broadcast %629 : vector<1x64xi1> to vector<2x64xi1>
    %631 = vector.broadcast %cst_122 : f32 to vector<2x64xf32>
    %632 = arith.select %630, %628, %631 : vector<2x64xi1>, vector<2x64xf32>
    %cst_123 = arith.constant 0.000000e+00 : f32
    %633 = vector.shape_cast %19 : vector<1x64xi1> to vector<1x64xi1>
    %634 = vector.broadcast %633 : vector<1x64xi1> to vector<2x64xi1>
    %635 = vector.broadcast %cst_123 : f32 to vector<2x64xf32>
    %636 = arith.select %634, %635, %628 : vector<2x64xi1>, vector<2x64xf32>
    %637 = vector.extract_strided_slice %388 {offsets = [12, 0], sizes = [2, 256], strides = [1, 1]} : vector<16x256xf32> to vector<2x256xf32>
    %638 = vector.extract_strided_slice %388 {offsets = [2, 0], sizes = [2, 256], strides = [1, 1]} : vector<16x256xf32> to vector<2x256xf32>
    %639 = vector.shape_cast %38 : vector<1x256xi1> to vector<1x256xi1>
    %640 = vector.broadcast %639 : vector<1x256xi1> to vector<2x256xi1>
    %641 = arith.select %640, %637, %638 : vector<2x256xi1>, vector<2x256xf32>
    %cst_124 = arith.constant dense<0.000000e+00> : vector<2x256xf32>
    %642 = tpu.matmul %626, %384, %cst_124 {dimension_numbers = #tpu.dot_dimension_numbers<[1], [0], [0], [1], [0, 0, 1, 1], [], []>} : vector<2x64xf32>, vector<64x256xf32>, vector<2x256xf32> -> vector<2x256xf32>
    %643 = arith.addf %641, %642 : vector<2x256xf32>
    %644 = vector.extract_strided_slice %643 {offsets = [0, 0], sizes = [2, 192], strides = [1, 1]} : vector<2x256xf32> to vector<2x192xf32>
    %645 = arith.negf %644 : vector<2x192xf32>
    %646 = math.exp %645 : vector<2x192xf32>
    %cst_125 = arith.constant 1.000000e+00 : f32
    %647 = vector.broadcast %cst_125 : f32 to vector<2x192xf32>
    %648 = arith.addf %647, %646 : vector<2x192xf32>
    %649 = arith.divf %647, %648 : vector<2x192xf32>
    %650 = vector.extract_strided_slice %643 {offsets = [0, 192], sizes = [2, 64], strides = [1, 1]} : vector<2x256xf32> to vector<2x64xf32>
    %651 = math.tanh %650 : vector<2x64xf32>
    %652 = vector.extract_strided_slice %649 {offsets = [0, 64], sizes = [2, 64], strides = [1, 1]} : vector<2x192xf32> to vector<2x64xf32>
    %653 = arith.mulf %652, %625 : vector<2x64xf32>
    %654 = vector.extract_strided_slice %649 {offsets = [0, 0], sizes = [2, 64], strides = [1, 1]} : vector<2x192xf32> to vector<2x64xf32>
    %655 = arith.mulf %654, %651 : vector<2x64xf32>
    %656 = arith.addf %653, %655 : vector<2x64xf32>
    %657 = vector.extract_strided_slice %649 {offsets = [0, 128], sizes = [2, 64], strides = [1, 1]} : vector<2x192xf32> to vector<2x64xf32>
    %658 = math.tanh %656 : vector<2x64xf32>
    %659 = arith.mulf %657, %658 : vector<2x64xf32>
    %c6_i32_126 = arith.constant 6 : i32
    %c1_i32_127 = arith.constant 1 : i32
    %660 = vector.broadcast %c6_i32_126 : i32 to vector<1x64xi32>
    %661 = vector.broadcast %c1_i32_127 : i32 to vector<1x64xi32>
    %662 = arith.select %19, %660, %661 : vector<1x64xi1>, vector<1x64xi32>
    %663 = vector.broadcast %662 : vector<1x64xi32> to vector<2x64xi32>
    %664 = vector.broadcast %0 : vector<2x1xi32> to vector<2x64xi32>
    %665 = arith.cmpi slt, %663, %664 : vector<2x64xi32>
    %666 = arith.select %665, %656, %625 : vector<2x64xi1>, vector<2x64xf32>
    %667 = arith.select %665, %659, %626 : vector<2x64xi1>, vector<2x64xf32>
    %cst_128 = arith.constant 0.000000e+00 : f32
    %668 = vector.broadcast %cst_128 : f32 to vector<2x64xf32>
    %669 = arith.select %665, %659, %668 : vector<2x64xi1>, vector<2x64xf32>
    %cst_129 = arith.constant 0.000000e+00 : f32
    %670 = vector.shape_cast %19 : vector<1x64xi1> to vector<1x64xi1>
    %671 = vector.broadcast %670 : vector<1x64xi1> to vector<2x64xi1>
    %672 = vector.broadcast %cst_129 : f32 to vector<2x64xf32>
    %673 = arith.select %671, %669, %672 : vector<2x64xi1>, vector<2x64xf32>
    %cst_130 = arith.constant 0.000000e+00 : f32
    %674 = vector.shape_cast %19 : vector<1x64xi1> to vector<1x64xi1>
    %675 = vector.broadcast %674 : vector<1x64xi1> to vector<2x64xi1>
    %676 = vector.broadcast %cst_130 : f32 to vector<2x64xf32>
    %677 = arith.select %675, %676, %669 : vector<2x64xi1>, vector<2x64xf32>
    %678 = vector.extract_strided_slice %388 {offsets = [14, 0], sizes = [2, 256], strides = [1, 1]} : vector<16x256xf32> to vector<2x256xf32>
    %679 = vector.extract_strided_slice %388 {offsets = [0, 0], sizes = [2, 256], strides = [1, 1]} : vector<16x256xf32> to vector<2x256xf32>
    %680 = vector.shape_cast %38 : vector<1x256xi1> to vector<1x256xi1>
    %681 = vector.broadcast %680 : vector<1x256xi1> to vector<2x256xi1>
    %682 = arith.select %681, %678, %679 : vector<2x256xi1>, vector<2x256xf32>
    %cst_131 = arith.constant dense<0.000000e+00> : vector<2x256xf32>
    %683 = tpu.matmul %667, %384, %cst_131 {dimension_numbers = #tpu.dot_dimension_numbers<[1], [0], [0], [1], [0, 0, 1, 1], [], []>} : vector<2x64xf32>, vector<64x256xf32>, vector<2x256xf32> -> vector<2x256xf32>
    %684 = arith.addf %682, %683 : vector<2x256xf32>
    %685 = vector.extract_strided_slice %684 {offsets = [0, 0], sizes = [2, 192], strides = [1, 1]} : vector<2x256xf32> to vector<2x192xf32>
    %686 = arith.negf %685 : vector<2x192xf32>
    %687 = math.exp %686 : vector<2x192xf32>
    %cst_132 = arith.constant 1.000000e+00 : f32
    %688 = vector.broadcast %cst_132 : f32 to vector<2x192xf32>
    %689 = arith.addf %688, %687 : vector<2x192xf32>
    %690 = arith.divf %688, %689 : vector<2x192xf32>
    %691 = vector.extract_strided_slice %684 {offsets = [0, 192], sizes = [2, 64], strides = [1, 1]} : vector<2x256xf32> to vector<2x64xf32>
    %692 = math.tanh %691 : vector<2x64xf32>
    %693 = vector.extract_strided_slice %690 {offsets = [0, 64], sizes = [2, 64], strides = [1, 1]} : vector<2x192xf32> to vector<2x64xf32>
    %694 = arith.mulf %693, %666 : vector<2x64xf32>
    %695 = vector.extract_strided_slice %690 {offsets = [0, 0], sizes = [2, 64], strides = [1, 1]} : vector<2x192xf32> to vector<2x64xf32>
    %696 = arith.mulf %695, %692 : vector<2x64xf32>
    %697 = arith.addf %694, %696 : vector<2x64xf32>
    %698 = vector.extract_strided_slice %690 {offsets = [0, 128], sizes = [2, 64], strides = [1, 1]} : vector<2x192xf32> to vector<2x64xf32>
    %699 = math.tanh %697 : vector<2x64xf32>
    %700 = arith.mulf %698, %699 : vector<2x64xf32>
    %c7_i32_133 = arith.constant 7 : i32
    %c0_i32_134 = arith.constant 0 : i32
    %701 = vector.broadcast %c7_i32_133 : i32 to vector<1x64xi32>
    %702 = vector.broadcast %c0_i32_134 : i32 to vector<1x64xi32>
    %703 = arith.select %19, %701, %702 : vector<1x64xi1>, vector<1x64xi32>
    %704 = vector.broadcast %703 : vector<1x64xi32> to vector<2x64xi32>
    %705 = vector.broadcast %0 : vector<2x1xi32> to vector<2x64xi32>
    %706 = arith.cmpi slt, %704, %705 : vector<2x64xi32>
    %cst_135 = arith.constant 0.000000e+00 : f32
    %707 = vector.broadcast %cst_135 : f32 to vector<2x64xf32>
    %708 = arith.select %706, %700, %707 : vector<2x64xi1>, vector<2x64xf32>
    %cst_136 = arith.constant 0.000000e+00 : f32
    %709 = vector.shape_cast %19 : vector<1x64xi1> to vector<1x64xi1>
    %710 = vector.broadcast %709 : vector<1x64xi1> to vector<2x64xi1>
    %711 = vector.broadcast %cst_136 : f32 to vector<2x64xf32>
    %712 = arith.select %710, %708, %711 : vector<2x64xi1>, vector<2x64xf32>
    %cst_137 = arith.constant 0.000000e+00 : f32
    %713 = vector.shape_cast %19 : vector<1x64xi1> to vector<1x64xi1>
    %714 = vector.broadcast %713 : vector<1x64xi1> to vector<2x64xi1>
    %715 = vector.broadcast %cst_137 : f32 to vector<2x64xf32>
    %716 = arith.select %714, %715, %708 : vector<2x64xi1>, vector<2x64xf32>
    %717 = arith.addf %427, %716 : vector<2x64xf32>
    %718 = arith.addf %468, %677 : vector<2x64xf32>
    %719 = arith.addf %509, %636 : vector<2x64xf32>
    %720 = arith.addf %550, %595 : vector<2x64xf32>
    %721 = arith.addf %591, %554 : vector<2x64xf32>
    %722 = arith.addf %632, %513 : vector<2x64xf32>
    %723 = arith.addf %673, %472 : vector<2x64xf32>
    %724 = arith.addf %712, %431 : vector<2x64xf32>
    %725 = tpu.concatenate %717, %718, %719, %720, %721, %722, %723, %724 in 0 : vector<2x64xf32>, vector<2x64xf32>, vector<2x64xf32>, vector<2x64xf32>, vector<2x64xf32>, vector<2x64xf32>, vector<2x64xf32>, vector<2x64xf32> -> vector<16x64xf32>
    %c0_138 = arith.constant 0 : index
    %c0_139 = arith.constant 0 : index
    %726 = vector.load %arg9[%c0_138, %c0_139] : memref<64x32xf32, #tpu.memory_space<vmem>>, vector<64x32xf32>
    %c0_140 = arith.constant 0 : index
    %c0_141 = arith.constant 0 : index
    %727 = vector.load %arg10[%c0_140, %c0_141] : memref<8x32xf32, #tpu.memory_space<vmem>>, vector<8x32xf32>
    %c0_142 = arith.constant 0 : index
    %c0_143 = arith.constant 0 : index
    %728 = vector.load %arg11[%c0_142, %c0_143] : memref<1x32xf32, #tpu.memory_space<vmem>>, vector<1x32xf32>
    %cst_144 = arith.constant dense<0.000000e+00> : vector<16x32xf32>
    %729 = tpu.matmul %725, %726, %cst_144 {dimension_numbers = #tpu.dot_dimension_numbers<[1], [0], [0], [1], [0, 0, 1, 1], [], []>} : vector<16x64xf32>, vector<64x32xf32>, vector<16x32xf32> -> vector<16x32xf32>
    %730 = vector.broadcast %728 : vector<1x32xf32> to vector<16x32xf32>
    %731 = arith.addf %729, %730 : vector<16x32xf32>
    %cst_145 = arith.constant 0.000000e+00 : f32
    %732 = vector.broadcast %cst_145 : f32 to vector<2x8xf32>
    %cst_146 = arith.constant 0.000000e+00 : f32
    %733 = vector.broadcast %cst_146 : f32 to vector<2x8xf32>
    %734 = vector.extract_strided_slice %731 {offsets = [0, 0], sizes = [2, 32], strides = [1, 1]} : vector<16x32xf32> to vector<2x32xf32>
    %cst_147 = arith.constant dense<0.000000e+00> : vector<2x32xf32>
    %735 = tpu.matmul %732, %727, %cst_147 {dimension_numbers = #tpu.dot_dimension_numbers<[1], [0], [0], [1], [0, 0, 1, 1], [], []>} : vector<2x8xf32>, vector<8x32xf32>, vector<2x32xf32> -> vector<2x32xf32>
    %736 = arith.addf %734, %735 : vector<2x32xf32>
    %737 = vector.extract_strided_slice %736 {offsets = [0, 0], sizes = [2, 24], strides = [1, 1]} : vector<2x32xf32> to vector<2x24xf32>
    %738 = arith.negf %737 : vector<2x24xf32>
    %739 = math.exp %738 : vector<2x24xf32>
    %cst_148 = arith.constant 1.000000e+00 : f32
    %740 = vector.broadcast %cst_148 : f32 to vector<2x24xf32>
    %741 = arith.addf %740, %739 : vector<2x24xf32>
    %742 = arith.divf %740, %741 : vector<2x24xf32>
    %743 = vector.extract_strided_slice %736 {offsets = [0, 24], sizes = [2, 8], strides = [1, 1]} : vector<2x32xf32> to vector<2x8xf32>
    %744 = math.tanh %743 : vector<2x8xf32>
    %745 = vector.extract_strided_slice %742 {offsets = [0, 8], sizes = [2, 8], strides = [1, 1]} : vector<2x24xf32> to vector<2x8xf32>
    %746 = arith.mulf %745, %733 : vector<2x8xf32>
    %747 = vector.extract_strided_slice %742 {offsets = [0, 0], sizes = [2, 8], strides = [1, 1]} : vector<2x24xf32> to vector<2x8xf32>
    %748 = arith.mulf %747, %744 : vector<2x8xf32>
    %749 = arith.addf %746, %748 : vector<2x8xf32>
    %750 = vector.extract_strided_slice %742 {offsets = [0, 16], sizes = [2, 8], strides = [1, 1]} : vector<2x24xf32> to vector<2x8xf32>
    %751 = math.tanh %749 : vector<2x8xf32>
    %752 = arith.mulf %750, %751 : vector<2x8xf32>
    %753 = vector.shape_cast %2 : vector<2x1xi1> to vector<2x1xi1>
    %754 = vector.broadcast %753 : vector<2x1xi1> to vector<2x8xi1>
    %755 = arith.select %754, %749, %733 : vector<2x8xi1>, vector<2x8xf32>
    %756 = vector.shape_cast %2 : vector<2x1xi1> to vector<2x1xi1>
    %757 = vector.broadcast %756 : vector<2x1xi1> to vector<2x8xi1>
    %758 = arith.select %757, %752, %732 : vector<2x8xi1>, vector<2x8xf32>
    %cst_149 = arith.constant 0.000000e+00 : f32
    %759 = vector.shape_cast %2 : vector<2x1xi1> to vector<2x1xi1>
    %760 = vector.broadcast %759 : vector<2x1xi1> to vector<2x8xi1>
    %761 = vector.broadcast %cst_149 : f32 to vector<2x8xf32>
    %762 = arith.select %760, %752, %761 : vector<2x8xi1>, vector<2x8xf32>
    %763 = vector.extract_strided_slice %731 {offsets = [2, 0], sizes = [2, 32], strides = [1, 1]} : vector<16x32xf32> to vector<2x32xf32>
    %cst_150 = arith.constant dense<0.000000e+00> : vector<2x32xf32>
    %764 = tpu.matmul %758, %727, %cst_150 {dimension_numbers = #tpu.dot_dimension_numbers<[1], [0], [0], [1], [0, 0, 1, 1], [], []>} : vector<2x8xf32>, vector<8x32xf32>, vector<2x32xf32> -> vector<2x32xf32>
    %765 = arith.addf %763, %764 : vector<2x32xf32>
    %766 = vector.extract_strided_slice %765 {offsets = [0, 0], sizes = [2, 24], strides = [1, 1]} : vector<2x32xf32> to vector<2x24xf32>
    %767 = arith.negf %766 : vector<2x24xf32>
    %768 = math.exp %767 : vector<2x24xf32>
    %cst_151 = arith.constant 1.000000e+00 : f32
    %769 = vector.broadcast %cst_151 : f32 to vector<2x24xf32>
    %770 = arith.addf %769, %768 : vector<2x24xf32>
    %771 = arith.divf %769, %770 : vector<2x24xf32>
    %772 = vector.extract_strided_slice %765 {offsets = [0, 24], sizes = [2, 8], strides = [1, 1]} : vector<2x32xf32> to vector<2x8xf32>
    %773 = math.tanh %772 : vector<2x8xf32>
    %774 = vector.extract_strided_slice %771 {offsets = [0, 8], sizes = [2, 8], strides = [1, 1]} : vector<2x24xf32> to vector<2x8xf32>
    %775 = arith.mulf %774, %755 : vector<2x8xf32>
    %776 = vector.extract_strided_slice %771 {offsets = [0, 0], sizes = [2, 8], strides = [1, 1]} : vector<2x24xf32> to vector<2x8xf32>
    %777 = arith.mulf %776, %773 : vector<2x8xf32>
    %778 = arith.addf %775, %777 : vector<2x8xf32>
    %779 = vector.extract_strided_slice %771 {offsets = [0, 16], sizes = [2, 8], strides = [1, 1]} : vector<2x24xf32> to vector<2x8xf32>
    %780 = math.tanh %778 : vector<2x8xf32>
    %781 = arith.mulf %779, %780 : vector<2x8xf32>
    %782 = vector.shape_cast %4 : vector<2x1xi1> to vector<2x1xi1>
    %783 = vector.broadcast %782 : vector<2x1xi1> to vector<2x8xi1>
    %784 = arith.select %783, %778, %755 : vector<2x8xi1>, vector<2x8xf32>
    %785 = vector.shape_cast %4 : vector<2x1xi1> to vector<2x1xi1>
    %786 = vector.broadcast %785 : vector<2x1xi1> to vector<2x8xi1>
    %787 = arith.select %786, %781, %758 : vector<2x8xi1>, vector<2x8xf32>
    %cst_152 = arith.constant 0.000000e+00 : f32
    %788 = vector.shape_cast %4 : vector<2x1xi1> to vector<2x1xi1>
    %789 = vector.broadcast %788 : vector<2x1xi1> to vector<2x8xi1>
    %790 = vector.broadcast %cst_152 : f32 to vector<2x8xf32>
    %791 = arith.select %789, %781, %790 : vector<2x8xi1>, vector<2x8xf32>
    %792 = vector.extract_strided_slice %731 {offsets = [4, 0], sizes = [2, 32], strides = [1, 1]} : vector<16x32xf32> to vector<2x32xf32>
    %cst_153 = arith.constant dense<0.000000e+00> : vector<2x32xf32>
    %793 = tpu.matmul %787, %727, %cst_153 {dimension_numbers = #tpu.dot_dimension_numbers<[1], [0], [0], [1], [0, 0, 1, 1], [], []>} : vector<2x8xf32>, vector<8x32xf32>, vector<2x32xf32> -> vector<2x32xf32>
    %794 = arith.addf %792, %793 : vector<2x32xf32>
    %795 = vector.extract_strided_slice %794 {offsets = [0, 0], sizes = [2, 24], strides = [1, 1]} : vector<2x32xf32> to vector<2x24xf32>
    %796 = arith.negf %795 : vector<2x24xf32>
    %797 = math.exp %796 : vector<2x24xf32>
    %cst_154 = arith.constant 1.000000e+00 : f32
    %798 = vector.broadcast %cst_154 : f32 to vector<2x24xf32>
    %799 = arith.addf %798, %797 : vector<2x24xf32>
    %800 = arith.divf %798, %799 : vector<2x24xf32>
    %801 = vector.extract_strided_slice %794 {offsets = [0, 24], sizes = [2, 8], strides = [1, 1]} : vector<2x32xf32> to vector<2x8xf32>
    %802 = math.tanh %801 : vector<2x8xf32>
    %803 = vector.extract_strided_slice %800 {offsets = [0, 8], sizes = [2, 8], strides = [1, 1]} : vector<2x24xf32> to vector<2x8xf32>
    %804 = arith.mulf %803, %784 : vector<2x8xf32>
    %805 = vector.extract_strided_slice %800 {offsets = [0, 0], sizes = [2, 8], strides = [1, 1]} : vector<2x24xf32> to vector<2x8xf32>
    %806 = arith.mulf %805, %802 : vector<2x8xf32>
    %807 = arith.addf %804, %806 : vector<2x8xf32>
    %808 = vector.extract_strided_slice %800 {offsets = [0, 16], sizes = [2, 8], strides = [1, 1]} : vector<2x24xf32> to vector<2x8xf32>
    %809 = math.tanh %807 : vector<2x8xf32>
    %810 = arith.mulf %808, %809 : vector<2x8xf32>
    %811 = vector.shape_cast %6 : vector<2x1xi1> to vector<2x1xi1>
    %812 = vector.broadcast %811 : vector<2x1xi1> to vector<2x8xi1>
    %813 = arith.select %812, %807, %784 : vector<2x8xi1>, vector<2x8xf32>
    %814 = vector.shape_cast %6 : vector<2x1xi1> to vector<2x1xi1>
    %815 = vector.broadcast %814 : vector<2x1xi1> to vector<2x8xi1>
    %816 = arith.select %815, %810, %787 : vector<2x8xi1>, vector<2x8xf32>
    %cst_155 = arith.constant 0.000000e+00 : f32
    %817 = vector.shape_cast %6 : vector<2x1xi1> to vector<2x1xi1>
    %818 = vector.broadcast %817 : vector<2x1xi1> to vector<2x8xi1>
    %819 = vector.broadcast %cst_155 : f32 to vector<2x8xf32>
    %820 = arith.select %818, %810, %819 : vector<2x8xi1>, vector<2x8xf32>
    %821 = vector.extract_strided_slice %731 {offsets = [6, 0], sizes = [2, 32], strides = [1, 1]} : vector<16x32xf32> to vector<2x32xf32>
    %cst_156 = arith.constant dense<0.000000e+00> : vector<2x32xf32>
    %822 = tpu.matmul %816, %727, %cst_156 {dimension_numbers = #tpu.dot_dimension_numbers<[1], [0], [0], [1], [0, 0, 1, 1], [], []>} : vector<2x8xf32>, vector<8x32xf32>, vector<2x32xf32> -> vector<2x32xf32>
    %823 = arith.addf %821, %822 : vector<2x32xf32>
    %824 = vector.extract_strided_slice %823 {offsets = [0, 0], sizes = [2, 24], strides = [1, 1]} : vector<2x32xf32> to vector<2x24xf32>
    %825 = arith.negf %824 : vector<2x24xf32>
    %826 = math.exp %825 : vector<2x24xf32>
    %cst_157 = arith.constant 1.000000e+00 : f32
    %827 = vector.broadcast %cst_157 : f32 to vector<2x24xf32>
    %828 = arith.addf %827, %826 : vector<2x24xf32>
    %829 = arith.divf %827, %828 : vector<2x24xf32>
    %830 = vector.extract_strided_slice %823 {offsets = [0, 24], sizes = [2, 8], strides = [1, 1]} : vector<2x32xf32> to vector<2x8xf32>
    %831 = math.tanh %830 : vector<2x8xf32>
    %832 = vector.extract_strided_slice %829 {offsets = [0, 8], sizes = [2, 8], strides = [1, 1]} : vector<2x24xf32> to vector<2x8xf32>
    %833 = arith.mulf %832, %813 : vector<2x8xf32>
    %834 = vector.extract_strided_slice %829 {offsets = [0, 0], sizes = [2, 8], strides = [1, 1]} : vector<2x24xf32> to vector<2x8xf32>
    %835 = arith.mulf %834, %831 : vector<2x8xf32>
    %836 = arith.addf %833, %835 : vector<2x8xf32>
    %837 = vector.extract_strided_slice %829 {offsets = [0, 16], sizes = [2, 8], strides = [1, 1]} : vector<2x24xf32> to vector<2x8xf32>
    %838 = math.tanh %836 : vector<2x8xf32>
    %839 = arith.mulf %837, %838 : vector<2x8xf32>
    %840 = vector.shape_cast %8 : vector<2x1xi1> to vector<2x1xi1>
    %841 = vector.broadcast %840 : vector<2x1xi1> to vector<2x8xi1>
    %842 = arith.select %841, %836, %813 : vector<2x8xi1>, vector<2x8xf32>
    %843 = vector.shape_cast %8 : vector<2x1xi1> to vector<2x1xi1>
    %844 = vector.broadcast %843 : vector<2x1xi1> to vector<2x8xi1>
    %845 = arith.select %844, %839, %816 : vector<2x8xi1>, vector<2x8xf32>
    %cst_158 = arith.constant 0.000000e+00 : f32
    %846 = vector.shape_cast %8 : vector<2x1xi1> to vector<2x1xi1>
    %847 = vector.broadcast %846 : vector<2x1xi1> to vector<2x8xi1>
    %848 = vector.broadcast %cst_158 : f32 to vector<2x8xf32>
    %849 = arith.select %847, %839, %848 : vector<2x8xi1>, vector<2x8xf32>
    %850 = vector.extract_strided_slice %731 {offsets = [8, 0], sizes = [2, 32], strides = [1, 1]} : vector<16x32xf32> to vector<2x32xf32>
    %cst_159 = arith.constant dense<0.000000e+00> : vector<2x32xf32>
    %851 = tpu.matmul %845, %727, %cst_159 {dimension_numbers = #tpu.dot_dimension_numbers<[1], [0], [0], [1], [0, 0, 1, 1], [], []>} : vector<2x8xf32>, vector<8x32xf32>, vector<2x32xf32> -> vector<2x32xf32>
    %852 = arith.addf %850, %851 : vector<2x32xf32>
    %853 = vector.extract_strided_slice %852 {offsets = [0, 0], sizes = [2, 24], strides = [1, 1]} : vector<2x32xf32> to vector<2x24xf32>
    %854 = arith.negf %853 : vector<2x24xf32>
    %855 = math.exp %854 : vector<2x24xf32>
    %cst_160 = arith.constant 1.000000e+00 : f32
    %856 = vector.broadcast %cst_160 : f32 to vector<2x24xf32>
    %857 = arith.addf %856, %855 : vector<2x24xf32>
    %858 = arith.divf %856, %857 : vector<2x24xf32>
    %859 = vector.extract_strided_slice %852 {offsets = [0, 24], sizes = [2, 8], strides = [1, 1]} : vector<2x32xf32> to vector<2x8xf32>
    %860 = math.tanh %859 : vector<2x8xf32>
    %861 = vector.extract_strided_slice %858 {offsets = [0, 8], sizes = [2, 8], strides = [1, 1]} : vector<2x24xf32> to vector<2x8xf32>
    %862 = arith.mulf %861, %842 : vector<2x8xf32>
    %863 = vector.extract_strided_slice %858 {offsets = [0, 0], sizes = [2, 8], strides = [1, 1]} : vector<2x24xf32> to vector<2x8xf32>
    %864 = arith.mulf %863, %860 : vector<2x8xf32>
    %865 = arith.addf %862, %864 : vector<2x8xf32>
    %866 = vector.extract_strided_slice %858 {offsets = [0, 16], sizes = [2, 8], strides = [1, 1]} : vector<2x24xf32> to vector<2x8xf32>
    %867 = math.tanh %865 : vector<2x8xf32>
    %868 = arith.mulf %866, %867 : vector<2x8xf32>
    %869 = vector.shape_cast %10 : vector<2x1xi1> to vector<2x1xi1>
    %870 = vector.broadcast %869 : vector<2x1xi1> to vector<2x8xi1>
    %871 = arith.select %870, %865, %842 : vector<2x8xi1>, vector<2x8xf32>
    %872 = vector.shape_cast %10 : vector<2x1xi1> to vector<2x1xi1>
    %873 = vector.broadcast %872 : vector<2x1xi1> to vector<2x8xi1>
    %874 = arith.select %873, %868, %845 : vector<2x8xi1>, vector<2x8xf32>
    %cst_161 = arith.constant 0.000000e+00 : f32
    %875 = vector.shape_cast %10 : vector<2x1xi1> to vector<2x1xi1>
    %876 = vector.broadcast %875 : vector<2x1xi1> to vector<2x8xi1>
    %877 = vector.broadcast %cst_161 : f32 to vector<2x8xf32>
    %878 = arith.select %876, %868, %877 : vector<2x8xi1>, vector<2x8xf32>
    %879 = vector.extract_strided_slice %731 {offsets = [10, 0], sizes = [2, 32], strides = [1, 1]} : vector<16x32xf32> to vector<2x32xf32>
    %cst_162 = arith.constant dense<0.000000e+00> : vector<2x32xf32>
    %880 = tpu.matmul %874, %727, %cst_162 {dimension_numbers = #tpu.dot_dimension_numbers<[1], [0], [0], [1], [0, 0, 1, 1], [], []>} : vector<2x8xf32>, vector<8x32xf32>, vector<2x32xf32> -> vector<2x32xf32>
    %881 = arith.addf %879, %880 : vector<2x32xf32>
    %882 = vector.extract_strided_slice %881 {offsets = [0, 0], sizes = [2, 24], strides = [1, 1]} : vector<2x32xf32> to vector<2x24xf32>
    %883 = arith.negf %882 : vector<2x24xf32>
    %884 = math.exp %883 : vector<2x24xf32>
    %cst_163 = arith.constant 1.000000e+00 : f32
    %885 = vector.broadcast %cst_163 : f32 to vector<2x24xf32>
    %886 = arith.addf %885, %884 : vector<2x24xf32>
    %887 = arith.divf %885, %886 : vector<2x24xf32>
    %888 = vector.extract_strided_slice %881 {offsets = [0, 24], sizes = [2, 8], strides = [1, 1]} : vector<2x32xf32> to vector<2x8xf32>
    %889 = math.tanh %888 : vector<2x8xf32>
    %890 = vector.extract_strided_slice %887 {offsets = [0, 8], sizes = [2, 8], strides = [1, 1]} : vector<2x24xf32> to vector<2x8xf32>
    %891 = arith.mulf %890, %871 : vector<2x8xf32>
    %892 = vector.extract_strided_slice %887 {offsets = [0, 0], sizes = [2, 8], strides = [1, 1]} : vector<2x24xf32> to vector<2x8xf32>
    %893 = arith.mulf %892, %889 : vector<2x8xf32>
    %894 = arith.addf %891, %893 : vector<2x8xf32>
    %895 = vector.extract_strided_slice %887 {offsets = [0, 16], sizes = [2, 8], strides = [1, 1]} : vector<2x24xf32> to vector<2x8xf32>
    %896 = math.tanh %894 : vector<2x8xf32>
    %897 = arith.mulf %895, %896 : vector<2x8xf32>
    %898 = vector.shape_cast %12 : vector<2x1xi1> to vector<2x1xi1>
    %899 = vector.broadcast %898 : vector<2x1xi1> to vector<2x8xi1>
    %900 = arith.select %899, %894, %871 : vector<2x8xi1>, vector<2x8xf32>
    %901 = vector.shape_cast %12 : vector<2x1xi1> to vector<2x1xi1>
    %902 = vector.broadcast %901 : vector<2x1xi1> to vector<2x8xi1>
    %903 = arith.select %902, %897, %874 : vector<2x8xi1>, vector<2x8xf32>
    %cst_164 = arith.constant 0.000000e+00 : f32
    %904 = vector.shape_cast %12 : vector<2x1xi1> to vector<2x1xi1>
    %905 = vector.broadcast %904 : vector<2x1xi1> to vector<2x8xi1>
    %906 = vector.broadcast %cst_164 : f32 to vector<2x8xf32>
    %907 = arith.select %905, %897, %906 : vector<2x8xi1>, vector<2x8xf32>
    %908 = vector.extract_strided_slice %731 {offsets = [12, 0], sizes = [2, 32], strides = [1, 1]} : vector<16x32xf32> to vector<2x32xf32>
    %cst_165 = arith.constant dense<0.000000e+00> : vector<2x32xf32>
    %909 = tpu.matmul %903, %727, %cst_165 {dimension_numbers = #tpu.dot_dimension_numbers<[1], [0], [0], [1], [0, 0, 1, 1], [], []>} : vector<2x8xf32>, vector<8x32xf32>, vector<2x32xf32> -> vector<2x32xf32>
    %910 = arith.addf %908, %909 : vector<2x32xf32>
    %911 = vector.extract_strided_slice %910 {offsets = [0, 0], sizes = [2, 24], strides = [1, 1]} : vector<2x32xf32> to vector<2x24xf32>
    %912 = arith.negf %911 : vector<2x24xf32>
    %913 = math.exp %912 : vector<2x24xf32>
    %cst_166 = arith.constant 1.000000e+00 : f32
    %914 = vector.broadcast %cst_166 : f32 to vector<2x24xf32>
    %915 = arith.addf %914, %913 : vector<2x24xf32>
    %916 = arith.divf %914, %915 : vector<2x24xf32>
    %917 = vector.extract_strided_slice %910 {offsets = [0, 24], sizes = [2, 8], strides = [1, 1]} : vector<2x32xf32> to vector<2x8xf32>
    %918 = math.tanh %917 : vector<2x8xf32>
    %919 = vector.extract_strided_slice %916 {offsets = [0, 8], sizes = [2, 8], strides = [1, 1]} : vector<2x24xf32> to vector<2x8xf32>
    %920 = arith.mulf %919, %900 : vector<2x8xf32>
    %921 = vector.extract_strided_slice %916 {offsets = [0, 0], sizes = [2, 8], strides = [1, 1]} : vector<2x24xf32> to vector<2x8xf32>
    %922 = arith.mulf %921, %918 : vector<2x8xf32>
    %923 = arith.addf %920, %922 : vector<2x8xf32>
    %924 = vector.extract_strided_slice %916 {offsets = [0, 16], sizes = [2, 8], strides = [1, 1]} : vector<2x24xf32> to vector<2x8xf32>
    %925 = math.tanh %923 : vector<2x8xf32>
    %926 = arith.mulf %924, %925 : vector<2x8xf32>
    %927 = vector.shape_cast %14 : vector<2x1xi1> to vector<2x1xi1>
    %928 = vector.broadcast %927 : vector<2x1xi1> to vector<2x8xi1>
    %929 = arith.select %928, %923, %900 : vector<2x8xi1>, vector<2x8xf32>
    %930 = vector.shape_cast %14 : vector<2x1xi1> to vector<2x1xi1>
    %931 = vector.broadcast %930 : vector<2x1xi1> to vector<2x8xi1>
    %932 = arith.select %931, %926, %903 : vector<2x8xi1>, vector<2x8xf32>
    %cst_167 = arith.constant 0.000000e+00 : f32
    %933 = vector.shape_cast %14 : vector<2x1xi1> to vector<2x1xi1>
    %934 = vector.broadcast %933 : vector<2x1xi1> to vector<2x8xi1>
    %935 = vector.broadcast %cst_167 : f32 to vector<2x8xf32>
    %936 = arith.select %934, %926, %935 : vector<2x8xi1>, vector<2x8xf32>
    %937 = vector.extract_strided_slice %731 {offsets = [14, 0], sizes = [2, 32], strides = [1, 1]} : vector<16x32xf32> to vector<2x32xf32>
    %cst_168 = arith.constant dense<0.000000e+00> : vector<2x32xf32>
    %938 = tpu.matmul %932, %727, %cst_168 {dimension_numbers = #tpu.dot_dimension_numbers<[1], [0], [0], [1], [0, 0, 1, 1], [], []>} : vector<2x8xf32>, vector<8x32xf32>, vector<2x32xf32> -> vector<2x32xf32>
    %939 = arith.addf %937, %938 : vector<2x32xf32>
    %940 = vector.extract_strided_slice %939 {offsets = [0, 0], sizes = [2, 24], strides = [1, 1]} : vector<2x32xf32> to vector<2x24xf32>
    %941 = arith.negf %940 : vector<2x24xf32>
    %942 = math.exp %941 : vector<2x24xf32>
    %cst_169 = arith.constant 1.000000e+00 : f32
    %943 = vector.broadcast %cst_169 : f32 to vector<2x24xf32>
    %944 = arith.addf %943, %942 : vector<2x24xf32>
    %945 = arith.divf %943, %944 : vector<2x24xf32>
    %946 = vector.extract_strided_slice %939 {offsets = [0, 24], sizes = [2, 8], strides = [1, 1]} : vector<2x32xf32> to vector<2x8xf32>
    %947 = math.tanh %946 : vector<2x8xf32>
    %948 = vector.extract_strided_slice %945 {offsets = [0, 8], sizes = [2, 8], strides = [1, 1]} : vector<2x24xf32> to vector<2x8xf32>
    %949 = arith.mulf %948, %929 : vector<2x8xf32>
    %950 = vector.extract_strided_slice %945 {offsets = [0, 0], sizes = [2, 8], strides = [1, 1]} : vector<2x24xf32> to vector<2x8xf32>
    %951 = arith.mulf %950, %947 : vector<2x8xf32>
    %952 = arith.addf %949, %951 : vector<2x8xf32>
    %953 = vector.extract_strided_slice %945 {offsets = [0, 16], sizes = [2, 8], strides = [1, 1]} : vector<2x24xf32> to vector<2x8xf32>
    %954 = math.tanh %952 : vector<2x8xf32>
    %955 = arith.mulf %953, %954 : vector<2x8xf32>
    %cst_170 = arith.constant 0.000000e+00 : f32
    %956 = vector.shape_cast %16 : vector<2x1xi1> to vector<2x1xi1>
    %957 = vector.broadcast %956 : vector<2x1xi1> to vector<2x8xi1>
    %958 = vector.broadcast %cst_170 : f32 to vector<2x8xf32>
    %959 = arith.select %957, %955, %958 : vector<2x8xi1>, vector<2x8xf32>
    %960 = tpu.concatenate %762, %791, %820, %849, %878, %907, %936, %959 in 0 : vector<2x8xf32>, vector<2x8xf32>, vector<2x8xf32>, vector<2x8xf32>, vector<2x8xf32>, vector<2x8xf32>, vector<2x8xf32>, vector<2x8xf32> -> vector<16x8xf32>
    %c0_171 = arith.constant 0 : index
    %c0_172 = arith.constant 0 : index
    %961 = vector.load %arg12[%c0_171, %c0_172] : memref<8x32xf32, #tpu.memory_space<vmem>>, vector<8x32xf32>
    %c0_173 = arith.constant 0 : index
    %c0_174 = arith.constant 0 : index
    %962 = vector.load %arg13[%c0_173, %c0_174] : memref<8x32xf32, #tpu.memory_space<vmem>>, vector<8x32xf32>
    %c0_175 = arith.constant 0 : index
    %c0_176 = arith.constant 0 : index
    %963 = vector.load %arg14[%c0_175, %c0_176] : memref<1x32xf32, #tpu.memory_space<vmem>>, vector<1x32xf32>
    %cst_177 = arith.constant dense<0.000000e+00> : vector<16x32xf32>
    %964 = tpu.matmul %960, %961, %cst_177 {dimension_numbers = #tpu.dot_dimension_numbers<[1], [0], [0], [1], [0, 0, 1, 1], [], []>} : vector<16x8xf32>, vector<8x32xf32>, vector<16x32xf32> -> vector<16x32xf32>
    %965 = vector.broadcast %963 : vector<1x32xf32> to vector<16x32xf32>
    %966 = arith.addf %964, %965 : vector<16x32xf32>
    %cst_178 = arith.constant 0.000000e+00 : f32
    %967 = vector.broadcast %cst_178 : f32 to vector<2x8xf32>
    %cst_179 = arith.constant 0.000000e+00 : f32
    %968 = vector.broadcast %cst_179 : f32 to vector<2x8xf32>
    %969 = vector.extract_strided_slice %966 {offsets = [0, 0], sizes = [2, 32], strides = [1, 1]} : vector<16x32xf32> to vector<2x32xf32>
    %cst_180 = arith.constant dense<0.000000e+00> : vector<2x32xf32>
    %970 = tpu.matmul %967, %962, %cst_180 {dimension_numbers = #tpu.dot_dimension_numbers<[1], [0], [0], [1], [0, 0, 1, 1], [], []>} : vector<2x8xf32>, vector<8x32xf32>, vector<2x32xf32> -> vector<2x32xf32>
    %971 = arith.addf %969, %970 : vector<2x32xf32>
    %972 = vector.extract_strided_slice %971 {offsets = [0, 0], sizes = [2, 24], strides = [1, 1]} : vector<2x32xf32> to vector<2x24xf32>
    %973 = arith.negf %972 : vector<2x24xf32>
    %974 = math.exp %973 : vector<2x24xf32>
    %cst_181 = arith.constant 1.000000e+00 : f32
    %975 = vector.broadcast %cst_181 : f32 to vector<2x24xf32>
    %976 = arith.addf %975, %974 : vector<2x24xf32>
    %977 = arith.divf %975, %976 : vector<2x24xf32>
    %978 = vector.extract_strided_slice %971 {offsets = [0, 24], sizes = [2, 8], strides = [1, 1]} : vector<2x32xf32> to vector<2x8xf32>
    %979 = math.tanh %978 : vector<2x8xf32>
    %980 = vector.extract_strided_slice %977 {offsets = [0, 8], sizes = [2, 8], strides = [1, 1]} : vector<2x24xf32> to vector<2x8xf32>
    %981 = arith.mulf %980, %968 : vector<2x8xf32>
    %982 = vector.extract_strided_slice %977 {offsets = [0, 0], sizes = [2, 8], strides = [1, 1]} : vector<2x24xf32> to vector<2x8xf32>
    %983 = arith.mulf %982, %979 : vector<2x8xf32>
    %984 = arith.addf %981, %983 : vector<2x8xf32>
    %985 = vector.extract_strided_slice %977 {offsets = [0, 16], sizes = [2, 8], strides = [1, 1]} : vector<2x24xf32> to vector<2x8xf32>
    %986 = math.tanh %984 : vector<2x8xf32>
    %987 = arith.mulf %985, %986 : vector<2x8xf32>
    %988 = vector.shape_cast %2 : vector<2x1xi1> to vector<2x1xi1>
    %989 = vector.broadcast %988 : vector<2x1xi1> to vector<2x8xi1>
    %990 = arith.select %989, %984, %968 : vector<2x8xi1>, vector<2x8xf32>
    %991 = vector.shape_cast %2 : vector<2x1xi1> to vector<2x1xi1>
    %992 = vector.broadcast %991 : vector<2x1xi1> to vector<2x8xi1>
    %993 = arith.select %992, %987, %967 : vector<2x8xi1>, vector<2x8xf32>
    %cst_182 = arith.constant 0.000000e+00 : f32
    %994 = vector.shape_cast %2 : vector<2x1xi1> to vector<2x1xi1>
    %995 = vector.broadcast %994 : vector<2x1xi1> to vector<2x8xi1>
    %996 = vector.broadcast %cst_182 : f32 to vector<2x8xf32>
    %997 = arith.select %995, %987, %996 : vector<2x8xi1>, vector<2x8xf32>
    %998 = vector.extract_strided_slice %966 {offsets = [2, 0], sizes = [2, 32], strides = [1, 1]} : vector<16x32xf32> to vector<2x32xf32>
    %cst_183 = arith.constant dense<0.000000e+00> : vector<2x32xf32>
    %999 = tpu.matmul %993, %962, %cst_183 {dimension_numbers = #tpu.dot_dimension_numbers<[1], [0], [0], [1], [0, 0, 1, 1], [], []>} : vector<2x8xf32>, vector<8x32xf32>, vector<2x32xf32> -> vector<2x32xf32>
    %1000 = arith.addf %998, %999 : vector<2x32xf32>
    %1001 = vector.extract_strided_slice %1000 {offsets = [0, 0], sizes = [2, 24], strides = [1, 1]} : vector<2x32xf32> to vector<2x24xf32>
    %1002 = arith.negf %1001 : vector<2x24xf32>
    %1003 = math.exp %1002 : vector<2x24xf32>
    %cst_184 = arith.constant 1.000000e+00 : f32
    %1004 = vector.broadcast %cst_184 : f32 to vector<2x24xf32>
    %1005 = arith.addf %1004, %1003 : vector<2x24xf32>
    %1006 = arith.divf %1004, %1005 : vector<2x24xf32>
    %1007 = vector.extract_strided_slice %1000 {offsets = [0, 24], sizes = [2, 8], strides = [1, 1]} : vector<2x32xf32> to vector<2x8xf32>
    %1008 = math.tanh %1007 : vector<2x8xf32>
    %1009 = vector.extract_strided_slice %1006 {offsets = [0, 8], sizes = [2, 8], strides = [1, 1]} : vector<2x24xf32> to vector<2x8xf32>
    %1010 = arith.mulf %1009, %990 : vector<2x8xf32>
    %1011 = vector.extract_strided_slice %1006 {offsets = [0, 0], sizes = [2, 8], strides = [1, 1]} : vector<2x24xf32> to vector<2x8xf32>
    %1012 = arith.mulf %1011, %1008 : vector<2x8xf32>
    %1013 = arith.addf %1010, %1012 : vector<2x8xf32>
    %1014 = vector.extract_strided_slice %1006 {offsets = [0, 16], sizes = [2, 8], strides = [1, 1]} : vector<2x24xf32> to vector<2x8xf32>
    %1015 = math.tanh %1013 : vector<2x8xf32>
    %1016 = arith.mulf %1014, %1015 : vector<2x8xf32>
    %1017 = vector.shape_cast %4 : vector<2x1xi1> to vector<2x1xi1>
    %1018 = vector.broadcast %1017 : vector<2x1xi1> to vector<2x8xi1>
    %1019 = arith.select %1018, %1013, %990 : vector<2x8xi1>, vector<2x8xf32>
    %1020 = vector.shape_cast %4 : vector<2x1xi1> to vector<2x1xi1>
    %1021 = vector.broadcast %1020 : vector<2x1xi1> to vector<2x8xi1>
    %1022 = arith.select %1021, %1016, %993 : vector<2x8xi1>, vector<2x8xf32>
    %cst_185 = arith.constant 0.000000e+00 : f32
    %1023 = vector.shape_cast %4 : vector<2x1xi1> to vector<2x1xi1>
    %1024 = vector.broadcast %1023 : vector<2x1xi1> to vector<2x8xi1>
    %1025 = vector.broadcast %cst_185 : f32 to vector<2x8xf32>
    %1026 = arith.select %1024, %1016, %1025 : vector<2x8xi1>, vector<2x8xf32>
    %1027 = vector.extract_strided_slice %966 {offsets = [4, 0], sizes = [2, 32], strides = [1, 1]} : vector<16x32xf32> to vector<2x32xf32>
    %cst_186 = arith.constant dense<0.000000e+00> : vector<2x32xf32>
    %1028 = tpu.matmul %1022, %962, %cst_186 {dimension_numbers = #tpu.dot_dimension_numbers<[1], [0], [0], [1], [0, 0, 1, 1], [], []>} : vector<2x8xf32>, vector<8x32xf32>, vector<2x32xf32> -> vector<2x32xf32>
    %1029 = arith.addf %1027, %1028 : vector<2x32xf32>
    %1030 = vector.extract_strided_slice %1029 {offsets = [0, 0], sizes = [2, 24], strides = [1, 1]} : vector<2x32xf32> to vector<2x24xf32>
    %1031 = arith.negf %1030 : vector<2x24xf32>
    %1032 = math.exp %1031 : vector<2x24xf32>
    %cst_187 = arith.constant 1.000000e+00 : f32
    %1033 = vector.broadcast %cst_187 : f32 to vector<2x24xf32>
    %1034 = arith.addf %1033, %1032 : vector<2x24xf32>
    %1035 = arith.divf %1033, %1034 : vector<2x24xf32>
    %1036 = vector.extract_strided_slice %1029 {offsets = [0, 24], sizes = [2, 8], strides = [1, 1]} : vector<2x32xf32> to vector<2x8xf32>
    %1037 = math.tanh %1036 : vector<2x8xf32>
    %1038 = vector.extract_strided_slice %1035 {offsets = [0, 8], sizes = [2, 8], strides = [1, 1]} : vector<2x24xf32> to vector<2x8xf32>
    %1039 = arith.mulf %1038, %1019 : vector<2x8xf32>
    %1040 = vector.extract_strided_slice %1035 {offsets = [0, 0], sizes = [2, 8], strides = [1, 1]} : vector<2x24xf32> to vector<2x8xf32>
    %1041 = arith.mulf %1040, %1037 : vector<2x8xf32>
    %1042 = arith.addf %1039, %1041 : vector<2x8xf32>
    %1043 = vector.extract_strided_slice %1035 {offsets = [0, 16], sizes = [2, 8], strides = [1, 1]} : vector<2x24xf32> to vector<2x8xf32>
    %1044 = math.tanh %1042 : vector<2x8xf32>
    %1045 = arith.mulf %1043, %1044 : vector<2x8xf32>
    %1046 = vector.shape_cast %6 : vector<2x1xi1> to vector<2x1xi1>
    %1047 = vector.broadcast %1046 : vector<2x1xi1> to vector<2x8xi1>
    %1048 = arith.select %1047, %1042, %1019 : vector<2x8xi1>, vector<2x8xf32>
    %1049 = vector.shape_cast %6 : vector<2x1xi1> to vector<2x1xi1>
    %1050 = vector.broadcast %1049 : vector<2x1xi1> to vector<2x8xi1>
    %1051 = arith.select %1050, %1045, %1022 : vector<2x8xi1>, vector<2x8xf32>
    %cst_188 = arith.constant 0.000000e+00 : f32
    %1052 = vector.shape_cast %6 : vector<2x1xi1> to vector<2x1xi1>
    %1053 = vector.broadcast %1052 : vector<2x1xi1> to vector<2x8xi1>
    %1054 = vector.broadcast %cst_188 : f32 to vector<2x8xf32>
    %1055 = arith.select %1053, %1045, %1054 : vector<2x8xi1>, vector<2x8xf32>
    %1056 = vector.extract_strided_slice %966 {offsets = [6, 0], sizes = [2, 32], strides = [1, 1]} : vector<16x32xf32> to vector<2x32xf32>
    %cst_189 = arith.constant dense<0.000000e+00> : vector<2x32xf32>
    %1057 = tpu.matmul %1051, %962, %cst_189 {dimension_numbers = #tpu.dot_dimension_numbers<[1], [0], [0], [1], [0, 0, 1, 1], [], []>} : vector<2x8xf32>, vector<8x32xf32>, vector<2x32xf32> -> vector<2x32xf32>
    %1058 = arith.addf %1056, %1057 : vector<2x32xf32>
    %1059 = vector.extract_strided_slice %1058 {offsets = [0, 0], sizes = [2, 24], strides = [1, 1]} : vector<2x32xf32> to vector<2x24xf32>
    %1060 = arith.negf %1059 : vector<2x24xf32>
    %1061 = math.exp %1060 : vector<2x24xf32>
    %cst_190 = arith.constant 1.000000e+00 : f32
    %1062 = vector.broadcast %cst_190 : f32 to vector<2x24xf32>
    %1063 = arith.addf %1062, %1061 : vector<2x24xf32>
    %1064 = arith.divf %1062, %1063 : vector<2x24xf32>
    %1065 = vector.extract_strided_slice %1058 {offsets = [0, 24], sizes = [2, 8], strides = [1, 1]} : vector<2x32xf32> to vector<2x8xf32>
    %1066 = math.tanh %1065 : vector<2x8xf32>
    %1067 = vector.extract_strided_slice %1064 {offsets = [0, 8], sizes = [2, 8], strides = [1, 1]} : vector<2x24xf32> to vector<2x8xf32>
    %1068 = arith.mulf %1067, %1048 : vector<2x8xf32>
    %1069 = vector.extract_strided_slice %1064 {offsets = [0, 0], sizes = [2, 8], strides = [1, 1]} : vector<2x24xf32> to vector<2x8xf32>
    %1070 = arith.mulf %1069, %1066 : vector<2x8xf32>
    %1071 = arith.addf %1068, %1070 : vector<2x8xf32>
    %1072 = vector.extract_strided_slice %1064 {offsets = [0, 16], sizes = [2, 8], strides = [1, 1]} : vector<2x24xf32> to vector<2x8xf32>
    %1073 = math.tanh %1071 : vector<2x8xf32>
    %1074 = arith.mulf %1072, %1073 : vector<2x8xf32>
    %1075 = vector.shape_cast %8 : vector<2x1xi1> to vector<2x1xi1>
    %1076 = vector.broadcast %1075 : vector<2x1xi1> to vector<2x8xi1>
    %1077 = arith.select %1076, %1071, %1048 : vector<2x8xi1>, vector<2x8xf32>
    %1078 = vector.shape_cast %8 : vector<2x1xi1> to vector<2x1xi1>
    %1079 = vector.broadcast %1078 : vector<2x1xi1> to vector<2x8xi1>
    %1080 = arith.select %1079, %1074, %1051 : vector<2x8xi1>, vector<2x8xf32>
    %cst_191 = arith.constant 0.000000e+00 : f32
    %1081 = vector.shape_cast %8 : vector<2x1xi1> to vector<2x1xi1>
    %1082 = vector.broadcast %1081 : vector<2x1xi1> to vector<2x8xi1>
    %1083 = vector.broadcast %cst_191 : f32 to vector<2x8xf32>
    %1084 = arith.select %1082, %1074, %1083 : vector<2x8xi1>, vector<2x8xf32>
    %1085 = vector.extract_strided_slice %966 {offsets = [8, 0], sizes = [2, 32], strides = [1, 1]} : vector<16x32xf32> to vector<2x32xf32>
    %cst_192 = arith.constant dense<0.000000e+00> : vector<2x32xf32>
    %1086 = tpu.matmul %1080, %962, %cst_192 {dimension_numbers = #tpu.dot_dimension_numbers<[1], [0], [0], [1], [0, 0, 1, 1], [], []>} : vector<2x8xf32>, vector<8x32xf32>, vector<2x32xf32> -> vector<2x32xf32>
    %1087 = arith.addf %1085, %1086 : vector<2x32xf32>
    %1088 = vector.extract_strided_slice %1087 {offsets = [0, 0], sizes = [2, 24], strides = [1, 1]} : vector<2x32xf32> to vector<2x24xf32>
    %1089 = arith.negf %1088 : vector<2x24xf32>
    %1090 = math.exp %1089 : vector<2x24xf32>
    %cst_193 = arith.constant 1.000000e+00 : f32
    %1091 = vector.broadcast %cst_193 : f32 to vector<2x24xf32>
    %1092 = arith.addf %1091, %1090 : vector<2x24xf32>
    %1093 = arith.divf %1091, %1092 : vector<2x24xf32>
    %1094 = vector.extract_strided_slice %1087 {offsets = [0, 24], sizes = [2, 8], strides = [1, 1]} : vector<2x32xf32> to vector<2x8xf32>
    %1095 = math.tanh %1094 : vector<2x8xf32>
    %1096 = vector.extract_strided_slice %1093 {offsets = [0, 8], sizes = [2, 8], strides = [1, 1]} : vector<2x24xf32> to vector<2x8xf32>
    %1097 = arith.mulf %1096, %1077 : vector<2x8xf32>
    %1098 = vector.extract_strided_slice %1093 {offsets = [0, 0], sizes = [2, 8], strides = [1, 1]} : vector<2x24xf32> to vector<2x8xf32>
    %1099 = arith.mulf %1098, %1095 : vector<2x8xf32>
    %1100 = arith.addf %1097, %1099 : vector<2x8xf32>
    %1101 = vector.extract_strided_slice %1093 {offsets = [0, 16], sizes = [2, 8], strides = [1, 1]} : vector<2x24xf32> to vector<2x8xf32>
    %1102 = math.tanh %1100 : vector<2x8xf32>
    %1103 = arith.mulf %1101, %1102 : vector<2x8xf32>
    %1104 = vector.shape_cast %10 : vector<2x1xi1> to vector<2x1xi1>
    %1105 = vector.broadcast %1104 : vector<2x1xi1> to vector<2x8xi1>
    %1106 = arith.select %1105, %1100, %1077 : vector<2x8xi1>, vector<2x8xf32>
    %1107 = vector.shape_cast %10 : vector<2x1xi1> to vector<2x1xi1>
    %1108 = vector.broadcast %1107 : vector<2x1xi1> to vector<2x8xi1>
    %1109 = arith.select %1108, %1103, %1080 : vector<2x8xi1>, vector<2x8xf32>
    %cst_194 = arith.constant 0.000000e+00 : f32
    %1110 = vector.shape_cast %10 : vector<2x1xi1> to vector<2x1xi1>
    %1111 = vector.broadcast %1110 : vector<2x1xi1> to vector<2x8xi1>
    %1112 = vector.broadcast %cst_194 : f32 to vector<2x8xf32>
    %1113 = arith.select %1111, %1103, %1112 : vector<2x8xi1>, vector<2x8xf32>
    %1114 = vector.extract_strided_slice %966 {offsets = [10, 0], sizes = [2, 32], strides = [1, 1]} : vector<16x32xf32> to vector<2x32xf32>
    %cst_195 = arith.constant dense<0.000000e+00> : vector<2x32xf32>
    %1115 = tpu.matmul %1109, %962, %cst_195 {dimension_numbers = #tpu.dot_dimension_numbers<[1], [0], [0], [1], [0, 0, 1, 1], [], []>} : vector<2x8xf32>, vector<8x32xf32>, vector<2x32xf32> -> vector<2x32xf32>
    %1116 = arith.addf %1114, %1115 : vector<2x32xf32>
    %1117 = vector.extract_strided_slice %1116 {offsets = [0, 0], sizes = [2, 24], strides = [1, 1]} : vector<2x32xf32> to vector<2x24xf32>
    %1118 = arith.negf %1117 : vector<2x24xf32>
    %1119 = math.exp %1118 : vector<2x24xf32>
    %cst_196 = arith.constant 1.000000e+00 : f32
    %1120 = vector.broadcast %cst_196 : f32 to vector<2x24xf32>
    %1121 = arith.addf %1120, %1119 : vector<2x24xf32>
    %1122 = arith.divf %1120, %1121 : vector<2x24xf32>
    %1123 = vector.extract_strided_slice %1116 {offsets = [0, 24], sizes = [2, 8], strides = [1, 1]} : vector<2x32xf32> to vector<2x8xf32>
    %1124 = math.tanh %1123 : vector<2x8xf32>
    %1125 = vector.extract_strided_slice %1122 {offsets = [0, 8], sizes = [2, 8], strides = [1, 1]} : vector<2x24xf32> to vector<2x8xf32>
    %1126 = arith.mulf %1125, %1106 : vector<2x8xf32>
    %1127 = vector.extract_strided_slice %1122 {offsets = [0, 0], sizes = [2, 8], strides = [1, 1]} : vector<2x24xf32> to vector<2x8xf32>
    %1128 = arith.mulf %1127, %1124 : vector<2x8xf32>
    %1129 = arith.addf %1126, %1128 : vector<2x8xf32>
    %1130 = vector.extract_strided_slice %1122 {offsets = [0, 16], sizes = [2, 8], strides = [1, 1]} : vector<2x24xf32> to vector<2x8xf32>
    %1131 = math.tanh %1129 : vector<2x8xf32>
    %1132 = arith.mulf %1130, %1131 : vector<2x8xf32>
    %1133 = vector.shape_cast %12 : vector<2x1xi1> to vector<2x1xi1>
    %1134 = vector.broadcast %1133 : vector<2x1xi1> to vector<2x8xi1>
    %1135 = arith.select %1134, %1129, %1106 : vector<2x8xi1>, vector<2x8xf32>
    %1136 = vector.shape_cast %12 : vector<2x1xi1> to vector<2x1xi1>
    %1137 = vector.broadcast %1136 : vector<2x1xi1> to vector<2x8xi1>
    %1138 = arith.select %1137, %1132, %1109 : vector<2x8xi1>, vector<2x8xf32>
    %cst_197 = arith.constant 0.000000e+00 : f32
    %1139 = vector.shape_cast %12 : vector<2x1xi1> to vector<2x1xi1>
    %1140 = vector.broadcast %1139 : vector<2x1xi1> to vector<2x8xi1>
    %1141 = vector.broadcast %cst_197 : f32 to vector<2x8xf32>
    %1142 = arith.select %1140, %1132, %1141 : vector<2x8xi1>, vector<2x8xf32>
    %1143 = vector.extract_strided_slice %966 {offsets = [12, 0], sizes = [2, 32], strides = [1, 1]} : vector<16x32xf32> to vector<2x32xf32>
    %cst_198 = arith.constant dense<0.000000e+00> : vector<2x32xf32>
    %1144 = tpu.matmul %1138, %962, %cst_198 {dimension_numbers = #tpu.dot_dimension_numbers<[1], [0], [0], [1], [0, 0, 1, 1], [], []>} : vector<2x8xf32>, vector<8x32xf32>, vector<2x32xf32> -> vector<2x32xf32>
    %1145 = arith.addf %1143, %1144 : vector<2x32xf32>
    %1146 = vector.extract_strided_slice %1145 {offsets = [0, 0], sizes = [2, 24], strides = [1, 1]} : vector<2x32xf32> to vector<2x24xf32>
    %1147 = arith.negf %1146 : vector<2x24xf32>
    %1148 = math.exp %1147 : vector<2x24xf32>
    %cst_199 = arith.constant 1.000000e+00 : f32
    %1149 = vector.broadcast %cst_199 : f32 to vector<2x24xf32>
    %1150 = arith.addf %1149, %1148 : vector<2x24xf32>
    %1151 = arith.divf %1149, %1150 : vector<2x24xf32>
    %1152 = vector.extract_strided_slice %1145 {offsets = [0, 24], sizes = [2, 8], strides = [1, 1]} : vector<2x32xf32> to vector<2x8xf32>
    %1153 = math.tanh %1152 : vector<2x8xf32>
    %1154 = vector.extract_strided_slice %1151 {offsets = [0, 8], sizes = [2, 8], strides = [1, 1]} : vector<2x24xf32> to vector<2x8xf32>
    %1155 = arith.mulf %1154, %1135 : vector<2x8xf32>
    %1156 = vector.extract_strided_slice %1151 {offsets = [0, 0], sizes = [2, 8], strides = [1, 1]} : vector<2x24xf32> to vector<2x8xf32>
    %1157 = arith.mulf %1156, %1153 : vector<2x8xf32>
    %1158 = arith.addf %1155, %1157 : vector<2x8xf32>
    %1159 = vector.extract_strided_slice %1151 {offsets = [0, 16], sizes = [2, 8], strides = [1, 1]} : vector<2x24xf32> to vector<2x8xf32>
    %1160 = math.tanh %1158 : vector<2x8xf32>
    %1161 = arith.mulf %1159, %1160 : vector<2x8xf32>
    %1162 = vector.shape_cast %14 : vector<2x1xi1> to vector<2x1xi1>
    %1163 = vector.broadcast %1162 : vector<2x1xi1> to vector<2x8xi1>
    %1164 = arith.select %1163, %1158, %1135 : vector<2x8xi1>, vector<2x8xf32>
    %1165 = vector.shape_cast %14 : vector<2x1xi1> to vector<2x1xi1>
    %1166 = vector.broadcast %1165 : vector<2x1xi1> to vector<2x8xi1>
    %1167 = arith.select %1166, %1161, %1138 : vector<2x8xi1>, vector<2x8xf32>
    %cst_200 = arith.constant 0.000000e+00 : f32
    %1168 = vector.shape_cast %14 : vector<2x1xi1> to vector<2x1xi1>
    %1169 = vector.broadcast %1168 : vector<2x1xi1> to vector<2x8xi1>
    %1170 = vector.broadcast %cst_200 : f32 to vector<2x8xf32>
    %1171 = arith.select %1169, %1161, %1170 : vector<2x8xi1>, vector<2x8xf32>
    %1172 = vector.extract_strided_slice %966 {offsets = [14, 0], sizes = [2, 32], strides = [1, 1]} : vector<16x32xf32> to vector<2x32xf32>
    %cst_201 = arith.constant dense<0.000000e+00> : vector<2x32xf32>
    %1173 = tpu.matmul %1167, %962, %cst_201 {dimension_numbers = #tpu.dot_dimension_numbers<[1], [0], [0], [1], [0, 0, 1, 1], [], []>} : vector<2x8xf32>, vector<8x32xf32>, vector<2x32xf32> -> vector<2x32xf32>
    %1174 = arith.addf %1172, %1173 : vector<2x32xf32>
    %1175 = vector.extract_strided_slice %1174 {offsets = [0, 0], sizes = [2, 24], strides = [1, 1]} : vector<2x32xf32> to vector<2x24xf32>
    %1176 = arith.negf %1175 : vector<2x24xf32>
    %1177 = math.exp %1176 : vector<2x24xf32>
    %cst_202 = arith.constant 1.000000e+00 : f32
    %1178 = vector.broadcast %cst_202 : f32 to vector<2x24xf32>
    %1179 = arith.addf %1178, %1177 : vector<2x24xf32>
    %1180 = arith.divf %1178, %1179 : vector<2x24xf32>
    %1181 = vector.extract_strided_slice %1174 {offsets = [0, 24], sizes = [2, 8], strides = [1, 1]} : vector<2x32xf32> to vector<2x8xf32>
    %1182 = math.tanh %1181 : vector<2x8xf32>
    %1183 = vector.extract_strided_slice %1180 {offsets = [0, 8], sizes = [2, 8], strides = [1, 1]} : vector<2x24xf32> to vector<2x8xf32>
    %1184 = arith.mulf %1183, %1164 : vector<2x8xf32>
    %1185 = vector.extract_strided_slice %1180 {offsets = [0, 0], sizes = [2, 8], strides = [1, 1]} : vector<2x24xf32> to vector<2x8xf32>
    %1186 = arith.mulf %1185, %1182 : vector<2x8xf32>
    %1187 = arith.addf %1184, %1186 : vector<2x8xf32>
    %1188 = vector.extract_strided_slice %1180 {offsets = [0, 16], sizes = [2, 8], strides = [1, 1]} : vector<2x24xf32> to vector<2x8xf32>
    %1189 = math.tanh %1187 : vector<2x8xf32>
    %1190 = arith.mulf %1188, %1189 : vector<2x8xf32>
    %cst_203 = arith.constant 0.000000e+00 : f32
    %1191 = vector.shape_cast %16 : vector<2x1xi1> to vector<2x1xi1>
    %1192 = vector.broadcast %1191 : vector<2x1xi1> to vector<2x8xi1>
    %1193 = vector.broadcast %cst_203 : f32 to vector<2x8xf32>
    %1194 = arith.select %1192, %1190, %1193 : vector<2x8xi1>, vector<2x8xf32>
    %1195 = tpu.concatenate %997, %1026, %1055, %1084, %1113, %1142, %1171, %1194 in 0 : vector<2x8xf32>, vector<2x8xf32>, vector<2x8xf32>, vector<2x8xf32>, vector<2x8xf32>, vector<2x8xf32>, vector<2x8xf32>, vector<2x8xf32> -> vector<16x8xf32>
    %c0_204 = arith.constant 0 : index
    %c0_205 = arith.constant 0 : index
    %1196 = vector.load %arg15[%c0_204, %c0_205] : memref<8x8xf32, #tpu.memory_space<vmem>>, vector<8x8xf32>
    %cst_206 = arith.constant dense<0.000000e+00> : vector<16x8xf32>
    %1197 = tpu.matmul %1195, %1196, %cst_206 {dimension_numbers = #tpu.dot_dimension_numbers<[1], [0], [0], [1], [0, 0, 1, 1], [], []>} : vector<16x8xf32>, vector<8x8xf32>, vector<16x8xf32> -> vector<16x8xf32>
    %c0_207 = arith.constant 0 : index
    %c0_208 = arith.constant 0 : index
    %1198 = vector.load %arg16[%c0_207, %c0_208] : memref<1x8xf32, #tpu.memory_space<vmem>>, vector<1x8xf32>
    %1199 = vector.broadcast %1198 : vector<1x8xf32> to vector<16x8xf32>
    %1200 = arith.addf %1197, %1199 : vector<16x8xf32>
    %1201 = arith.negf %1200 : vector<16x8xf32>
    %1202 = math.exp %1201 : vector<16x8xf32>
    %cst_209 = arith.constant 1.000000e+00 : f32
    %1203 = vector.broadcast %cst_209 : f32 to vector<16x8xf32>
    %1204 = arith.addf %1203, %1202 : vector<16x8xf32>
    %1205 = arith.divf %1203, %1204 : vector<16x8xf32>
    %c0_210 = arith.constant 0 : index
    %c0_211 = arith.constant 0 : index
    %1206 = vector.load %arg17[%c0_210, %c0_211] : memref<16x8xf32, #tpu.memory_space<vmem>>, vector<16x8xf32>
    tpu.vector_store %arg17[%c0_210, %c0_211], %1205 {strides = array<i32>} : memref<16x8xf32, #tpu.memory_space<vmem>>, vector<16x8xf32>,
    return
  }
  func.func @transform_0(%arg0: i32) -> (i32, i32) {
    %c0_i32 = arith.constant 0 : i32
    %c0_i32_0 = arith.constant 0 : i32
    %c0_i32_1 = arith.constant 0 : i32
    return %c0_i32, %c0_i32_0 : i32, i32
  }
  func.func @transform_1(%arg0: i32) -> (i32, i32) {
    %c0_i32 = arith.constant 0 : i32
    %c0_i32_0 = arith.constant 0 : i32
    %c0_i32_1 = arith.constant 0 : i32
    return %c0_i32, %c0_i32_0 : i32, i32
  }
  func.func @transform_2(%arg0: i32) -> (i32, i32) {
    %c0_i32 = arith.constant 0 : i32
    %c0_i32_0 = arith.constant 0 : i32
    %c0_i32_1 = arith.constant 0 : i32
    return %c0_i32, %c0_i32_0 : i32, i32
  }
  func.func @transform_3(%arg0: i32) -> (i32, i32) {
    %c0_i32 = arith.constant 0 : i32
    %c0_i32_0 = arith.constant 0 : i32
    %c0_i32_1 = arith.constant 0 : i32
    return %c0_i32, %c0_i32_0 : i32, i32
  }
  func.func @transform_4(%arg0: i32) -> (i32, i32) {
    %c0_i32 = arith.constant 0 : i32
    %c0_i32_0 = arith.constant 0 : i32
    %c0_i32_1 = arith.constant 0 : i32
    return %c0_i32, %c0_i32_0 : i32, i32
  }
  func.func @transform_5(%arg0: i32) -> (i32, i32) {
    %c0_i32 = arith.constant 0 : i32
    %c0_i32_0 = arith.constant 0 : i32
    %c0_i32_1 = arith.constant 0 : i32
    return %c0_i32, %c0_i32_0 : i32, i32
  }
  func.func @transform_6(%arg0: i32) -> (i32, i32) {
    %c0_i32 = arith.constant 0 : i32
    %c0_i32_0 = arith.constant 0 : i32
    %c0_i32_1 = arith.constant 0 : i32
    return %c0_i32, %c0_i32_0 : i32, i32
  }
  func.func @transform_7(%arg0: i32) -> (i32, i32) {
    %c0_i32 = arith.constant 0 : i32
    %c0_i32_0 = arith.constant 0 : i32
    %c0_i32_1 = arith.constant 0 : i32
    return %c0_i32, %c0_i32_0 : i32, i32
  }
  func.func @transform_8(%arg0: i32) -> (i32, i32) {
    %c0_i32 = arith.constant 0 : i32
    %c0_i32_0 = arith.constant 0 : i32
    %c0_i32_1 = arith.constant 0 : i32
    return %c0_i32, %c0_i32_0 : i32, i32
  }
  func.func @transform_9(%arg0: i32) -> (i32, i32) {
    %c0_i32 = arith.constant 0 : i32
    %c0_i32_0 = arith.constant 0 : i32
    %c0_i32_1 = arith.constant 0 : i32
    return %c0_i32, %c0_i32_0 : i32, i32
  }
  func.func @transform_10(%arg0: i32) -> (i32, i32) {
    %c0_i32 = arith.constant 0 : i32
    %c0_i32_0 = arith.constant 0 : i32
    %c0_i32_1 = arith.constant 0 : i32
    return %c0_i32, %c0_i32_0 : i32, i32
  }
  func.func @transform_11(%arg0: i32) -> (i32, i32) {
    %c0_i32 = arith.constant 0 : i32
    %c0_i32_0 = arith.constant 0 : i32
    %c0_i32_1 = arith.constant 0 : i32
    return %c0_i32, %c0_i32_0 : i32, i32
  }
  func.func @transform_12(%arg0: i32) -> (i32, i32) {
    %c0_i32 = arith.constant 0 : i32
    %c0_i32_0 = arith.constant 0 : i32
    %c0_i32_1 = arith.constant 0 : i32
    return %c0_i32, %c0_i32_0 : i32, i32
  }
  func.func @transform_13(%arg0: i32) -> (i32, i32) {
    %c0_i32 = arith.constant 0 : i32
    %c0_i32_0 = arith.constant 0 : i32
    %c0_i32_1 = arith.constant 0 : i32
    return %c0_i32, %c0_i32_0 : i32, i32
  }
  func.func @transform_14(%arg0: i32) -> (i32, i32) {
    %c0_i32 = arith.constant 0 : i32
    %c0_i32_0 = arith.constant 0 : i32
    %c0_i32_1 = arith.constant 0 : i32
    return %c0_i32, %c0_i32_0 : i32, i32
  }
  func.func @transform_15(%arg0: i32) -> (i32, i32) {
    %c0_i32 = arith.constant 0 : i32
    %c0_i32_0 = arith.constant 0 : i32
    %c0_i32_1 = arith.constant 0 : i32
    return %c0_i32, %c0_i32_0 : i32, i32
  }
  func.func @transform_16(%arg0: i32) -> (i32, i32) {
    %c0_i32 = arith.constant 0 : i32
    %c0_i32_0 = arith.constant 0 : i32
    %c0_i32_1 = arith.constant 0 : i32
    return %c0_i32, %c0_i32_0 : i32, i32
  }
}

</mosaic_0001>

<llo_original>
// kernel: deep_classifier_forward.1
$region0: #{deep_classifier_forward.1}
  #allocation0 [shape = 'u32[]', space=smem, size = 0x4, offset = 0x4, fixed_abs, tag = 'smem constant byte address 0x4 - core index']
  #allocation1 [shape = 'u32[72,128]{1,0:T(1,128)}', space=vmem, size = 0x9000, scoped, tag = 'internal scratch']
  %s0 = inlined_call_operand.vmem [shape: f32[16,16], index: 0, kind: input, shape index: {}]
  %s1 = inlined_call_operand.vmem [shape: s32[2,1], index: 1, kind: input, shape index: {}]
  %s2 = inlined_call_operand.vmem [shape: f32[16,256], index: 2, kind: input, shape index: {}]
  %s3 = inlined_call_operand.hbm [shape: f32[64,256], index: 3, kind: input, shape index: {}]
  %s4 = inlined_call_operand.vmem [shape: f32[1,256], index: 4, kind: input, shape index: {}]
  %s5 = inlined_call_operand.hbm [shape: f32[64,256], index: 5, kind: input, shape index: {}]
  %s6 = inlined_call_operand.hbm [shape: f32[64,256], index: 6, kind: input, shape index: {}]
  %s7 = inlined_call_operand.vmem [shape: f32[1,256], index: 7, kind: input, shape index: {}]
  %s8 = inlined_call_operand.vmem [shape: f32[64,32], index: 8, kind: input, shape index: {}]
  %s9 = inlined_call_operand.vmem [shape: f32[8,32], index: 9, kind: input, shape index: {}]
  %s10 = inlined_call_operand.vmem [shape: f32[1,32], index: 10, kind: input, shape index: {}]
  %s11 = inlined_call_operand.vmem [shape: f32[8,32], index: 11, kind: input, shape index: {}]
  %s12 = inlined_call_operand.vmem [shape: f32[8,32], index: 12, kind: input, shape index: {}]
  %s13 = inlined_call_operand.vmem [shape: f32[1,32], index: 13, kind: input, shape index: {}]
  %s14 = inlined_call_operand.vmem [shape: f32[8,8], index: 14, kind: input, shape index: {}]
  %s15 = inlined_call_operand.vmem [shape: f32[1,8], index: 15, kind: input, shape index: {}]
  %s16 = inlined_call_operand.vmem [shape: f32[16,8], index: 16, kind: output, shape index: {}]
  %s17 = sld [smem:[#allocation0]]
  $region86: #{deep_classifier_forward.1} parent=0
    _
  %s19 = ssub.s32 1, %s17
  %s20 = scalar_select 0, %s19, %s17
  $region1: #{deep_classifier_forward.1} parent=0
    #allocation2 [shape = 'u8[65536]{0}', space=vmem, size = 0x10000, scoped, tag = 'input window, operand 3, single buffered']
    #allocation3 [shape = 's32[1]{0}', space=sflag, size = 0x4, scoped, tag = 'scoped memory for deep_classifier_forward.1']
    #allocation4 [shape = 'u8[65536]{0}', space=vmem, size = 0x10000, scoped, tag = 'input window, operand 5, single buffered']
    #allocation5 [shape = 's32[1]{0}', space=sflag, size = 0x4, scoped, tag = 'scoped memory for deep_classifier_forward.1']
    #allocation6 [shape = 'u8[65536]{0}', space=vmem, size = 0x10000, scoped, tag = 'input window, operand 6, single buffered']
    %21 = vsyncpa [#allocation3], 0
    %22 = vsyncpa [#allocation5], 0
    // Predicated region
    $region2: #{deep_classifier_forward.1} parent=1 // pred_check
      _
    $region3: #{deep_classifier_forward.1} parent=1 // pred_check_branch
      %24 = sbr.rel (0) target = $region5
    $region4: #{deep_classifier_forward.1} parent=1 // pred_region
      _
    $region5: #{deep_classifier_forward.1} parent=1 // pred_fallthru
      _
    // Predicated region
    $region6: #{deep_classifier_forward.1} parent=1 // pred_check
      _
    $region7: #{deep_classifier_forward.1} parent=1 // pred_check_branch
      %26 = sbr.rel (0) target = $region9
    $region8: #{deep_classifier_forward.1} parent=1 // pred_region
      _
    $region9: #{deep_classifier_forward.1} parent=1 // pred_fallthru
      _
    // Predicated region
    $region10: #{deep_classifier_forward.1} parent=1 // pred_check
      _
    $region11: #{deep_classifier_forward.1} parent=1 // pred_check_branch
      %28 = sbr.rel (0) target = $region13
    $region12: #{deep_classifier_forward.1} parent=1 // pred_region
      _
    $region13: #{deep_classifier_forward.1} parent=1 // pred_fallthru
      _
    // Predicated region
    $region14: #{deep_classifier_forward.1} parent=1 // pred_check
      _
    $region15: #{deep_classifier_forward.1} parent=1 // pred_check_branch
      %30 = sbr.rel (0) target = $region17
    $region16: #{deep_classifier_forward.1} parent=1 // pred_region
      %32 = vsyncadd [#allocation3], 0
      %s33 = sshll.u32 %s3, 4
      %s34 = int_to_ptr.hbm [resolvable:$true] %s33
      %s35 = sshll.u32 [#allocation2], 4
      %s36 = int_to_ptr.vmem [resolvable:$true] %s35
      %41 = dma.hbm_to_vmem [thread:$0]  %s34, 2048, %s36, [#allocation3], 256, 256, 16
    $region17: #{deep_classifier_forward.1} parent=1 // pred_fallthru
      _
    // Predicated region
    $region18: #{deep_classifier_forward.1} parent=1 // pred_check
      _
    $region19: #{deep_classifier_forward.1} parent=1 // pred_check_branch
      %43 = sbr.rel (0) target = $region21
    $region20: #{deep_classifier_forward.1} parent=1 // pred_region
      _
    $region21: #{deep_classifier_forward.1} parent=1 // pred_fallthru
      _
    // Predicated region
    $region22: #{deep_classifier_forward.1} parent=1 // pred_check
      _
    $region23: #{deep_classifier_forward.1} parent=1 // pred_check_branch
      %45 = sbr.rel (0) target = $region25
    $region24: #{deep_classifier_forward.1} parent=1 // pred_region
      %47 = vsyncadd [#allocation5], 0
      %s48 = sshll.u32 %s5, 4
      %s49 = int_to_ptr.hbm [resolvable:$true] %s48
      %s50 = sshll.u32 [#allocation4], 4
      %s51 = int_to_ptr.vmem [resolvable:$true] %s50
      %56 = dma.hbm_to_vmem [thread:$0]  %s49, 2048, %s51, [#allocation5], 256, 256, 16
    $region25: #{deep_classifier_forward.1} parent=1 // pred_fallthru
      _
    // Predicated region
    $region26: #{deep_classifier_forward.1} parent=1 // pred_check
      _
    $region27: #{deep_classifier_forward.1} parent=1 // pred_check_branch
      %58 = sbr.rel (0) target = $region29
    $region28: #{deep_classifier_forward.1} parent=1 // pred_region
      %60 = vsyncadd [#allocation5], 0
      %s61 = sshll.u32 %s6, 4
      %s62 = int_to_ptr.hbm [resolvable:$true] %s61
      %s63 = sshll.u32 [#allocation6], 4
      %s64 = int_to_ptr.vmem [resolvable:$true] %s63
      %69 = dma.hbm_to_vmem [thread:$0]  %s62, 2048, %s64, [#allocation5], 256, 256, 16
    $region29: #{deep_classifier_forward.1} parent=1 // pred_fallthru
      _
    // Predicated region
    $region30: #{deep_classifier_forward.1} parent=1 // pred_check
      _
    $region31: #{deep_classifier_forward.1} parent=1 // pred_check_branch
      %71 = sbr.rel (0) target = $region33
    $region32: #{deep_classifier_forward.1} parent=1 // pred_region
      _
    $region33: #{deep_classifier_forward.1} parent=1 // pred_fallthru
      _
    // Predicated region
    $region34: #{deep_classifier_forward.1} parent=1 // pred_check
      _
    $region35: #{deep_classifier_forward.1} parent=1 // pred_check_branch
      %73 = sbr.rel (0) target = $region37
    $region36: #{deep_classifier_forward.1} parent=1 // pred_region
      _
    $region37: #{deep_classifier_forward.1} parent=1 // pred_fallthru
      _
    // Predicated region
    $region38: #{deep_classifier_forward.1} parent=1 // pred_check
      _
    $region39: #{deep_classifier_forward.1} parent=1 // pred_check_branch
      %75 = sbr.rel (0) target = $region41
    $region40: #{deep_classifier_forward.1} parent=1 // pred_region
      _
    $region41: #{deep_classifier_forward.1} parent=1 // pred_fallthru
      _
    // Predicated region
    $region42: #{deep_classifier_forward.1} parent=1 // pred_check
      _
    $region43: #{deep_classifier_forward.1} parent=1 // pred_check_branch
      %77 = sbr.rel (0) target = $region45
    $region44: #{deep_classifier_forward.1} parent=1 // pred_region
      _
    $region45: #{deep_classifier_forward.1} parent=1 // pred_fallthru
      _
    // Predicated region
    $region46: #{deep_classifier_forward.1} parent=1 // pred_check
      _
    $region47: #{deep_classifier_forward.1} parent=1 // pred_check_branch
      %79 = sbr.rel (0) target = $region49
    $region48: #{deep_classifier_forward.1} parent=1 // pred_region
      _
    $region49: #{deep_classifier_forward.1} parent=1 // pred_fallthru
      _
    // Predicated region
    $region50: #{deep_classifier_forward.1} parent=1 // pred_check
      _
    $region51: #{deep_classifier_forward.1} parent=1 // pred_check_branch
      %81 = sbr.rel (0) target = $region53
    $region52: #{deep_classifier_forward.1} parent=1 // pred_region
      _
    $region53: #{deep_classifier_forward.1} parent=1 // pred_fallthru
      _
    // Predicated region
    $region54: #{deep_classifier_forward.1} parent=1 // pred_check
      _
    $region55: #{deep_classifier_forward.1} parent=1 // pred_check_branch
      %83 = sbr.rel (0) target = $region57
    $region56: #{deep_classifier_forward.1} parent=1 // pred_region
      _
    $region57: #{deep_classifier_forward.1} parent=1 // pred_fallthru
      _
    // Predicated region
    $region58: #{deep_classifier_forward.1} parent=1 // pred_check
      _
    $region59: #{deep_classifier_forward.1} parent=1 // pred_check_branch
      %85 = sbr.rel (0) target = $region61
    $region60: #{deep_classifier_forward.1} parent=1 // pred_region
      _
    $region61: #{deep_classifier_forward.1} parent=1 // pred_fallthru
      _
    // Predicated region
    $region62: #{deep_classifier_forward.1} parent=1 // pred_check
      _
    $region63: #{deep_classifier_forward.1} parent=1 // pred_check_branch
      %87 = sbr.rel (0) target = $region65
    $region64: #{deep_classifier_forward.1} parent=1 // pred_region
      _
    $region65: #{deep_classifier_forward.1} parent=1 // pred_fallthru
      _
    // Predicated region
    $region66: #{deep_classifier_forward.1} parent=1 // pred_check
      _
    $region67: #{deep_classifier_forward.1} parent=1 // pred_check_branch
      %89 = sbr.rel (0) target = $region69
    $region68: #{deep_classifier_forward.1} parent=1 // pred_region
      %91 = dma.done [#allocation3], 2048
    $region69: #{deep_classifier_forward.1} parent=1 // pred_fallthru
      _
    // Predicated region
    $region70: #{deep_classifier_forward.1} parent=1 // pred_check
      _
    $region71: #{deep_classifier_forward.1} parent=1 // pred_check_branch
      %93 = sbr.rel (0) target = $region73
    $region72: #{deep_classifier_forward.1} parent=1 // pred_region
      %95 = dma.done [#allocation5], 2048
    $region73: #{deep_classifier_forward.1} parent=1 // pred_fallthru
      _
    // Predicated region
    $region74: #{deep_classifier_forward.1} parent=1 // pred_check
      _
    $region75: #{deep_classifier_forward.1} parent=1 // pred_check_branch
      %97 = sbr.rel (0) target = $region77
    $region76: #{deep_classifier_forward.1} parent=1 // pred_region
      %99 = dma.done [#allocation5], 2048
    $region77: #{deep_classifier_forward.1} parent=1 // pred_fallthru
      _
    %v100 = vld [vmem:[%s1] sm:$0x3]
    %vm101 = vcmp.gt.s32.totalorder %v100, 0
    %vm102 = vcmp.gt.s32.totalorder %v100, 1
    %vm103 = vcmp.gt.s32.totalorder %v100, 2
    %vm104 = vcmp.gt.s32.totalorder %v100, 3
    %vm105 = vcmp.gt.s32.totalorder %v100, 4
    %vm106 = vcmp.gt.s32.totalorder %v100, 5
    %vm107 = vcmp.gt.s32.totalorder %v100, 6
    %vm108 = vcmp.gt.s32.totalorder %v100, 7
    %v109 = vlaneseq
    %v110 = vand.u32 %v109, 127
    %vm111 = vcmp.lt.s32.totalorder %v110, 48
    %v112 = vadd.s32 %v110, 128
    %vm113 = vcmp.lt.s32.totalorder %v110, 0
    %v114 = vsub.s32 0, %v110
    %v115 = vsel %vm113, %v114, %v110
    %v116 = vshrl.u32 %v115, 6
    %v117 = vand.u32 %v115, 63
    %v118 = vsub.s32 0, %v117
    %v119 = vsel %vm113, %v118, %v117
    %vm120 = vcmp.lt.s32.totalorder %v112, 0
    %v121 = vsub.s32 0, %v112
    %v122 = vsel %vm120, %v121, %v112
    %v123 = vshrl.u32 %v122, 6
    %v124 = vand.u32 %v122, 63
    %v125 = vsub.s32 0, %v124
    %v126 = vsel %vm120, %v125, %v124
    %vm127 = vcmp.ne.s32.totalorder %v119, 0
    %vm128 = vcmp.ne.s32.totalorder %v126, 0
    %vm129 = vcmp.lt.s32.totalorder %v119, 0
    %vm130 = vcmp.lt.s32.totalorder %v126, 0
    %vm131 = vmand %vm129, %vm127
    %vm132 = vmand %vm130, %vm128
    %v133 = vadd.s32 %v119, 64
    %v134 = vadd.s32 %v126, 64
    %v135 = vsel %vm131, %v133, %v119
    %v136 = vsel %vm132, %v134, %v126
    %vm137 = vcmp.lt.s32.totalorder %v135, 48
    %vm138 = vcmp.lt.s32.totalorder %v136, 48
    %v139 = vld [vmem:[%s0] sm:$0xff]
    %v140 = vld [vmem:[%s0 + $0x8] sm:$0xff]
    %v141 = vld [vmem:[%s2] sm:$0xff]
    %v142 = vld [vmem:[%s2 + $0x8] sm:$0xff]
    %v143 = vld [vmem:[%s2 + $0x10] sm:$0xff]
    %v144 = vld [vmem:[%s2 + $0x18] sm:$0xff]
    %v145 = vld [vmem:[#allocation2] sm:$0xff]
    %v146 = vld [vmem:[#allocation2 + $0x8] sm:$0xff]
    %v147 = vld [vmem:[#allocation2 + $0x10] sm:$0xff]
    %v148 = vld [vmem:[#allocation2 + $0x18] sm:$0xff]
    %v149 = vld [vmem:[#allocation2 + $0x20] sm:$0xff]
    %v150 = vld [vmem:[#allocation2 + $0x28] sm:$0xff]
    %v151 = vld [vmem:[#allocation2 + $0x30] sm:$0xff]
    %v152 = vld [vmem:[#allocation2 + $0x38] sm:$0xff]
    %v153 = vld [vmem:[#allocation2 + $0x40] sm:$0xff]
    %v154 = vld [vmem:[#allocation2 + $0x48] sm:$0xff]
    %v155 = vld [vmem:[#allocation2 + $0x50] sm:$0xff]
    %v156 = vld [vmem:[#allocation2 + $0x58] sm:$0xff]
    %v157 = vld [vmem:[#allocation2 + $0x60] sm:$0xff]
    %v158 = vld [vmem:[#allocation2 + $0x68] sm:$0xff]
    %v159 = vld [vmem:[#allocation2 + $0x70] sm:$0xff]
    %v160 = vld [vmem:[#allocation2 + $0x78] sm:$0xff]
    %v161 = vld [vmem:[%s4] sm:$0x3]
    %v163 = vperm.slane %v161, 0
    %v164 = vperm.slane %v161, 1
    %vm167 = vcmask 130048
    %v169 = vsel %vm167, %v139, 0
    %v172 = vsel %vm167, %v140, 0
    %174 = vmatpush.msra.mxu0 0.0
    %175 = vmatpush.msra.mxu0 0.0
    %176 = vmatpush.msra.mxu0 0.0
    %177 = vmatpush.msra.mxu0 0.0
    %178 = vmatpush.msra.mxu0 0.0
    %179 = vmatpush.msra.mxu0 0.0
    %180 = vmatpush.msra.mxu0 0.0
    %181 = vmatpush.msra.mxu0 0.0
    %182 = vmatpush.msra.mxu0 0.0
    %183 = vmatpush.msra.mxu0 0.0
    %184 = vmatpush.msra.mxu0 0.0
    %185 = vmatpush.msra.mxu0 0.0
    %186 = vmatpush.msra.mxu0 0.0
    %187 = vmatpush.msra.mxu0 0.0
    %188 = vmatpush.msra.mxu0 %v143
    %189 = vmatpush.msra.mxu0 %v141
    %190 = vmatmul.f32.gmra.mxu0 %v169
    %v191 = vpop.f32.mrf.mxu0
    %v192 = vadd.f32 %v163, %v191
    %193 = vmatmul.f32.gmra.mxu0 %v172
    %v194 = vpop.f32.mrf.mxu0
    %v195 = vadd.f32 %v163, %v194
    %196 = vdwg.mxu0
    %197 = vmatpush.msra.mxu0 0.0
    %198 = vmatpush.msra.mxu0 0.0
    %199 = vmatpush.msra.mxu0 0.0
    %200 = vmatpush.msra.mxu0 0.0
    %201 = vmatpush.msra.mxu0 0.0
    %202 = vmatpush.msra.mxu0 0.0
    %203 = vmatpush.msra.mxu0 0.0
    %204 = vmatpush.msra.mxu0 0.0
    %205 = vmatpush.msra.mxu0 0.0
    %206 = vmatpush.msra.mxu0 0.0
    %207 = vmatpush.msra.mxu0 0.0
    %208 = vmatpush.msra.mxu0 0.0
    %209 = vmatpush.msra.mxu0 0.0
    %210 = vmatpush.msra.mxu0 0.0
    %211 = vmatpush.msra.mxu0 %v144
    %212 = vmatpush.msra.mxu0 %v142
    %213 = vmatmul.f32.gmra.mxu0 %v169
    %v214 = vpop.f32.mrf.mxu0
    %v215 = vadd.f32 %v164, %v214
    %216 = vmatmul.f32.gmra.mxu0 %v172
    %v217 = vpop.f32.mrf.mxu0
    %v218 = vadd.f32 %v164, %v217
    %219 = vdwg.mxu0
    %v220 = vsel %vm137, 1, 0
    %v221 = vsel %vm138, 1, 0
    %vm222 = vcmp.eq.s32.totalorder %v220, 1
    %vm223 = vcmp.eq.s32.totalorder %v221, 1
    %v226 = vrot.slane %v195, 6
    %v227 = vrot.slane %v218, 6
    %v230 = vsel %vm222, %v192, %v226
    %v231 = vsel %vm223, %v215, %v227
    %vm232 = vcmask 523264
    %v234 = vsel %vm232, 0.0, 0
    %236 = vmatpush.msra.mxu0 0.0
    %237 = vmatpush.msra.mxu0 0.0
    %238 = vmatpush.msra.mxu0 0.0
    %239 = vmatpush.msra.mxu0 0.0
    %240 = vmatpush.msra.mxu0 0.0
    %241 = vmatpush.msra.mxu0 0.0
    %242 = vmatpush.msra.mxu0 0.0
    %243 = vmatpush.msra.mxu0 0.0
    %244 = vmatpush.msra.mxu0 %v159
    %245 = vmatpush.msra.mxu0 %v157
    %246 = vmatpush.msra.mxu0 %v155
    %247 = vmatpush.msra.mxu0 %v153
    %248 = vmatpush.msra.mxu0 %v151
    %249 = vmatpush.msra.mxu0 %v149
    %250 = vmatpush.msra.mxu0 %v147
    %251 = vmatpush.msra.mxu0 %v145
    %252 = vmatmul.f32.gmra.mxu0 %v234
    %v253 = vpop.f32.mrf.mxu0
    %v254 = vadd.f32 0.0, %v253
    %255 = vdwg.mxu0
    %256 = vmatpush.msra.mxu0 0.0
    %257 = vmatpush.msra.mxu0 0.0
    %258 = vmatpush.msra.mxu0 0.0
    %259 = vmatpush.msra.mxu0 0.0
    %260 = vmatpush.msra.mxu0 0.0
    %261 = vmatpush.msra.mxu0 0.0
    %262 = vmatpush.msra.mxu0 0.0
    %263 = vmatpush.msra.mxu0 0.0
    %264 = vmatpush.msra.mxu0 %v160
    %265 = vmatpush.msra.mxu0 %v158
    %266 = vmatpush.msra.mxu0 %v156
    %267 = vmatpush.msra.mxu0 %v154
    %268 = vmatpush.msra.mxu0 %v152
    %269 = vmatpush.msra.mxu0 %v150
    %270 = vmatpush.msra.mxu0 %v148
    %271 = vmatpush.msra.mxu0 %v146
    %272 = vmatmul.f32.gmra.mxu0 %v234
    %v273 = vpop.f32.mrf.mxu0
    %v274 = vadd.f32 0.0, %v273
    %275 = vdwg.mxu0
    %v276 = vadd.f32 %v230, %v254
    %v277 = vadd.f32 %v231, %v274
    %v278 = vxor.u32 %v276, 2147483648
    %v279 = vxor.u32 %v277, 2147483648
    %v280 = vmul.f32 %v278, 1.442695
    %v281 = vpow.pop %v280
    %v282 = vmul.f32 %v279, 1.442695
    %v283 = vpow.pop %v282
    %v284 = vadd.f32 %v281, 1.0
    %v285 = vadd.f32 %v283, 1.0
    %v286 = vrcp.pop %v284
    %v287 = vmul.f32 %v284, %v286
    %v288 = vsub.f32 1.0, %v287
    %v289 = vmul.f32 %v286, %v288
    %v290 = vadd.f32 %v286, %v289
    %vm291 = vweird.f32 %v284
    %vm292 = vweird.f32 %v286
    %vm293 = vmor %vm291, %vm292
    %v294 = vsel %vm293, %v286, %v290
    %v295 = vand.u32 2147483647, %v284
    %vm296 = vcmp.eq.f32.partialorder %v295, 8.507059e+37
    %v297 = vand.u32 %v284, 2147483648
    %v298 = vor.u32 1.1754944e-38, %v297
    %v299 = vsel %vm296, %v298, %v294
    %v300 = vmul.f32 1.0, %v299
    %v301 = vrcp.pop %v285
    %v302 = vmul.f32 %v285, %v301
    %v303 = vsub.f32 1.0, %v302
    %v304 = vmul.f32 %v301, %v303
    %v305 = vadd.f32 %v301, %v304
    %vm306 = vweird.f32 %v285
    %vm307 = vweird.f32 %v301
    %vm308 = vmor %vm306, %vm307
    %v309 = vsel %vm308, %v301, %v305
    %v310 = vand.u32 2147483647, %v285
    %vm311 = vcmp.eq.f32.partialorder %v310, 8.507059e+37
    %v312 = vand.u32 %v285, 2147483648
    %v313 = vor.u32 1.1754944e-38, %v312
    %v314 = vsel %vm311, %v313, %v309
    %v315 = vmul.f32 1.0, %v314
    %v316 = vtanh.pop %v277
    %v317 = vmul.f32 %v300, 0.0
    %319 = vrot.lane.b32.xlu0 %v316, 64
    %v320 = vpop.permute.xlu0 %319
    %v322 = vmul.f32 %v300, %v320
    %324 = vrot.lane.b32.xlu0 %v322, 64
    %v325 = vpop.permute.xlu0 %324
    %v327 = vadd.f32 %v317, %v325
    %v328 = vtanh.pop %v327
    %330 = vrot.lane.b32.xlu0 %v328, 64
    %v331 = vpop.permute.xlu0 %330
    %v333 = vmul.f32 %v315, %v331
    %v334 = vsel %vm111, 0, 7
    %335 = vset.pattern.permute.xlu0 0
    %336 = vperm.xlu0 %335, %v100
    %v337 = vpop.permute.xlu0 %336
    %vm338 = vcmp.lt.s32.totalorder %v334, %v337
    %340 = vrot.lane.b32.xlu0 %v327, 64
    %v341 = vpop.permute.xlu0 %340
    %v343 = vsel %vm338, %v341, 0.0
    %v344 = vsel %vm338, %v333, 0.0
    %v345 = vsel %vm111, 1, 0
    %vm346 = vcmp.eq.s32.totalorder %v345, 1
    %v347 = vsel %vm346, %v344, 0.0
    %v348 = vsel %vm346, 0.0, %v344
    %v349 = vrot.slane %v195, 2
    %v350 = vrot.slane %v218, 2
    %v353 = vsel %vm222, %v192, %v349
    %v354 = vsel %vm223, %v215, %v350
    %v356 = vsel %vm232, %v344, 0
    %358 = vmatpush.msra.mxu0 0.0
    %359 = vmatpush.msra.mxu0 0.0
    %360 = vmatpush.msra.mxu0 0.0
    %361 = vmatpush.msra.mxu0 0.0
    %362 = vmatpush.msra.mxu0 0.0
    %363 = vmatpush.msra.mxu0 0.0
    %364 = vmatpush.msra.mxu0 0.0
    %365 = vmatpush.msra.mxu0 0.0
    %366 = vmatpush.msra.mxu0 %v159
    %367 = vmatpush.msra.mxu0 %v157
    %368 = vmatpush.msra.mxu0 %v155
    %369 = vmatpush.msra.mxu0 %v153
    %370 = vmatpush.msra.mxu0 %v151
    %371 = vmatpush.msra.mxu0 %v149
    %372 = vmatpush.msra.mxu0 %v147
    %373 = vmatpush.msra.mxu0 %v145
    %374 = vmatmul.f32.gmra.mxu0 %v356
    %v375 = vpop.f32.mrf.mxu0
    %v376 = vadd.f32 0.0, %v375
    %377 = vdwg.mxu0
    %378 = vmatpush.msra.mxu0 0.0
    %379 = vmatpush.msra.mxu0 0.0
    %380 = vmatpush.msra.mxu0 0.0
    %381 = vmatpush.msra.mxu0 0.0
    %382 = vmatpush.msra.mxu0 0.0
    %383 = vmatpush.msra.mxu0 0.0
    %384 = vmatpush.msra.mxu0 0.0
    %385 = vmatpush.msra.mxu0 0.0
    %386 = vmatpush.msra.mxu0 %v160
    %387 = vmatpush.msra.mxu0 %v158
    %388 = vmatpush.msra.mxu0 %v156
    %389 = vmatpush.msra.mxu0 %v154
    %390 = vmatpush.msra.mxu0 %v152
    %391 = vmatpush.msra.mxu0 %v150
    %392 = vmatpush.msra.mxu0 %v148
    %393 = vmatpush.msra.mxu0 %v146
    %394 = vmatmul.f32.gmra.mxu0 %v356
    %v395 = vpop.f32.mrf.mxu0
    %v396 = vadd.f32 0.0, %v395
    %397 = vdwg.mxu0
    %v400 = vrot.slane %v376, 6
    %v401 = vrot.slane %v396, 6
    %v404 = vadd.f32 %v353, %v400
    %v405 = vadd.f32 %v354, %v401
    %v406 = vxor.u32 %v404, 2147483648
    %v407 = vxor.u32 %v405, 2147483648
    %v408 = vmul.f32 %v406, 1.442695
    %v409 = vpow.pop %v408
    %v410 = vmul.f32 %v407, 1.442695
    %v411 = vpow.pop %v410
    %v412 = vadd.f32 %v409, 1.0
    %v413 = vadd.f32 %v411, 1.0
    %v414 = vrcp.pop %v412
    %v415 = vmul.f32 %v412, %v414
    %v416 = vsub.f32 1.0, %v415
    %v417 = vmul.f32 %v414, %v416
    %v418 = vadd.f32 %v414, %v417
    %vm419 = vweird.f32 %v412
    %vm420 = vweird.f32 %v414
    %vm421 = vmor %vm419, %vm420
    %v422 = vsel %vm421, %v414, %v418
    %v423 = vand.u32 2147483647, %v412
    %vm424 = vcmp.eq.f32.partialorder %v423, 8.507059e+37
    %v425 = vand.u32 %v412, 2147483648
    %v426 = vor.u32 1.1754944e-38, %v425
    %v427 = vsel %vm424, %v426, %v422
    %v428 = vmul.f32 1.0, %v427
    %v429 = vrcp.pop %v413
    %v430 = vmul.f32 %v413, %v429
    %v431 = vsub.f32 1.0, %v430
    %v432 = vmul.f32 %v429, %v431
    %v433 = vadd.f32 %v429, %v432
    %vm434 = vweird.f32 %v413
    %vm435 = vweird.f32 %v429
    %vm436 = vmor %vm434, %vm435
    %v437 = vsel %vm436, %v429, %v433
    %v438 = vand.u32 2147483647, %v413
    %vm439 = vcmp.eq.f32.partialorder %v438, 8.507059e+37
    %v440 = vand.u32 %v413, 2147483648
    %v441 = vor.u32 1.1754944e-38, %v440
    %v442 = vsel %vm439, %v441, %v437
    %v443 = vmul.f32 1.0, %v442
    %v444 = vtanh.pop %v405
    %v446 = vrot.slane %v343, 6
    %447 = vrot.lane.b32.xlu0 %v446, 64
    %v448 = vpop.permute.xlu0 %447
    %v450 = vmul.f32 %v428, %v448
    %452 = vrot.lane.b32.xlu0 %v444, 64
    %v453 = vpop.permute.xlu0 %452
    %v455 = vmul.f32 %v428, %v453
    %457 = vrot.lane.b32.xlu0 %v455, 64
    %v458 = vpop.permute.xlu0 %457
    %v460 = vadd.f32 %v450, %v458
    %v461 = vtanh.pop %v460
    %463 = vrot.lane.b32.xlu0 %v461, 64
    %v464 = vpop.permute.xlu0 %463
    %v466 = vmul.f32 %v443, %v464
    %v467 = vsel %vm111, 1, 6
    %vm468 = vcmp.lt.s32.totalorder %v467, %v337
    %v470 = vrot.slane %v460, 2
    %471 = vrot.lane.b32.xlu0 %v470, 64
    %v472 = vpop.permute.xlu0 %471
    %v474 = vsel %vm468, %v472, %v343
    %v476 = vrot.slane %v466, 2
    %v478 = vsel %vm468, %v476, %v344
    %v479 = vsel %vm468, %v476, 0.0
    %v480 = vsel %vm346, %v479, 0.0
    %v481 = vsel %vm346, 0.0, %v479
    %v483 = vsel %vm232, %v478, 0
    %485 = vmatpush.msra.mxu0 0.0
    %486 = vmatpush.msra.mxu0 0.0
    %487 = vmatpush.msra.mxu0 0.0
    %488 = vmatpush.msra.mxu0 0.0
    %489 = vmatpush.msra.mxu0 0.0
    %490 = vmatpush.msra.mxu0 0.0
    %491 = vmatpush.msra.mxu0 0.0
    %492 = vmatpush.msra.mxu0 0.0
    %493 = vmatpush.msra.mxu0 %v159
    %494 = vmatpush.msra.mxu0 %v157
    %495 = vmatpush.msra.mxu0 %v155
    %496 = vmatpush.msra.mxu0 %v153
    %497 = vmatpush.msra.mxu0 %v151
    %498 = vmatpush.msra.mxu0 %v149
    %499 = vmatpush.msra.mxu0 %v147
    %500 = vmatpush.msra.mxu0 %v145
    %501 = vmatmul.f32.gmra.mxu0 %v483
    %v502 = vpop.f32.mrf.mxu0
    %v503 = vadd.f32 0.0, %v502
    %504 = vdwg.mxu0
    %505 = vmatpush.msra.mxu0 0.0
    %506 = vmatpush.msra.mxu0 0.0
    %507 = vmatpush.msra.mxu0 0.0
    %508 = vmatpush.msra.mxu0 0.0
    %509 = vmatpush.msra.mxu0 0.0
    %510 = vmatpush.msra.mxu0 0.0
    %511 = vmatpush.msra.mxu0 0.0
    %512 = vmatpush.msra.mxu0 0.0
    %513 = vmatpush.msra.mxu0 %v160
    %514 = vmatpush.msra.mxu0 %v158
    %515 = vmatpush.msra.mxu0 %v156
    %516 = vmatpush.msra.mxu0 %v154
    %517 = vmatpush.msra.mxu0 %v152
    %518 = vmatpush.msra.mxu0 %v150
    %519 = vmatpush.msra.mxu0 %v148
    %520 = vmatpush.msra.mxu0 %v146
    %521 = vmatmul.f32.gmra.mxu0 %v483
    %v522 = vpop.f32.mrf.mxu0
    %v523 = vadd.f32 0.0, %v522
    %524 = vdwg.mxu0
    %v527 = vrot.slane %v503, 4
    %v528 = vrot.slane %v523, 4
    %v531 = vadd.f32 %v230, %v527
    %v532 = vadd.f32 %v231, %v528
    %v533 = vxor.u32 %v531, 2147483648
    %v534 = vxor.u32 %v532, 2147483648
    %v535 = vmul.f32 %v533, 1.442695
    %v536 = vpow.pop %v535
    %v537 = vmul.f32 %v534, 1.442695
    %v538 = vpow.pop %v537
    %v539 = vadd.f32 %v536, 1.0
    %v540 = vadd.f32 %v538, 1.0
    %v541 = vrcp.pop %v539
    %v542 = vmul.f32 %v539, %v541
    %v543 = vsub.f32 1.0, %v542
    %v544 = vmul.f32 %v541, %v543
    %v545 = vadd.f32 %v541, %v544
    %vm546 = vweird.f32 %v539
    %vm547 = vweird.f32 %v541
    %vm548 = vmor %vm546, %vm547
    %v549 = vsel %vm548, %v541, %v545
    %v550 = vand.u32 2147483647, %v539
    %vm551 = vcmp.eq.f32.partialorder %v550, 8.507059e+37
    %v552 = vand.u32 %v539, 2147483648
    %v553 = vor.u32 1.1754944e-38, %v552
    %v554 = vsel %vm551, %v553, %v549
    %v555 = vmul.f32 1.0, %v554
    %v556 = vrcp.pop %v540
    %v557 = vmul.f32 %v540, %v556
    %v558 = vsub.f32 1.0, %v557
    %v559 = vmul.f32 %v556, %v558
    %v560 = vadd.f32 %v556, %v559
    %vm561 = vweird.f32 %v540
    %vm562 = vweird.f32 %v556
    %vm563 = vmor %vm561, %vm562
    %v564 = vsel %vm563, %v556, %v560
    %v565 = vand.u32 2147483647, %v540
    %vm566 = vcmp.eq.f32.partialorder %v565, 8.507059e+37
    %v567 = vand.u32 %v540, 2147483648
    %v568 = vor.u32 1.1754944e-38, %v567
    %v569 = vsel %vm566, %v568, %v564
    %v570 = vmul.f32 1.0, %v569
    %v571 = vtanh.pop %v532
    %v573 = vrot.slane %v474, 4
    %574 = vrot.lane.b32.xlu0 %v573, 64
    %v575 = vpop.permute.xlu0 %574
    %v577 = vmul.f32 %v555, %v575
    %579 = vrot.lane.b32.xlu0 %v571, 64
    %v580 = vpop.permute.xlu0 %579
    %v582 = vmul.f32 %v555, %v580
    %584 = vrot.lane.b32.xlu0 %v582, 64
    %v585 = vpop.permute.xlu0 %584
    %v587 = vadd.f32 %v577, %v585
    %v588 = vtanh.pop %v587
    %590 = vrot.lane.b32.xlu0 %v588, 64
    %v591 = vpop.permute.xlu0 %590
    %v593 = vmul.f32 %v570, %v591
    %v594 = vsel %vm111, 2, 5
    %vm595 = vcmp.lt.s32.totalorder %v594, %v337
    %v597 = vrot.slane %v587, 4
    %598 = vrot.lane.b32.xlu0 %v597, 64
    %v599 = vpop.permute.xlu0 %598
    %v601 = vsel %vm595, %v599, %v474
    %v603 = vrot.slane %v593, 4
    %v605 = vsel %vm595, %v603, %v478
    %v606 = vsel %vm595, %v603, 0.0
    %v607 = vsel %vm346, %v606, 0.0
    %v608 = vsel %vm346, 0.0, %v606
    %v610 = vsel %vm232, %v605, 0
    %612 = vmatpush.msra.mxu0 0.0
    %613 = vmatpush.msra.mxu0 0.0
    %614 = vmatpush.msra.mxu0 0.0
    %615 = vmatpush.msra.mxu0 0.0
    %616 = vmatpush.msra.mxu0 0.0
    %617 = vmatpush.msra.mxu0 0.0
    %618 = vmatpush.msra.mxu0 0.0
    %619 = vmatpush.msra.mxu0 0.0
    %620 = vmatpush.msra.mxu0 %v159
    %621 = vmatpush.msra.mxu0 %v157
    %622 = vmatpush.msra.mxu0 %v155
    %623 = vmatpush.msra.mxu0 %v153
    %624 = vmatpush.msra.mxu0 %v151
    %625 = vmatpush.msra.mxu0 %v149
    %626 = vmatpush.msra.mxu0 %v147
    %627 = vmatpush.msra.mxu0 %v145
    %628 = vmatmul.f32.gmra.mxu0 %v610
    %v629 = vpop.f32.mrf.mxu0
    %v630 = vadd.f32 0.0, %v629
    %631 = vdwg.mxu0
    %632 = vmatpush.msra.mxu0 0.0
    %633 = vmatpush.msra.mxu0 0.0
    %634 = vmatpush.msra.mxu0 0.0
    %635 = vmatpush.msra.mxu0 0.0
    %636 = vmatpush.msra.mxu0 0.0
    %637 = vmatpush.msra.mxu0 0.0
    %638 = vmatpush.msra.mxu0 0.0
    %639 = vmatpush.msra.mxu0 0.0
    %640 = vmatpush.msra.mxu0 %v160
    %641 = vmatpush.msra.mxu0 %v158
    %642 = vmatpush.msra.mxu0 %v156
    %643 = vmatpush.msra.mxu0 %v154
    %644 = vmatpush.msra.mxu0 %v152
    %645 = vmatpush.msra.mxu0 %v150
    %646 = vmatpush.msra.mxu0 %v148
    %647 = vmatpush.msra.mxu0 %v146
    %648 = vmatmul.f32.gmra.mxu0 %v610
    %v649 = vpop.f32.mrf.mxu0
    %v650 = vadd.f32 0.0, %v649
    %651 = vdwg.mxu0
    %v654 = vrot.slane %v630, 2
    %v655 = vrot.slane %v650, 2
    %v658 = vadd.f32 %v353, %v654
    %v659 = vadd.f32 %v354, %v655
    %v660 = vxor.u32 %v658, 2147483648
    %v661 = vxor.u32 %v659, 2147483648
    %v662 = vmul.f32 %v660, 1.442695
    %v663 = vpow.pop %v662
    %v664 = vmul.f32 %v661, 1.442695
    %v665 = vpow.pop %v664
    %v666 = vadd.f32 %v663, 1.0
    %v667 = vadd.f32 %v665, 1.0
    %v668 = vrcp.pop %v666
    %v669 = vmul.f32 %v666, %v668
    %v670 = vsub.f32 1.0, %v669
    %v671 = vmul.f32 %v668, %v670
    %v672 = vadd.f32 %v668, %v671
    %vm673 = vweird.f32 %v666
    %vm674 = vweird.f32 %v668
    %vm675 = vmor %vm673, %vm674
    %v676 = vsel %vm675, %v668, %v672
    %v677 = vand.u32 2147483647, %v666
    %vm678 = vcmp.eq.f32.partialorder %v677, 8.507059e+37
    %v679 = vand.u32 %v666, 2147483648
    %v680 = vor.u32 1.1754944e-38, %v679
    %v681 = vsel %vm678, %v680, %v676
    %v682 = vmul.f32 1.0, %v681
    %v683 = vrcp.pop %v667
    %v684 = vmul.f32 %v667, %v683
    %v685 = vsub.f32 1.0, %v684
    %v686 = vmul.f32 %v683, %v685
    %v687 = vadd.f32 %v683, %v686
    %vm688 = vweird.f32 %v667
    %vm689 = vweird.f32 %v683
    %vm690 = vmor %vm688, %vm689
    %v691 = vsel %vm690, %v683, %v687
    %v692 = vand.u32 2147483647, %v667
    %vm693 = vcmp.eq.f32.partialorder %v692, 8.507059e+37
    %v694 = vand.u32 %v667, 2147483648
    %v695 = vor.u32 1.1754944e-38, %v694
    %v696 = vsel %vm693, %v695, %v691
    %v697 = vmul.f32 1.0, %v696
    %v698 = vtanh.pop %v659
    %v700 = vrot.slane %v601, 2
    %701 = vrot.lane.b32.xlu0 %v700, 64
    %v702 = vpop.permute.xlu0 %701
    %v704 = vmul.f32 %v682, %v702
    %706 = vrot.lane.b32.xlu0 %v698, 64
    %v707 = vpop.permute.xlu0 %706
    %v709 = vmul.f32 %v682, %v707
    %711 = vrot.lane.b32.xlu0 %v709, 64
    %v712 = vpop.permute.xlu0 %711
    %v714 = vadd.f32 %v704, %v712
    %v715 = vtanh.pop %v714
    %717 = vrot.lane.b32.xlu0 %v715, 64
    %v718 = vpop.permute.xlu0 %717
    %v720 = vmul.f32 %v697, %v718
    %v721 = vsel %vm111, 3, 4
    %vm722 = vcmp.lt.s32.totalorder %v721, %v337
    %v724 = vrot.slane %v714, 6
    %725 = vrot.lane.b32.xlu0 %v724, 64
    %v726 = vpop.permute.xlu0 %725
    %v728 = vsel %vm722, %v726, %v601
    %v730 = vrot.slane %v720, 6
    %v732 = vsel %vm722, %v730, %v605
    %v733 = vsel %vm722, %v730, 0.0
    %v734 = vsel %vm346, %v733, 0.0
    %v735 = vsel %vm346, 0.0, %v733
    %v738 = vrot.slane %v192, 6
    %v739 = vrot.slane %v215, 6
    %v742 = vsel %vm222, %v195, %v738
    %v743 = vsel %vm223, %v218, %v739
    %v745 = vsel %vm232, %v732, 0
    %747 = vmatpush.msra.mxu0 0.0
    %748 = vmatpush.msra.mxu0 0.0
    %749 = vmatpush.msra.mxu0 0.0
    %750 = vmatpush.msra.mxu0 0.0
    %751 = vmatpush.msra.mxu0 0.0
    %752 = vmatpush.msra.mxu0 0.0
    %753 = vmatpush.msra.mxu0 0.0
    %754 = vmatpush.msra.mxu0 0.0
    %755 = vmatpush.msra.mxu0 %v159
    %756 = vmatpush.msra.mxu0 %v157
    %757 = vmatpush.msra.mxu0 %v155
    %758 = vmatpush.msra.mxu0 %v153
    %759 = vmatpush.msra.mxu0 %v151
    %760 = vmatpush.msra.mxu0 %v149
    %761 = vmatpush.msra.mxu0 %v147
    %762 = vmatpush.msra.mxu0 %v145
    %763 = vmatmul.f32.gmra.mxu0 %v745
    %v764 = vpop.f32.mrf.mxu0
    %v765 = vadd.f32 0.0, %v764
    %766 = vdwg.mxu0
    %767 = vmatpush.msra.mxu0 0.0
    %768 = vmatpush.msra.mxu0 0.0
    %769 = vmatpush.msra.mxu0 0.0
    %770 = vmatpush.msra.mxu0 0.0
    %771 = vmatpush.msra.mxu0 0.0
    %772 = vmatpush.msra.mxu0 0.0
    %773 = vmatpush.msra.mxu0 0.0
    %774 = vmatpush.msra.mxu0 0.0
    %775 = vmatpush.msra.mxu0 %v160
    %776 = vmatpush.msra.mxu0 %v158
    %777 = vmatpush.msra.mxu0 %v156
    %778 = vmatpush.msra.mxu0 %v154
    %779 = vmatpush.msra.mxu0 %v152
    %780 = vmatpush.msra.mxu0 %v150
    %781 = vmatpush.msra.mxu0 %v148
    %782 = vmatpush.msra.mxu0 %v146
    %783 = vmatmul.f32.gmra.mxu0 %v745
    %v784 = vpop.f32.mrf.mxu0
    %v785 = vadd.f32 0.0, %v784
    %786 = vdwg.mxu0
    %v787 = vadd.f32 %v742, %v765
    %v788 = vadd.f32 %v743, %v785
    %v789 = vxor.u32 %v787, 2147483648
    %v790 = vxor.u32 %v788, 2147483648
    %v791 = vmul.f32 %v789, 1.442695
    %v792 = vpow.pop %v791
    %v793 = vmul.f32 %v790, 1.442695
    %v794 = vpow.pop %v793
    %v795 = vadd.f32 %v792, 1.0
    %v796 = vadd.f32 %v794, 1.0
    %v797 = vrcp.pop %v795
    %v798 = vmul.f32 %v795, %v797
    %v799 = vsub.f32 1.0, %v798
    %v800 = vmul.f32 %v797, %v799
    %v801 = vadd.f32 %v797, %v800
    %vm802 = vweird.f32 %v795
    %vm803 = vweird.f32 %v797
    %vm804 = vmor %vm802, %vm803
    %v805 = vsel %vm804, %v797, %v801
    %v806 = vand.u32 2147483647, %v795
    %vm807 = vcmp.eq.f32.partialorder %v806, 8.507059e+37
    %v808 = vand.u32 %v795, 2147483648
    %v809 = vor.u32 1.1754944e-38, %v808
    %v810 = vsel %vm807, %v809, %v805
    %v811 = vmul.f32 1.0, %v810
    %v812 = vrcp.pop %v796
    %v813 = vmul.f32 %v796, %v812
    %v814 = vsub.f32 1.0, %v813
    %v815 = vmul.f32 %v812, %v814
    %v816 = vadd.f32 %v812, %v815
    %vm817 = vweird.f32 %v796
    %vm818 = vweird.f32 %v812
    %vm819 = vmor %vm817, %vm818
    %v820 = vsel %vm819, %v812, %v816
    %v821 = vand.u32 2147483647, %v796
    %vm822 = vcmp.eq.f32.partialorder %v821, 8.507059e+37
    %v823 = vand.u32 %v796, 2147483648
    %v824 = vor.u32 1.1754944e-38, %v823
    %v825 = vsel %vm822, %v824, %v820
    %v826 = vmul.f32 1.0, %v825
    %v827 = vtanh.pop %v788
    %829 = vrot.lane.b32.xlu0 %v728, 64
    %v830 = vpop.permute.xlu0 %829
    %v832 = vmul.f32 %v811, %v830
    %834 = vrot.lane.b32.xlu0 %v827, 64
    %v835 = vpop.permute.xlu0 %834
    %v837 = vmul.f32 %v811, %v835
    %839 = vrot.lane.b32.xlu0 %v837, 64
    %v840 = vpop.permute.xlu0 %839
    %v842 = vadd.f32 %v832, %v840
    %v843 = vtanh.pop %v842
    %845 = vrot.lane.b32.xlu0 %v843, 64
    %v846 = vpop.permute.xlu0 %845
    %v848 = vmul.f32 %v826, %v846
    %v849 = vsel %vm111, 4, 3
    %vm850 = vcmp.lt.s32.totalorder %v849, %v337
    %852 = vrot.lane.b32.xlu0 %v842, 64
    %v853 = vpop.permute.xlu0 %852
    %v855 = vsel %vm850, %v853, %v728
    %v856 = vsel %vm850, %v848, %v732
    %v857 = vsel %vm850, %v848, 0.0
    %v858 = vsel %vm346, %v857, 0.0
    %v859 = vsel %vm346, 0.0, %v857
    %v860 = vrot.slane %v192, 2
    %v861 = vrot.slane %v215, 2
    %v864 = vsel %vm222, %v195, %v860
    %v865 = vsel %vm223, %v218, %v861
    %v867 = vsel %vm232, %v856, 0
    %869 = vmatpush.msra.mxu0 0.0
    %870 = vmatpush.msra.mxu0 0.0
    %871 = vmatpush.msra.mxu0 0.0
    %872 = vmatpush.msra.mxu0 0.0
    %873 = vmatpush.msra.mxu0 0.0
    %874 = vmatpush.msra.mxu0 0.0
    %875 = vmatpush.msra.mxu0 0.0
    %876 = vmatpush.msra.mxu0 0.0
    %877 = vmatpush.msra.mxu0 %v159
    %878 = vmatpush.msra.mxu0 %v157
    %879 = vmatpush.msra.mxu0 %v155
    %880 = vmatpush.msra.mxu0 %v153
    %881 = vmatpush.msra.mxu0 %v151
    %882 = vmatpush.msra.mxu0 %v149
    %883 = vmatpush.msra.mxu0 %v147
    %884 = vmatpush.msra.mxu0 %v145
    %885 = vmatmul.f32.gmra.mxu0 %v867
    %v886 = vpop.f32.mrf.mxu0
    %v887 = vadd.f32 0.0, %v886
    %888 = vdwg.mxu0
    %889 = vmatpush.msra.mxu0 0.0
    %890 = vmatpush.msra.mxu0 0.0
    %891 = vmatpush.msra.mxu0 0.0
    %892 = vmatpush.msra.mxu0 0.0
    %893 = vmatpush.msra.mxu0 0.0
    %894 = vmatpush.msra.mxu0 0.0
    %895 = vmatpush.msra.mxu0 0.0
    %896 = vmatpush.msra.mxu0 0.0
    %897 = vmatpush.msra.mxu0 %v160
    %898 = vmatpush.msra.mxu0 %v158
    %899 = vmatpush.msra.mxu0 %v156
    %900 = vmatpush.msra.mxu0 %v154
    %901 = vmatpush.msra.mxu0 %v152
    %902 = vmatpush.msra.mxu0 %v150
    %903 = vmatpush.msra.mxu0 %v148
    %904 = vmatpush.msra.mxu0 %v146
    %905 = vmatmul.f32.gmra.mxu0 %v867
    %v906 = vpop.f32.mrf.mxu0
    %v907 = vadd.f32 0.0, %v906
    %908 = vdwg.mxu0
    %v911 = vrot.slane %v887, 6
    %v912 = vrot.slane %v907, 6
    %v915 = vadd.f32 %v864, %v911
    %v916 = vadd.f32 %v865, %v912
    %v917 = vxor.u32 %v915, 2147483648
    %v918 = vxor.u32 %v916, 2147483648
    %v919 = vmul.f32 %v917, 1.442695
    %v920 = vpow.pop %v919
    %v921 = vmul.f32 %v918, 1.442695
    %v922 = vpow.pop %v921
    %v923 = vadd.f32 %v920, 1.0
    %v924 = vadd.f32 %v922, 1.0
    %v925 = vrcp.pop %v923
    %v926 = vmul.f32 %v923, %v925
    %v927 = vsub.f32 1.0, %v926
    %v928 = vmul.f32 %v925, %v927
    %v929 = vadd.f32 %v925, %v928
    %vm930 = vweird.f32 %v923
    %vm931 = vweird.f32 %v925
    %vm932 = vmor %vm930, %vm931
    %v933 = vsel %vm932, %v925, %v929
    %v934 = vand.u32 2147483647, %v923
    %vm935 = vcmp.eq.f32.partialorder %v934, 8.507059e+37
    %v936 = vand.u32 %v923, 2147483648
    %v937 = vor.u32 1.1754944e-38, %v936
    %v938 = vsel %vm935, %v937, %v933
    %v939 = vmul.f32 1.0, %v938
    %v940 = vrcp.pop %v924
    %v941 = vmul.f32 %v924, %v940
    %v942 = vsub.f32 1.0, %v941
    %v943 = vmul.f32 %v940, %v942
    %v944 = vadd.f32 %v940, %v943
    %vm945 = vweird.f32 %v924
    %vm946 = vweird.f32 %v940
    %vm947 = vmor %vm945, %vm946
    %v948 = vsel %vm947, %v940, %v944
    %v949 = vand.u32 2147483647, %v924
    %vm950 = vcmp.eq.f32.partialorder %v949, 8.507059e+37
    %v951 = vand.u32 %v924, 2147483648
    %v952 = vor.u32 1.1754944e-38, %v951
    %v953 = vsel %vm950, %v952, %v948
    %v954 = vmul.f32 1.0, %v953
    %v955 = vtanh.pop %v916
    %v957 = vrot.slane %v855, 6
    %958 = vrot.lane.b32.xlu0 %v957, 64
    %v959 = vpop.permute.xlu0 %958
    %v961 = vmul.f32 %v939, %v959
    %963 = vrot.lane.b32.xlu0 %v955, 64
    %v964 = vpop.permute.xlu0 %963
    %v966 = vmul.f32 %v939, %v964
    %968 = vrot.lane.b32.xlu0 %v966, 64
    %v969 = vpop.permute.xlu0 %968
    %v971 = vadd.f32 %v961, %v969
    %v972 = vtanh.pop %v971
    %974 = vrot.lane.b32.xlu0 %v972, 64
    %v975 = vpop.permute.xlu0 %974
    %v977 = vmul.f32 %v954, %v975
    %v978 = vsel %vm111, 5, 2
    %vm979 = vcmp.lt.s32.totalorder %v978, %v337
    %v981 = vrot.slane %v971, 2
    %982 = vrot.lane.b32.xlu0 %v981, 64
    %v983 = vpop.permute.xlu0 %982
    %v985 = vsel %vm979, %v983, %v855
    %v987 = vrot.slane %v977, 2
    %v989 = vsel %vm979, %v987, %v856
    %v990 = vsel %vm979, %v987, 0.0
    %v991 = vsel %vm346, %v990, 0.0
    %v992 = vsel %vm346, 0.0, %v990
    %v994 = vsel %vm232, %v989, 0
    %996 = vmatpush.msra.mxu0 0.0
    %997 = vmatpush.msra.mxu0 0.0
    %998 = vmatpush.msra.mxu0 0.0
    %999 = vmatpush.msra.mxu0 0.0
    %1000 = vmatpush.msra.mxu0 0.0
    %1001 = vmatpush.msra.mxu0 0.0
    %1002 = vmatpush.msra.mxu0 0.0
    %1003 = vmatpush.msra.mxu0 0.0
    %1004 = vmatpush.msra.mxu0 %v159
    %1005 = vmatpush.msra.mxu0 %v157
    %1006 = vmatpush.msra.mxu0 %v155
    %1007 = vmatpush.msra.mxu0 %v153
    %1008 = vmatpush.msra.mxu0 %v151
    %1009 = vmatpush.msra.mxu0 %v149
    %1010 = vmatpush.msra.mxu0 %v147
    %1011 = vmatpush.msra.mxu0 %v145
    %1012 = vmatmul.f32.gmra.mxu0 %v994
    %v1013 = vpop.f32.mrf.mxu0
    %v1014 = vadd.f32 0.0, %v1013
    %1015 = vdwg.mxu0
    %1016 = vmatpush.msra.mxu0 0.0
    %1017 = vmatpush.msra.mxu0 0.0
    %1018 = vmatpush.msra.mxu0 0.0
    %1019 = vmatpush.msra.mxu0 0.0
    %1020 = vmatpush.msra.mxu0 0.0
    %1021 = vmatpush.msra.mxu0 0.0
    %1022 = vmatpush.msra.mxu0 0.0
    %1023 = vmatpush.msra.mxu0 0.0
    %1024 = vmatpush.msra.mxu0 %v160
    %1025 = vmatpush.msra.mxu0 %v158
    %1026 = vmatpush.msra.mxu0 %v156
    %1027 = vmatpush.msra.mxu0 %v154
    %1028 = vmatpush.msra.mxu0 %v152
    %1029 = vmatpush.msra.mxu0 %v150
    %1030 = vmatpush.msra.mxu0 %v148
    %1031 = vmatpush.msra.mxu0 %v146
    %1032 = vmatmul.f32.gmra.mxu0 %v994
    %v1033 = vpop.f32.mrf.mxu0
    %v1034 = vadd.f32 0.0, %v1033
    %1035 = vdwg.mxu0
    %v1038 = vrot.slane %v1014, 4
    %v1039 = vrot.slane %v1034, 4
    %v1042 = vadd.f32 %v742, %v1038
    %v1043 = vadd.f32 %v743, %v1039
    %v1044 = vxor.u32 %v1042, 2147483648
    %v1045 = vxor.u32 %v1043, 2147483648
    %v1046 = vmul.f32 %v1044, 1.442695
    %v1047 = vpow.pop %v1046
    %v1048 = vmul.f32 %v1045, 1.442695
    %v1049 = vpow.pop %v1048
    %v1050 = vadd.f32 %v1047, 1.0
    %v1051 = vadd.f32 %v1049, 1.0
    %v1052 = vrcp.pop %v1050
    %v1053 = vmul.f32 %v1050, %v1052
    %v1054 = vsub.f32 1.0, %v1053
    %v1055 = vmul.f32 %v1052, %v1054
    %v1056 = vadd.f32 %v1052, %v1055
    %vm1057 = vweird.f32 %v1050
    %vm1058 = vweird.f32 %v1052
    %vm1059 = vmor %vm1057, %vm1058
    %v1060 = vsel %vm1059, %v1052, %v1056
    %v1061 = vand.u32 2147483647, %v1050
    %vm1062 = vcmp.eq.f32.partialorder %v1061, 8.507059e+37
    %v1063 = vand.u32 %v1050, 2147483648
    %v1064 = vor.u32 1.1754944e-38, %v1063
    %v1065 = vsel %vm1062, %v1064, %v1060
    %v1066 = vmul.f32 1.0, %v1065
    %v1067 = vrcp.pop %v1051
    %v1068 = vmul.f32 %v1051, %v1067
    %v1069 = vsub.f32 1.0, %v1068
    %v1070 = vmul.f32 %v1067, %v1069
    %v1071 = vadd.f32 %v1067, %v1070
    %vm1072 = vweird.f32 %v1051
    %vm1073 = vweird.f32 %v1067
    %vm1074 = vmor %vm1072, %vm1073
    %v1075 = vsel %vm1074, %v1067, %v1071
    %v1076 = vand.u32 2147483647, %v1051
    %vm1077 = vcmp.eq.f32.partialorder %v1076, 8.507059e+37
    %v1078 = vand.u32 %v1051, 2147483648
    %v1079 = vor.u32 1.1754944e-38, %v1078
    %v1080 = vsel %vm1077, %v1079, %v1075
    %v1081 = vmul.f32 1.0, %v1080
    %v1082 = vtanh.pop %v1043
    %v1084 = vrot.slane %v985, 4
    %1085 = vrot.lane.b32.xlu0 %v1084, 64
    %v1086 = vpop.permute.xlu0 %1085
    %v1088 = vmul.f32 %v1066, %v1086
    %1090 = vrot.lane.b32.xlu0 %v1082, 64
    %v1091 = vpop.permute.xlu0 %1090
    %v1093 = vmul.f32 %v1066, %v1091
    %1095 = vrot.lane.b32.xlu0 %v1093, 64
    %v1096 = vpop.permute.xlu0 %1095
    %v1098 = vadd.f32 %v1088, %v1096
    %v1099 = vtanh.pop %v1098
    %1101 = vrot.lane.b32.xlu0 %v1099, 64
    %v1102 = vpop.permute.xlu0 %1101
    %v1104 = vmul.f32 %v1081, %v1102
    %v1105 = vsel %vm111, 6, 1
    %vm1106 = vcmp.lt.s32.totalorder %v1105, %v337
    %v1108 = vrot.slane %v1098, 4
    %1109 = vrot.lane.b32.xlu0 %v1108, 64
    %v1110 = vpop.permute.xlu0 %1109
    %v1112 = vsel %vm1106, %v1110, %v985
    %v1114 = vrot.slane %v1104, 4
    %v1116 = vsel %vm1106, %v1114, %v989
    %v1117 = vsel %vm1106, %v1114, 0.0
    %v1118 = vsel %vm346, %v1117, 0.0
    %v1119 = vsel %vm346, 0.0, %v1117
    %v1121 = vsel %vm232, %v1116, 0
    %1123 = vmatpush.msra.mxu0 0.0
    %1124 = vmatpush.msra.mxu0 0.0
    %1125 = vmatpush.msra.mxu0 0.0
    %1126 = vmatpush.msra.mxu0 0.0
    %1127 = vmatpush.msra.mxu0 0.0
    %1128 = vmatpush.msra.mxu0 0.0
    %1129 = vmatpush.msra.mxu0 0.0
    %1130 = vmatpush.msra.mxu0 0.0
    %1131 = vmatpush.msra.mxu0 %v159
    %1132 = vmatpush.msra.mxu0 %v157
    %1133 = vmatpush.msra.mxu0 %v155
    %1134 = vmatpush.msra.mxu0 %v153
    %1135 = vmatpush.msra.mxu0 %v151
    %1136 = vmatpush.msra.mxu0 %v149
    %1137 = vmatpush.msra.mxu0 %v147
    %1138 = vmatpush.msra.mxu0 %v145
    %1139 = vmatmul.f32.gmra.mxu0 %v1121
    %v1140 = vpop.f32.mrf.mxu0
    %v1141 = vadd.f32 0.0, %v1140
    %1142 = vdwg.mxu0
    %1143 = vmatpush.msra.mxu0 0.0
    %1144 = vmatpush.msra.mxu0 0.0
    %1145 = vmatpush.msra.mxu0 0.0
    %1146 = vmatpush.msra.mxu0 0.0
    %1147 = vmatpush.msra.mxu0 0.0
    %1148 = vmatpush.msra.mxu0 0.0
    %1149 = vmatpush.msra.mxu0 0.0
    %1150 = vmatpush.msra.mxu0 0.0
    %1151 = vmatpush.msra.mxu0 %v160
    %1152 = vmatpush.msra.mxu0 %v158
    %1153 = vmatpush.msra.mxu0 %v156
    %1154 = vmatpush.msra.mxu0 %v154
    %1155 = vmatpush.msra.mxu0 %v152
    %1156 = vmatpush.msra.mxu0 %v150
    %1157 = vmatpush.msra.mxu0 %v148
    %1158 = vmatpush.msra.mxu0 %v146
    %1159 = vmatmul.f32.gmra.mxu0 %v1121
    %v1160 = vpop.f32.mrf.mxu0
    %v1161 = vadd.f32 0.0, %v1160
    %1162 = vdwg.mxu0
    %v1165 = vrot.slane %v1141, 2
    %v1166 = vrot.slane %v1161, 2
    %v1169 = vadd.f32 %v864, %v1165
    %v1170 = vadd.f32 %v865, %v1166
    %v1171 = vxor.u32 %v1169, 2147483648
    %v1172 = vxor.u32 %v1170, 2147483648
    %v1173 = vmul.f32 %v1171, 1.442695
    %v1174 = vpow.pop %v1173
    %v1175 = vmul.f32 %v1172, 1.442695
    %v1176 = vpow.pop %v1175
    %v1177 = vadd.f32 %v1174, 1.0
    %v1178 = vadd.f32 %v1176, 1.0
    %v1179 = vrcp.pop %v1177
    %v1180 = vmul.f32 %v1177, %v1179
    %v1181 = vsub.f32 1.0, %v1180
    %v1182 = vmul.f32 %v1179, %v1181
    %v1183 = vadd.f32 %v1179, %v1182
    %vm1184 = vweird.f32 %v1177
    %vm1185 = vweird.f32 %v1179
    %vm1186 = vmor %vm1184, %vm1185
    %v1187 = vsel %vm1186, %v1179, %v1183
    %v1188 = vand.u32 2147483647, %v1177
    %vm1189 = vcmp.eq.f32.partialorder %v1188, 8.507059e+37
    %v1190 = vand.u32 %v1177, 2147483648
    %v1191 = vor.u32 1.1754944e-38, %v1190
    %v1192 = vsel %vm1189, %v1191, %v1187
    %v1193 = vmul.f32 1.0, %v1192
    %v1194 = vrcp.pop %v1178
    %v1195 = vmul.f32 %v1178, %v1194
    %v1196 = vsub.f32 1.0, %v1195
    %v1197 = vmul.f32 %v1194, %v1196
    %v1198 = vadd.f32 %v1194, %v1197
    %vm1199 = vweird.f32 %v1178
    %vm1200 = vweird.f32 %v1194
    %vm1201 = vmor %vm1199, %vm1200
    %v1202 = vsel %vm1201, %v1194, %v1198
    %v1203 = vand.u32 2147483647, %v1178
    %vm1204 = vcmp.eq.f32.partialorder %v1203, 8.507059e+37
    %v1205 = vand.u32 %v1178, 2147483648
    %v1206 = vor.u32 1.1754944e-38, %v1205
    %v1207 = vsel %vm1204, %v1206, %v1202
    %v1208 = vmul.f32 1.0, %v1207
    %v1209 = vtanh.pop %v1170
    %v1211 = vrot.slane %v1112, 2
    %1212 = vrot.lane.b32.xlu0 %v1211, 64
    %v1213 = vpop.permute.xlu0 %1212
    %v1215 = vmul.f32 %v1193, %v1213
    %1217 = vrot.lane.b32.xlu0 %v1209, 64
    %v1218 = vpop.permute.xlu0 %1217
    %v1220 = vmul.f32 %v1193, %v1218
    %1222 = vrot.lane.b32.xlu0 %v1220, 64
    %v1223 = vpop.permute.xlu0 %1222
    %v1225 = vadd.f32 %v1215, %v1223
    %v1226 = vtanh.pop %v1225
    %1228 = vrot.lane.b32.xlu0 %v1226, 64
    %v1229 = vpop.permute.xlu0 %1228
    %v1231 = vmul.f32 %v1208, %v1229
    %v1232 = vsel %vm111, 7, 0
    %vm1233 = vcmp.lt.s32.totalorder %v1232, %v337
    %v1235 = vrot.slane %v1231, 6
    %v1237 = vsel %vm1233, %v1235, 0.0
    %v1238 = vsel %vm346, %v1237, 0.0
    %v1239 = vsel %vm346, 0.0, %v1237
    %v1240 = vadd.f32 %v347, %v1239
    %v1241 = vadd.f32 %v480, %v1119
    %v1242 = vadd.f32 %v607, %v992
    %v1243 = vadd.f32 %v734, %v859
    %v1244 = vadd.f32 %v858, %v735
    %v1245 = vadd.f32 %v991, %v608
    %v1246 = vadd.f32 %v1118, %v481
    %v1247 = vadd.f32 %v1238, %v348
    %v1249 = vrot.slane %v1241, 6
    %v1252 = vrot.slane %v1242, 4
    %v1255 = vrot.slane %v1243, 2
    %v1258 = vrot.slane %v1245, 6
    %v1261 = vrot.slane %v1246, 4
    %v1264 = vrot.slane %v1247, 2
    %vm1266 = vcmask 1041408
    %v1267 = vsel %vm1266, %v1240, %v1249
    %vm1268 = vcmask 1043456
    %v1269 = vsel %vm1268, %v1267, %v1252
    %vm1270 = vcmask 1045504
    %v1271 = vsel %vm1270, %v1269, %v1255
    %v1272 = vsel %vm1266, %v1244, %v1258
    %v1273 = vsel %vm1268, %v1272, %v1261
    %v1274 = vsel %vm1270, %v1273, %v1264
    %v1275 = vld [vmem:[#allocation4] sm:$0xff]
    %v1276 = vld [vmem:[#allocation4 + $0x8] sm:$0xff]
    %v1277 = vld [vmem:[#allocation4 + $0x10] sm:$0xff]
    %v1278 = vld [vmem:[#allocation4 + $0x18] sm:$0xff]
    %v1279 = vld [vmem:[#allocation4 + $0x20] sm:$0xff]
    %v1280 = vld [vmem:[#allocation4 + $0x28] sm:$0xff]
    %v1281 = vld [vmem:[#allocation4 + $0x30] sm:$0xff]
    %v1282 = vld [vmem:[#allocation4 + $0x38] sm:$0xff]
    %v1283 = vld [vmem:[#allocation4 + $0x40] sm:$0xff]
    %v1284 = vld [vmem:[#allocation4 + $0x48] sm:$0xff]
    %v1285 = vld [vmem:[#allocation4 + $0x50] sm:$0xff]
    %v1286 = vld [vmem:[#allocation4 + $0x58] sm:$0xff]
    %v1287 = vld [vmem:[#allocation4 + $0x60] sm:$0xff]
    %v1288 = vld [vmem:[#allocation4 + $0x68] sm:$0xff]
    %v1289 = vld [vmem:[#allocation4 + $0x70] sm:$0xff]
    %v1290 = vld [vmem:[#allocation4 + $0x78] sm:$0xff]
    %v1291 = vld [vmem:[#allocation6] sm:$0xff]
    %v1292 = vld [vmem:[#allocation6 + $0x8] sm:$0xff]
    %v1293 = vld [vmem:[#allocation6 + $0x10] sm:$0xff]
    %v1294 = vld [vmem:[#allocation6 + $0x18] sm:$0xff]
    %v1295 = vld [vmem:[#allocation6 + $0x20] sm:$0xff]
    %v1296 = vld [vmem:[#allocation6 + $0x28] sm:$0xff]
    %v1297 = vld [vmem:[#allocation6 + $0x30] sm:$0xff]
    %v1298 = vld [vmem:[#allocation6 + $0x38] sm:$0xff]
    %v1299 = vld [vmem:[#allocation6 + $0x40] sm:$0xff]
    %v1300 = vld [vmem:[#allocation6 + $0x48] sm:$0xff]
    %v1301 = vld [vmem:[#allocation6 + $0x50] sm:$0xff]
    %v1302 = vld [vmem:[#allocation6 + $0x58] sm:$0xff]
    %v1303 = vld [vmem:[#allocation6 + $0x60] sm:$0xff]
    %v1304 = vld [vmem:[#allocation6 + $0x68] sm:$0xff]
    %v1305 = vld [vmem:[#allocation6 + $0x70] sm:$0xff]
    %v1306 = vld [vmem:[#allocation6 + $0x78] sm:$0xff]
    %v1307 = vld [vmem:[%s7] sm:$0x3]
    %v1309 = vperm.slane %v1307, 0
    %v1310 = vperm.slane %v1307, 1
    %v1314 = vsel %vm232, %v1271, 0
    %v1317 = vsel %vm232, %v1274, 0
    %1319 = vmatpush.msra.mxu0 0.0
    %1320 = vmatpush.msra.mxu0 0.0
    %1321 = vmatpush.msra.mxu0 0.0
    %1322 = vmatpush.msra.mxu0 0.0
    %1323 = vmatpush.msra.mxu0 0.0
    %1324 = vmatpush.msra.mxu0 0.0
    %1325 = vmatpush.msra.mxu0 0.0
    %1326 = vmatpush.msra.mxu0 0.0
    %1327 = vmatpush.msra.mxu0 %v1289
    %1328 = vmatpush.msra.mxu0 %v1287
    %1329 = vmatpush.msra.mxu0 %v1285
    %1330 = vmatpush.msra.mxu0 %v1283
    %1331 = vmatpush.msra.mxu0 %v1281
    %1332 = vmatpush.msra.mxu0 %v1279
    %1333 = vmatpush.msra.mxu0 %v1277
    %1334 = vmatpush.msra.mxu0 %v1275
    %1335 = vmatmul.f32.gmra.mxu0 %v1314
    %v1336 = vpop.f32.mrf.mxu0
    %v1337 = vadd.f32 %v1309, %v1336
    %1338 = vmatmul.f32.gmra.mxu0 %v1317
    %v1339 = vpop.f32.mrf.mxu0
    %v1340 = vadd.f32 %v1309, %v1339
    %1341 = vdwg.mxu0
    %1342 = vmatpush.msra.mxu0 0.0
    %1343 = vmatpush.msra.mxu0 0.0
    %1344 = vmatpush.msra.mxu0 0.0
    %1345 = vmatpush.msra.mxu0 0.0
    %1346 = vmatpush.msra.mxu0 0.0
    %1347 = vmatpush.msra.mxu0 0.0
    %1348 = vmatpush.msra.mxu0 0.0
    %1349 = vmatpush.msra.mxu0 0.0
    %1350 = vmatpush.msra.mxu0 %v1290
    %1351 = vmatpush.msra.mxu0 %v1288
    %1352 = vmatpush.msra.mxu0 %v1286
    %1353 = vmatpush.msra.mxu0 %v1284
    %1354 = vmatpush.msra.mxu0 %v1282
    %1355 = vmatpush.msra.mxu0 %v1280
    %1356 = vmatpush.msra.mxu0 %v1278
    %1357 = vmatpush.msra.mxu0 %v1276
    %1358 = vmatmul.f32.gmra.mxu0 %v1314
    %v1359 = vpop.f32.mrf.mxu0
    %v1360 = vadd.f32 %v1310, %v1359
    %1361 = vmatmul.f32.gmra.mxu0 %v1317
    %v1362 = vpop.f32.mrf.mxu0
    %v1363 = vadd.f32 %v1310, %v1362
    %1364 = vdwg.mxu0
    %v1367 = vrot.slane %v1340, 6
    %v1368 = vrot.slane %v1363, 6
    %v1371 = vsel %vm222, %v1337, %v1367
    %v1372 = vsel %vm223, %v1360, %v1368
    %1373 = vmatpush.msra.mxu0 0.0
    %1374 = vmatpush.msra.mxu0 0.0
    %1375 = vmatpush.msra.mxu0 0.0
    %1376 = vmatpush.msra.mxu0 0.0
    %1377 = vmatpush.msra.mxu0 0.0
    %1378 = vmatpush.msra.mxu0 0.0
    %1379 = vmatpush.msra.mxu0 0.0
    %1380 = vmatpush.msra.mxu0 0.0
    %1381 = vmatpush.msra.mxu0 %v1305
    %1382 = vmatpush.msra.mxu0 %v1303
    %1383 = vmatpush.msra.mxu0 %v1301
    %1384 = vmatpush.msra.mxu0 %v1299
    %1385 = vmatpush.msra.mxu0 %v1297
    %1386 = vmatpush.msra.mxu0 %v1295
    %1387 = vmatpush.msra.mxu0 %v1293
    %1388 = vmatpush.msra.mxu0 %v1291
    %1389 = vmatmul.f32.gmra.mxu0 %v234
    %v1390 = vpop.f32.mrf.mxu0
    %v1391 = vadd.f32 0.0, %v1390
    %1392 = vdwg.mxu0
    %1393 = vmatpush.msra.mxu0 0.0
    %1394 = vmatpush.msra.mxu0 0.0
    %1395 = vmatpush.msra.mxu0 0.0
    %1396 = vmatpush.msra.mxu0 0.0
    %1397 = vmatpush.msra.mxu0 0.0
    %1398 = vmatpush.msra.mxu0 0.0
    %1399 = vmatpush.msra.mxu0 0.0
    %1400 = vmatpush.msra.mxu0 0.0
    %1401 = vmatpush.msra.mxu0 %v1306
    %1402 = vmatpush.msra.mxu0 %v1304
    %1403 = vmatpush.msra.mxu0 %v1302
    %1404 = vmatpush.msra.mxu0 %v1300
    %1405 = vmatpush.msra.mxu0 %v1298
    %1406 = vmatpush.msra.mxu0 %v1296
    %1407 = vmatpush.msra.mxu0 %v1294
    %1408 = vmatpush.msra.mxu0 %v1292
    %1409 = vmatmul.f32.gmra.mxu0 %v234
    %v1410 = vpop.f32.mrf.mxu0
    %v1411 = vadd.f32 0.0, %v1410
    %1412 = vdwg.mxu0
    %v1413 = vadd.f32 %v1371, %v1391
    %v1414 = vadd.f32 %v1372, %v1411
    %v1415 = vxor.u32 %v1413, 2147483648
    %v1416 = vxor.u32 %v1414, 2147483648
    %v1417 = vmul.f32 %v1415, 1.442695
    %v1418 = vpow.pop %v1417
    %v1419 = vmul.f32 %v1416, 1.442695
    %v1420 = vpow.pop %v1419
    %v1421 = vadd.f32 %v1418, 1.0
    %v1422 = vadd.f32 %v1420, 1.0
    %v1423 = vrcp.pop %v1421
    %v1424 = vmul.f32 %v1421, %v1423
    %v1425 = vsub.f32 1.0, %v1424
    %v1426 = vmul.f32 %v1423, %v1425
    %v1427 = vadd.f32 %v1423, %v1426
    %vm1428 = vweird.f32 %v1421
    %vm1429 = vweird.f32 %v1423
    %vm1430 = vmor %vm1428, %vm1429
    %v1431 = vsel %vm1430, %v1423, %v1427
    %v1432 = vand.u32 2147483647, %v1421
    %vm1433 = vcmp.eq.f32.partialorder %v1432, 8.507059e+37
    %v1434 = vand.u32 %v1421, 2147483648
    %v1435 = vor.u32 1.1754944e-38, %v1434
    %v1436 = vsel %vm1433, %v1435, %v1431
    %v1437 = vmul.f32 1.0, %v1436
    %v1438 = vrcp.pop %v1422
    %v1439 = vmul.f32 %v1422, %v1438
    %v1440 = vsub.f32 1.0, %v1439
    %v1441 = vmul.f32 %v1438, %v1440
    %v1442 = vadd.f32 %v1438, %v1441
    %vm1443 = vweird.f32 %v1422
    %vm1444 = vweird.f32 %v1438
    %vm1445 = vmor %vm1443, %vm1444
    %v1446 = vsel %vm1445, %v1438, %v1442
    %v1447 = vand.u32 2147483647, %v1422
    %vm1448 = vcmp.eq.f32.partialorder %v1447, 8.507059e+37
    %v1449 = vand.u32 %v1422, 2147483648
    %v1450 = vor.u32 1.1754944e-38, %v1449
    %v1451 = vsel %vm1448, %v1450, %v1446
    %v1452 = vmul.f32 1.0, %v1451
    %v1453 = vtanh.pop %v1414
    %v1454 = vmul.f32 %v1437, 0.0
    %1456 = vrot.lane.b32.xlu0 %v1453, 64
    %v1457 = vpop.permute.xlu0 %1456
    %v1459 = vmul.f32 %v1437, %v1457
    %1461 = vrot.lane.b32.xlu0 %v1459, 64
    %v1462 = vpop.permute.xlu0 %1461
    %v1464 = vadd.f32 %v1454, %v1462
    %v1465 = vtanh.pop %v1464
    %1467 = vrot.lane.b32.xlu0 %v1465, 64
    %v1468 = vpop.permute.xlu0 %1467
    %v1470 = vmul.f32 %v1452, %v1468
    %1472 = vrot.lane.b32.xlu0 %v1464, 64
    %v1473 = vpop.permute.xlu0 %1472
    %v1475 = vsel %vm338, %v1473, 0.0
    %v1476 = vsel %vm338, %v1470, 0.0
    %v1477 = vsel %vm346, %v1476, 0.0
    %v1478 = vsel %vm346, 0.0, %v1476
    %v1479 = vrot.slane %v1340, 2
    %v1480 = vrot.slane %v1363, 2
    %v1483 = vsel %vm222, %v1337, %v1479
    %v1484 = vsel %vm223, %v1360, %v1480
    %v1486 = vsel %vm232, %v1476, 0
    %1488 = vmatpush.msra.mxu0 0.0
    %1489 = vmatpush.msra.mxu0 0.0
    %1490 = vmatpush.msra.mxu0 0.0
    %1491 = vmatpush.msra.mxu0 0.0
    %1492 = vmatpush.msra.mxu0 0.0
    %1493 = vmatpush.msra.mxu0 0.0
    %1494 = vmatpush.msra.mxu0 0.0
    %1495 = vmatpush.msra.mxu0 0.0
    %1496 = vmatpush.msra.mxu0 %v1305
    %1497 = vmatpush.msra.mxu0 %v1303
    %1498 = vmatpush.msra.mxu0 %v1301
    %1499 = vmatpush.msra.mxu0 %v1299
    %1500 = vmatpush.msra.mxu0 %v1297
    %1501 = vmatpush.msra.mxu0 %v1295
    %1502 = vmatpush.msra.mxu0 %v1293
    %1503 = vmatpush.msra.mxu0 %v1291
    %1504 = vmatmul.f32.gmra.mxu0 %v1486
    %v1505 = vpop.f32.mrf.mxu0
    %v1506 = vadd.f32 0.0, %v1505
    %1507 = vdwg.mxu0
    %1508 = vmatpush.msra.mxu0 0.0
    %1509 = vmatpush.msra.mxu0 0.0
    %1510 = vmatpush.msra.mxu0 0.0
    %1511 = vmatpush.msra.mxu0 0.0
    %1512 = vmatpush.msra.mxu0 0.0
    %1513 = vmatpush.msra.mxu0 0.0
    %1514 = vmatpush.msra.mxu0 0.0
    %1515 = vmatpush.msra.mxu0 0.0
    %1516 = vmatpush.msra.mxu0 %v1306
    %1517 = vmatpush.msra.mxu0 %v1304
    %1518 = vmatpush.msra.mxu0 %v1302
    %1519 = vmatpush.msra.mxu0 %v1300
    %1520 = vmatpush.msra.mxu0 %v1298
    %1521 = vmatpush.msra.mxu0 %v1296
    %1522 = vmatpush.msra.mxu0 %v1294
    %1523 = vmatpush.msra.mxu0 %v1292
    %1524 = vmatmul.f32.gmra.mxu0 %v1486
    %v1525 = vpop.f32.mrf.mxu0
    %v1526 = vadd.f32 0.0, %v1525
    %1527 = vdwg.mxu0
    %v1530 = vrot.slane %v1506, 6
    %v1531 = vrot.slane %v1526, 6
    %v1534 = vadd.f32 %v1483, %v1530
    %v1535 = vadd.f32 %v1484, %v1531
    %v1536 = vxor.u32 %v1534, 2147483648
    %v1537 = vxor.u32 %v1535, 2147483648
    %v1538 = vmul.f32 %v1536, 1.442695
    %v1539 = vpow.pop %v1538
    %v1540 = vmul.f32 %v1537, 1.442695
    %v1541 = vpow.pop %v1540
    %v1542 = vadd.f32 %v1539, 1.0
    %v1543 = vadd.f32 %v1541, 1.0
    %v1544 = vrcp.pop %v1542
    %v1545 = vmul.f32 %v1542, %v1544
    %v1546 = vsub.f32 1.0, %v1545
    %v1547 = vmul.f32 %v1544, %v1546
    %v1548 = vadd.f32 %v1544, %v1547
    %vm1549 = vweird.f32 %v1542
    %vm1550 = vweird.f32 %v1544
    %vm1551 = vmor %vm1549, %vm1550
    %v1552 = vsel %vm1551, %v1544, %v1548
    %v1553 = vand.u32 2147483647, %v1542
    %vm1554 = vcmp.eq.f32.partialorder %v1553, 8.507059e+37
    %v1555 = vand.u32 %v1542, 2147483648
    %v1556 = vor.u32 1.1754944e-38, %v1555
    %v1557 = vsel %vm1554, %v1556, %v1552
    %v1558 = vmul.f32 1.0, %v1557
    %v1559 = vrcp.pop %v1543
    %v1560 = vmul.f32 %v1543, %v1559
    %v1561 = vsub.f32 1.0, %v1560
    %v1562 = vmul.f32 %v1559, %v1561
    %v1563 = vadd.f32 %v1559, %v1562
    %vm1564 = vweird.f32 %v1543
    %vm1565 = vweird.f32 %v1559
    %vm1566 = vmor %vm1564, %vm1565
    %v1567 = vsel %vm1566, %v1559, %v1563
    %v1568 = vand.u32 2147483647, %v1543
    %vm1569 = vcmp.eq.f32.partialorder %v1568, 8.507059e+37
    %v1570 = vand.u32 %v1543, 2147483648
    %v1571 = vor.u32 1.1754944e-38, %v1570
    %v1572 = vsel %vm1569, %v1571, %v1567
    %v1573 = vmul.f32 1.0, %v1572
    %v1574 = vtanh.pop %v1535
    %v1576 = vrot.slane %v1475, 6
    %1577 = vrot.lane.b32.xlu0 %v1576, 64
    %v1578 = vpop.permute.xlu0 %1577
    %v1580 = vmul.f32 %v1558, %v1578
    %1582 = vrot.lane.b32.xlu0 %v1574, 64
    %v1583 = vpop.permute.xlu0 %1582
    %v1585 = vmul.f32 %v1558, %v1583
    %1587 = vrot.lane.b32.xlu0 %v1585, 64
    %v1588 = vpop.permute.xlu0 %1587
    %v1590 = vadd.f32 %v1580, %v1588
    %v1591 = vtanh.pop %v1590
    %1593 = vrot.lane.b32.xlu0 %v1591, 64
    %v1594 = vpop.permute.xlu0 %1593
    %v1596 = vmul.f32 %v1573, %v1594
    %v1598 = vrot.slane %v1590, 2
    %1599 = vrot.lane.b32.xlu0 %v1598, 64
    %v1600 = vpop.permute.xlu0 %1599
    %v1602 = vsel %vm468, %v1600, %v1475
    %v1604 = vrot.slane %v1596, 2
    %v1606 = vsel %vm468, %v1604, %v1476
    %v1607 = vsel %vm468, %v1604, 0.0
    %v1608 = vsel %vm346, %v1607, 0.0
    %v1609 = vsel %vm346, 0.0, %v1607
    %v1611 = vsel %vm232, %v1606, 0
    %1613 = vmatpush.msra.mxu0 0.0
    %1614 = vmatpush.msra.mxu0 0.0
    %1615 = vmatpush.msra.mxu0 0.0
    %1616 = vmatpush.msra.mxu0 0.0
    %1617 = vmatpush.msra.mxu0 0.0
    %1618 = vmatpush.msra.mxu0 0.0
    %1619 = vmatpush.msra.mxu0 0.0
    %1620 = vmatpush.msra.mxu0 0.0
    %1621 = vmatpush.msra.mxu0 %v1305
    %1622 = vmatpush.msra.mxu0 %v1303
    %1623 = vmatpush.msra.mxu0 %v1301
    %1624 = vmatpush.msra.mxu0 %v1299
    %1625 = vmatpush.msra.mxu0 %v1297
    %1626 = vmatpush.msra.mxu0 %v1295
    %1627 = vmatpush.msra.mxu0 %v1293
    %1628 = vmatpush.msra.mxu0 %v1291
    %1629 = vmatmul.f32.gmra.mxu0 %v1611
    %v1630 = vpop.f32.mrf.mxu0
    %v1631 = vadd.f32 0.0, %v1630
    %1632 = vdwg.mxu0
    %1633 = vmatpush.msra.mxu0 0.0
    %1634 = vmatpush.msra.mxu0 0.0
    %1635 = vmatpush.msra.mxu0 0.0
    %1636 = vmatpush.msra.mxu0 0.0
    %1637 = vmatpush.msra.mxu0 0.0
    %1638 = vmatpush.msra.mxu0 0.0
    %1639 = vmatpush.msra.mxu0 0.0
    %1640 = vmatpush.msra.mxu0 0.0
    %1641 = vmatpush.msra.mxu0 %v1306
    %1642 = vmatpush.msra.mxu0 %v1304
    %1643 = vmatpush.msra.mxu0 %v1302
    %1644 = vmatpush.msra.mxu0 %v1300
    %1645 = vmatpush.msra.mxu0 %v1298
    %1646 = vmatpush.msra.mxu0 %v1296
    %1647 = vmatpush.msra.mxu0 %v1294
    %1648 = vmatpush.msra.mxu0 %v1292
    %1649 = vmatmul.f32.gmra.mxu0 %v1611
    %v1650 = vpop.f32.mrf.mxu0
    %v1651 = vadd.f32 0.0, %v1650
    %1652 = vdwg.mxu0
    %v1655 = vrot.slane %v1631, 4
    %v1656 = vrot.slane %v1651, 4
    %v1659 = vadd.f32 %v1371, %v1655
    %v1660 = vadd.f32 %v1372, %v1656
    %v1661 = vxor.u32 %v1659, 2147483648
    %v1662 = vxor.u32 %v1660, 2147483648
    %v1663 = vmul.f32 %v1661, 1.442695
    %v1664 = vpow.pop %v1663
    %v1665 = vmul.f32 %v1662, 1.442695
    %v1666 = vpow.pop %v1665
    %v1667 = vadd.f32 %v1664, 1.0
    %v1668 = vadd.f32 %v1666, 1.0
    %v1669 = vrcp.pop %v1667
    %v1670 = vmul.f32 %v1667, %v1669
    %v1671 = vsub.f32 1.0, %v1670
    %v1672 = vmul.f32 %v1669, %v1671
    %v1673 = vadd.f32 %v1669, %v1672
    %vm1674 = vweird.f32 %v1667
    %vm1675 = vweird.f32 %v1669
    %vm1676 = vmor %vm1674, %vm1675
    %v1677 = vsel %vm1676, %v1669, %v1673
    %v1678 = vand.u32 2147483647, %v1667
    %vm1679 = vcmp.eq.f32.partialorder %v1678, 8.507059e+37
    %v1680 = vand.u32 %v1667, 2147483648
    %v1681 = vor.u32 1.1754944e-38, %v1680
    %v1682 = vsel %vm1679, %v1681, %v1677
    %v1683 = vmul.f32 1.0, %v1682
    %v1684 = vrcp.pop %v1668
    %v1685 = vmul.f32 %v1668, %v1684
    %v1686 = vsub.f32 1.0, %v1685
    %v1687 = vmul.f32 %v1684, %v1686
    %v1688 = vadd.f32 %v1684, %v1687
    %vm1689 = vweird.f32 %v1668
    %vm1690 = vweird.f32 %v1684
    %vm1691 = vmor %vm1689, %vm1690
    %v1692 = vsel %vm1691, %v1684, %v1688
    %v1693 = vand.u32 2147483647, %v1668
    %vm1694 = vcmp.eq.f32.partialorder %v1693, 8.507059e+37
    %v1695 = vand.u32 %v1668, 2147483648
    %v1696 = vor.u32 1.1754944e-38, %v1695
    %v1697 = vsel %vm1694, %v1696, %v1692
    %v1698 = vmul.f32 1.0, %v1697
    %v1699 = vtanh.pop %v1660
    %v1701 = vrot.slane %v1602, 4
    %1702 = vrot.lane.b32.xlu0 %v1701, 64
    %v1703 = vpop.permute.xlu0 %1702
    %v1705 = vmul.f32 %v1683, %v1703
    %1707 = vrot.lane.b32.xlu0 %v1699, 64
    %v1708 = vpop.permute.xlu0 %1707
    %v1710 = vmul.f32 %v1683, %v1708
    %1712 = vrot.lane.b32.xlu0 %v1710, 64
    %v1713 = vpop.permute.xlu0 %1712
    %v1715 = vadd.f32 %v1705, %v1713
    %v1716 = vtanh.pop %v1715
    %1718 = vrot.lane.b32.xlu0 %v1716, 64
    %v1719 = vpop.permute.xlu0 %1718
    %v1721 = vmul.f32 %v1698, %v1719
    %v1723 = vrot.slane %v1715, 4
    %1724 = vrot.lane.b32.xlu0 %v1723, 64
    %v1725 = vpop.permute.xlu0 %1724
    %v1727 = vsel %vm595, %v1725, %v1602
    %v1729 = vrot.slane %v1721, 4
    %v1731 = vsel %vm595, %v1729, %v1606
    %v1732 = vsel %vm595, %v1729, 0.0
    %v1733 = vsel %vm346, %v1732, 0.0
    %v1734 = vsel %vm346, 0.0, %v1732
    %v1736 = vsel %vm232, %v1731, 0
    %1738 = vmatpush.msra.mxu0 0.0
    %1739 = vmatpush.msra.mxu0 0.0
    %1740 = vmatpush.msra.mxu0 0.0
    %1741 = vmatpush.msra.mxu0 0.0
    %1742 = vmatpush.msra.mxu0 0.0
    %1743 = vmatpush.msra.mxu0 0.0
    %1744 = vmatpush.msra.mxu0 0.0
    %1745 = vmatpush.msra.mxu0 0.0
    %1746 = vmatpush.msra.mxu0 %v1305
    %1747 = vmatpush.msra.mxu0 %v1303
    %1748 = vmatpush.msra.mxu0 %v1301
    %1749 = vmatpush.msra.mxu0 %v1299
    %1750 = vmatpush.msra.mxu0 %v1297
    %1751 = vmatpush.msra.mxu0 %v1295
    %1752 = vmatpush.msra.mxu0 %v1293
    %1753 = vmatpush.msra.mxu0 %v1291
    %1754 = vmatmul.f32.gmra.mxu0 %v1736
    %v1755 = vpop.f32.mrf.mxu0
    %v1756 = vadd.f32 0.0, %v1755
    %1757 = vdwg.mxu0
    %1758 = vmatpush.msra.mxu0 0.0
    %1759 = vmatpush.msra.mxu0 0.0
    %1760 = vmatpush.msra.mxu0 0.0
    %1761 = vmatpush.msra.mxu0 0.0
    %1762 = vmatpush.msra.mxu0 0.0
    %1763 = vmatpush.msra.mxu0 0.0
    %1764 = vmatpush.msra.mxu0 0.0
    %1765 = vmatpush.msra.mxu0 0.0
    %1766 = vmatpush.msra.mxu0 %v1306
    %1767 = vmatpush.msra.mxu0 %v1304
    %1768 = vmatpush.msra.mxu0 %v1302
    %1769 = vmatpush.msra.mxu0 %v1300
    %1770 = vmatpush.msra.mxu0 %v1298
    %1771 = vmatpush.msra.mxu0 %v1296
    %1772 = vmatpush.msra.mxu0 %v1294
    %1773 = vmatpush.msra.mxu0 %v1292
    %1774 = vmatmul.f32.gmra.mxu0 %v1736
    %v1775 = vpop.f32.mrf.mxu0
    %v1776 = vadd.f32 0.0, %v1775
    %1777 = vdwg.mxu0
    %v1780 = vrot.slane %v1756, 2
    %v1781 = vrot.slane %v1776, 2
    %v1784 = vadd.f32 %v1483, %v1780
    %v1785 = vadd.f32 %v1484, %v1781
    %v1786 = vxor.u32 %v1784, 2147483648
    %v1787 = vxor.u32 %v1785, 2147483648
    %v1788 = vmul.f32 %v1786, 1.442695
    %v1789 = vpow.pop %v1788
    %v1790 = vmul.f32 %v1787, 1.442695
    %v1791 = vpow.pop %v1790
    %v1792 = vadd.f32 %v1789, 1.0
    %v1793 = vadd.f32 %v1791, 1.0
    %v1794 = vrcp.pop %v1792
    %v1795 = vmul.f32 %v1792, %v1794
    %v1796 = vsub.f32 1.0, %v1795
    %v1797 = vmul.f32 %v1794, %v1796
    %v1798 = vadd.f32 %v1794, %v1797
    %vm1799 = vweird.f32 %v1792
    %vm1800 = vweird.f32 %v1794
    %vm1801 = vmor %vm1799, %vm1800
    %v1802 = vsel %vm1801, %v1794, %v1798
    %v1803 = vand.u32 2147483647, %v1792
    %vm1804 = vcmp.eq.f32.partialorder %v1803, 8.507059e+37
    %v1805 = vand.u32 %v1792, 2147483648
    %v1806 = vor.u32 1.1754944e-38, %v1805
    %v1807 = vsel %vm1804, %v1806, %v1802
    %v1808 = vmul.f32 1.0, %v1807
    %v1809 = vrcp.pop %v1793
    %v1810 = vmul.f32 %v1793, %v1809
    %v1811 = vsub.f32 1.0, %v1810
    %v1812 = vmul.f32 %v1809, %v1811
    %v1813 = vadd.f32 %v1809, %v1812
    %vm1814 = vweird.f32 %v1793
    %vm1815 = vweird.f32 %v1809
    %vm1816 = vmor %vm1814, %vm1815
    %v1817 = vsel %vm1816, %v1809, %v1813
    %v1818 = vand.u32 2147483647, %v1793
    %vm1819 = vcmp.eq.f32.partialorder %v1818, 8.507059e+37
    %v1820 = vand.u32 %v1793, 2147483648
    %v1821 = vor.u32 1.1754944e-38, %v1820
    %v1822 = vsel %vm1819, %v1821, %v1817
    %v1823 = vmul.f32 1.0, %v1822
    %v1824 = vtanh.pop %v1785
    %v1826 = vrot.slane %v1727, 2
    %1827 = vrot.lane.b32.xlu0 %v1826, 64
    %v1828 = vpop.permute.xlu0 %1827
    %v1830 = vmul.f32 %v1808, %v1828
    %1832 = vrot.lane.b32.xlu0 %v1824, 64
    %v1833 = vpop.permute.xlu0 %1832
    %v1835 = vmul.f32 %v1808, %v1833
    %1837 = vrot.lane.b32.xlu0 %v1835, 64
    %v1838 = vpop.permute.xlu0 %1837
    %v1840 = vadd.f32 %v1830, %v1838
    %v1841 = vtanh.pop %v1840
    %1843 = vrot.lane.b32.xlu0 %v1841, 64
    %v1844 = vpop.permute.xlu0 %1843
    %v1846 = vmul.f32 %v1823, %v1844
    %v1848 = vrot.slane %v1840, 6
    %1849 = vrot.lane.b32.xlu0 %v1848, 64
    %v1850 = vpop.permute.xlu0 %1849
    %v1852 = vsel %vm722, %v1850, %v1727
    %v1854 = vrot.slane %v1846, 6
    %v1856 = vsel %vm722, %v1854, %v1731
    %v1857 = vsel %vm722, %v1854, 0.0
    %v1858 = vsel %vm346, %v1857, 0.0
    %v1859 = vsel %vm346, 0.0, %v1857
    %v1862 = vrot.slane %v1337, 6
    %v1863 = vrot.slane %v1360, 6
    %v1866 = vsel %vm222, %v1340, %v1862
    %v1867 = vsel %vm223, %v1363, %v1863
    %v1869 = vsel %vm232, %v1856, 0
    %1871 = vmatpush.msra.mxu0 0.0
    %1872 = vmatpush.msra.mxu0 0.0
    %1873 = vmatpush.msra.mxu0 0.0
    %1874 = vmatpush.msra.mxu0 0.0
    %1875 = vmatpush.msra.mxu0 0.0
    %1876 = vmatpush.msra.mxu0 0.0
    %1877 = vmatpush.msra.mxu0 0.0
    %1878 = vmatpush.msra.mxu0 0.0
    %1879 = vmatpush.msra.mxu0 %v1305
    %1880 = vmatpush.msra.mxu0 %v1303
    %1881 = vmatpush.msra.mxu0 %v1301
    %1882 = vmatpush.msra.mxu0 %v1299
    %1883 = vmatpush.msra.mxu0 %v1297
    %1884 = vmatpush.msra.mxu0 %v1295
    %1885 = vmatpush.msra.mxu0 %v1293
    %1886 = vmatpush.msra.mxu0 %v1291
    %1887 = vmatmul.f32.gmra.mxu0 %v1869
    %v1888 = vpop.f32.mrf.mxu0
    %v1889 = vadd.f32 0.0, %v1888
    %1890 = vdwg.mxu0
    %1891 = vmatpush.msra.mxu0 0.0
    %1892 = vmatpush.msra.mxu0 0.0
    %1893 = vmatpush.msra.mxu0 0.0
    %1894 = vmatpush.msra.mxu0 0.0
    %1895 = vmatpush.msra.mxu0 0.0
    %1896 = vmatpush.msra.mxu0 0.0
    %1897 = vmatpush.msra.mxu0 0.0
    %1898 = vmatpush.msra.mxu0 0.0
    %1899 = vmatpush.msra.mxu0 %v1306
    %1900 = vmatpush.msra.mxu0 %v1304
    %1901 = vmatpush.msra.mxu0 %v1302
    %1902 = vmatpush.msra.mxu0 %v1300
    %1903 = vmatpush.msra.mxu0 %v1298
    %1904 = vmatpush.msra.mxu0 %v1296
    %1905 = vmatpush.msra.mxu0 %v1294
    %1906 = vmatpush.msra.mxu0 %v1292
    %1907 = vmatmul.f32.gmra.mxu0 %v1869
    %v1908 = vpop.f32.mrf.mxu0
    %v1909 = vadd.f32 0.0, %v1908
    %1910 = vdwg.mxu0
    %v1911 = vadd.f32 %v1866, %v1889
    %v1912 = vadd.f32 %v1867, %v1909
    %v1913 = vxor.u32 %v1911, 2147483648
    %v1914 = vxor.u32 %v1912, 2147483648
    %v1915 = vmul.f32 %v1913, 1.442695
    %v1916 = vpow.pop %v1915
    %v1917 = vmul.f32 %v1914, 1.442695
    %v1918 = vpow.pop %v1917
    %v1919 = vadd.f32 %v1916, 1.0
    %v1920 = vadd.f32 %v1918, 1.0
    %v1921 = vrcp.pop %v1919
    %v1922 = vmul.f32 %v1919, %v1921
    %v1923 = vsub.f32 1.0, %v1922
    %v1924 = vmul.f32 %v1921, %v1923
    %v1925 = vadd.f32 %v1921, %v1924
    %vm1926 = vweird.f32 %v1919
    %vm1927 = vweird.f32 %v1921
    %vm1928 = vmor %vm1926, %vm1927
    %v1929 = vsel %vm1928, %v1921, %v1925
    %v1930 = vand.u32 2147483647, %v1919
    %vm1931 = vcmp.eq.f32.partialorder %v1930, 8.507059e+37
    %v1932 = vand.u32 %v1919, 2147483648
    %v1933 = vor.u32 1.1754944e-38, %v1932
    %v1934 = vsel %vm1931, %v1933, %v1929
    %v1935 = vmul.f32 1.0, %v1934
    %v1936 = vrcp.pop %v1920
    %v1937 = vmul.f32 %v1920, %v1936
    %v1938 = vsub.f32 1.0, %v1937
    %v1939 = vmul.f32 %v1936, %v1938
    %v1940 = vadd.f32 %v1936, %v1939
    %vm1941 = vweird.f32 %v1920
    %vm1942 = vweird.f32 %v1936
    %vm1943 = vmor %vm1941, %vm1942
    %v1944 = vsel %vm1943, %v1936, %v1940
    %v1945 = vand.u32 2147483647, %v1920
    %vm1946 = vcmp.eq.f32.partialorder %v1945, 8.507059e+37
    %v1947 = vand.u32 %v1920, 2147483648
    %v1948 = vor.u32 1.1754944e-38, %v1947
    %v1949 = vsel %vm1946, %v1948, %v1944
    %v1950 = vmul.f32 1.0, %v1949
    %v1951 = vtanh.pop %v1912
    %1953 = vrot.lane.b32.xlu0 %v1852, 64
    %v1954 = vpop.permute.xlu0 %1953
    %v1956 = vmul.f32 %v1935, %v1954
    %1958 = vrot.lane.b32.xlu0 %v1951, 64
    %v1959 = vpop.permute.xlu0 %1958
    %v1961 = vmul.f32 %v1935, %v1959
    %1963 = vrot.lane.b32.xlu0 %v1961, 64
    %v1964 = vpop.permute.xlu0 %1963
    %v1966 = vadd.f32 %v1956, %v1964
    %v1967 = vtanh.pop %v1966
    %1969 = vrot.lane.b32.xlu0 %v1967, 64
    %v1970 = vpop.permute.xlu0 %1969
    %v1972 = vmul.f32 %v1950, %v1970
    %1974 = vrot.lane.b32.xlu0 %v1966, 64
    %v1975 = vpop.permute.xlu0 %1974
    %v1977 = vsel %vm850, %v1975, %v1852
    %v1978 = vsel %vm850, %v1972, %v1856
    %v1979 = vsel %vm850, %v1972, 0.0
    %v1980 = vsel %vm346, %v1979, 0.0
    %v1981 = vsel %vm346, 0.0, %v1979
    %v1982 = vrot.slane %v1337, 2
    %v1983 = vrot.slane %v1360, 2
    %v1986 = vsel %vm222, %v1340, %v1982
    %v1987 = vsel %vm223, %v1363, %v1983
    %v1989 = vsel %vm232, %v1978, 0
    %1991 = vmatpush.msra.mxu0 0.0
    %1992 = vmatpush.msra.mxu0 0.0
    %1993 = vmatpush.msra.mxu0 0.0
    %1994 = vmatpush.msra.mxu0 0.0
    %1995 = vmatpush.msra.mxu0 0.0
    %1996 = vmatpush.msra.mxu0 0.0
    %1997 = vmatpush.msra.mxu0 0.0
    %1998 = vmatpush.msra.mxu0 0.0
    %1999 = vmatpush.msra.mxu0 %v1305
    %2000 = vmatpush.msra.mxu0 %v1303
    %2001 = vmatpush.msra.mxu0 %v1301
    %2002 = vmatpush.msra.mxu0 %v1299
    %2003 = vmatpush.msra.mxu0 %v1297
    %2004 = vmatpush.msra.mxu0 %v1295
    %2005 = vmatpush.msra.mxu0 %v1293
    %2006 = vmatpush.msra.mxu0 %v1291
    %2007 = vmatmul.f32.gmra.mxu0 %v1989
    %v2008 = vpop.f32.mrf.mxu0
    %v2009 = vadd.f32 0.0, %v2008
    %2010 = vdwg.mxu0
    %2011 = vmatpush.msra.mxu0 0.0
    %2012 = vmatpush.msra.mxu0 0.0
    %2013 = vmatpush.msra.mxu0 0.0
    %2014 = vmatpush.msra.mxu0 0.0
    %2015 = vmatpush.msra.mxu0 0.0
    %2016 = vmatpush.msra.mxu0 0.0
    %2017 = vmatpush.msra.mxu0 0.0
    %2018 = vmatpush.msra.mxu0 0.0
    %2019 = vmatpush.msra.mxu0 %v1306
    %2020 = vmatpush.msra.mxu0 %v1304
    %2021 = vmatpush.msra.mxu0 %v1302
    %2022 = vmatpush.msra.mxu0 %v1300
    %2023 = vmatpush.msra.mxu0 %v1298
    %2024 = vmatpush.msra.mxu0 %v1296
    %2025 = vmatpush.msra.mxu0 %v1294
    %2026 = vmatpush.msra.mxu0 %v1292
    %2027 = vmatmul.f32.gmra.mxu0 %v1989
    %v2028 = vpop.f32.mrf.mxu0
    %v2029 = vadd.f32 0.0, %v2028
    %2030 = vdwg.mxu0
    %v2033 = vrot.slane %v2009, 6
    %v2034 = vrot.slane %v2029, 6
    %v2037 = vadd.f32 %v1986, %v2033
    %v2038 = vadd.f32 %v1987, %v2034
    %v2039 = vxor.u32 %v2037, 2147483648
    %v2040 = vxor.u32 %v2038, 2147483648
    %v2041 = vmul.f32 %v2039, 1.442695
    %v2042 = vpow.pop %v2041
    %v2043 = vmul.f32 %v2040, 1.442695
    %v2044 = vpow.pop %v2043
    %v2045 = vadd.f32 %v2042, 1.0
    %v2046 = vadd.f32 %v2044, 1.0
    %v2047 = vrcp.pop %v2045
    %v2048 = vmul.f32 %v2045, %v2047
    %v2049 = vsub.f32 1.0, %v2048
    %v2050 = vmul.f32 %v2047, %v2049
    %v2051 = vadd.f32 %v2047, %v2050
    %vm2052 = vweird.f32 %v2045
    %vm2053 = vweird.f32 %v2047
    %vm2054 = vmor %vm2052, %vm2053
    %v2055 = vsel %vm2054, %v2047, %v2051
    %v2056 = vand.u32 2147483647, %v2045
    %vm2057 = vcmp.eq.f32.partialorder %v2056, 8.507059e+37
    %v2058 = vand.u32 %v2045, 2147483648
    %v2059 = vor.u32 1.1754944e-38, %v2058
    %v2060 = vsel %vm2057, %v2059, %v2055
    %v2061 = vmul.f32 1.0, %v2060
    %v2062 = vrcp.pop %v2046
    %v2063 = vmul.f32 %v2046, %v2062
    %v2064 = vsub.f32 1.0, %v2063
    %v2065 = vmul.f32 %v2062, %v2064
    %v2066 = vadd.f32 %v2062, %v2065
    %vm2067 = vweird.f32 %v2046
    %vm2068 = vweird.f32 %v2062
    %vm2069 = vmor %vm2067, %vm2068
    %v2070 = vsel %vm2069, %v2062, %v2066
    %v2071 = vand.u32 2147483647, %v2046
    %vm2072 = vcmp.eq.f32.partialorder %v2071, 8.507059e+37
    %v2073 = vand.u32 %v2046, 2147483648
    %v2074 = vor.u32 1.1754944e-38, %v2073
    %v2075 = vsel %vm2072, %v2074, %v2070
    %v2076 = vmul.f32 1.0, %v2075
    %v2077 = vtanh.pop %v2038
    %v2079 = vrot.slane %v1977, 6
    %2080 = vrot.lane.b32.xlu0 %v2079, 64
    %v2081 = vpop.permute.xlu0 %2080
    %v2083 = vmul.f32 %v2061, %v2081
    %2085 = vrot.lane.b32.xlu0 %v2077, 64
    %v2086 = vpop.permute.xlu0 %2085
    %v2088 = vmul.f32 %v2061, %v2086
    %2090 = vrot.lane.b32.xlu0 %v2088, 64
    %v2091 = vpop.permute.xlu0 %2090
    %v2093 = vadd.f32 %v2083, %v2091
    %v2094 = vtanh.pop %v2093
    %2096 = vrot.lane.b32.xlu0 %v2094, 64
    %v2097 = vpop.permute.xlu0 %2096
    %v2099 = vmul.f32 %v2076, %v2097
    %v2101 = vrot.slane %v2093, 2
    %2102 = vrot.lane.b32.xlu0 %v2101, 64
    %v2103 = vpop.permute.xlu0 %2102
    %v2105 = vsel %vm979, %v2103, %v1977
    %v2107 = vrot.slane %v2099, 2
    %v2109 = vsel %vm979, %v2107, %v1978
    %v2110 = vsel %vm979, %v2107, 0.0
    %v2111 = vsel %vm346, %v2110, 0.0
    %v2112 = vsel %vm346, 0.0, %v2110
    %v2114 = vsel %vm232, %v2109, 0
    %2116 = vmatpush.msra.mxu0 0.0
    %2117 = vmatpush.msra.mxu0 0.0
    %2118 = vmatpush.msra.mxu0 0.0
    %2119 = vmatpush.msra.mxu0 0.0
    %2120 = vmatpush.msra.mxu0 0.0
    %2121 = vmatpush.msra.mxu0 0.0
    %2122 = vmatpush.msra.mxu0 0.0
    %2123 = vmatpush.msra.mxu0 0.0
    %2124 = vmatpush.msra.mxu0 %v1305
    %2125 = vmatpush.msra.mxu0 %v1303
    %2126 = vmatpush.msra.mxu0 %v1301
    %2127 = vmatpush.msra.mxu0 %v1299
    %2128 = vmatpush.msra.mxu0 %v1297
    %2129 = vmatpush.msra.mxu0 %v1295
    %2130 = vmatpush.msra.mxu0 %v1293
    %2131 = vmatpush.msra.mxu0 %v1291
    %2132 = vmatmul.f32.gmra.mxu0 %v2114
    %v2133 = vpop.f32.mrf.mxu0
    %v2134 = vadd.f32 0.0, %v2133
    %2135 = vdwg.mxu0
    %2136 = vmatpush.msra.mxu0 0.0
    %2137 = vmatpush.msra.mxu0 0.0
    %2138 = vmatpush.msra.mxu0 0.0
    %2139 = vmatpush.msra.mxu0 0.0
    %2140 = vmatpush.msra.mxu0 0.0
    %2141 = vmatpush.msra.mxu0 0.0
    %2142 = vmatpush.msra.mxu0 0.0
    %2143 = vmatpush.msra.mxu0 0.0
    %2144 = vmatpush.msra.mxu0 %v1306
    %2145 = vmatpush.msra.mxu0 %v1304
    %2146 = vmatpush.msra.mxu0 %v1302
    %2147 = vmatpush.msra.mxu0 %v1300
    %2148 = vmatpush.msra.mxu0 %v1298
    %2149 = vmatpush.msra.mxu0 %v1296
    %2150 = vmatpush.msra.mxu0 %v1294
    %2151 = vmatpush.msra.mxu0 %v1292
    %2152 = vmatmul.f32.gmra.mxu0 %v2114
    %v2153 = vpop.f32.mrf.mxu0
    %v2154 = vadd.f32 0.0, %v2153
    %2155 = vdwg.mxu0
    %v2158 = vrot.slane %v2134, 4
    %v2159 = vrot.slane %v2154, 4
    %v2162 = vadd.f32 %v1866, %v2158
    %v2163 = vadd.f32 %v1867, %v2159
    %v2164 = vxor.u32 %v2162, 2147483648
    %v2165 = vxor.u32 %v2163, 2147483648
    %v2166 = vmul.f32 %v2164, 1.442695
    %v2167 = vpow.pop %v2166
    %v2168 = vmul.f32 %v2165, 1.442695
    %v2169 = vpow.pop %v2168
    %v2170 = vadd.f32 %v2167, 1.0
    %v2171 = vadd.f32 %v2169, 1.0
    %v2172 = vrcp.pop %v2170
    %v2173 = vmul.f32 %v2170, %v2172
    %v2174 = vsub.f32 1.0, %v2173
    %v2175 = vmul.f32 %v2172, %v2174
    %v2176 = vadd.f32 %v2172, %v2175
    %vm2177 = vweird.f32 %v2170
    %vm2178 = vweird.f32 %v2172
    %vm2179 = vmor %vm2177, %vm2178
    %v2180 = vsel %vm2179, %v2172, %v2176
    %v2181 = vand.u32 2147483647, %v2170
    %vm2182 = vcmp.eq.f32.partialorder %v2181, 8.507059e+37
    %v2183 = vand.u32 %v2170, 2147483648
    %v2184 = vor.u32 1.1754944e-38, %v2183
    %v2185 = vsel %vm2182, %v2184, %v2180
    %v2186 = vmul.f32 1.0, %v2185
    %v2187 = vrcp.pop %v2171
    %v2188 = vmul.f32 %v2171, %v2187
    %v2189 = vsub.f32 1.0, %v2188
    %v2190 = vmul.f32 %v2187, %v2189
    %v2191 = vadd.f32 %v2187, %v2190
    %vm2192 = vweird.f32 %v2171
    %vm2193 = vweird.f32 %v2187
    %vm2194 = vmor %vm2192, %vm2193
    %v2195 = vsel %vm2194, %v2187, %v2191
    %v2196 = vand.u32 2147483647, %v2171
    %vm2197 = vcmp.eq.f32.partialorder %v2196, 8.507059e+37
    %v2198 = vand.u32 %v2171, 2147483648
    %v2199 = vor.u32 1.1754944e-38, %v2198
    %v2200 = vsel %vm2197, %v2199, %v2195
    %v2201 = vmul.f32 1.0, %v2200
    %v2202 = vtanh.pop %v2163
    %v2204 = vrot.slane %v2105, 4
    %2205 = vrot.lane.b32.xlu0 %v2204, 64
    %v2206 = vpop.permute.xlu0 %2205
    %v2208 = vmul.f32 %v2186, %v2206
    %2210 = vrot.lane.b32.xlu0 %v2202, 64
    %v2211 = vpop.permute.xlu0 %2210
    %v2213 = vmul.f32 %v2186, %v2211
    %2215 = vrot.lane.b32.xlu0 %v2213, 64
    %v2216 = vpop.permute.xlu0 %2215
    %v2218 = vadd.f32 %v2208, %v2216
    %v2219 = vtanh.pop %v2218
    %2221 = vrot.lane.b32.xlu0 %v2219, 64
    %v2222 = vpop.permute.xlu0 %2221
    %v2224 = vmul.f32 %v2201, %v2222
    %v2226 = vrot.slane %v2218, 4
    %2227 = vrot.lane.b32.xlu0 %v2226, 64
    %v2228 = vpop.permute.xlu0 %2227
    %v2230 = vsel %vm1106, %v2228, %v2105
    %v2232 = vrot.slane %v2224, 4
    %v2234 = vsel %vm1106, %v2232, %v2109
    %v2235 = vsel %vm1106, %v2232, 0.0
    %v2236 = vsel %vm346, %v2235, 0.0
    %v2237 = vsel %vm346, 0.0, %v2235
    %v2239 = vsel %vm232, %v2234, 0
    %2241 = vmatpush.msra.mxu0 0.0
    %2242 = vmatpush.msra.mxu0 0.0
    %2243 = vmatpush.msra.mxu0 0.0
    %2244 = vmatpush.msra.mxu0 0.0
    %2245 = vmatpush.msra.mxu0 0.0
    %2246 = vmatpush.msra.mxu0 0.0
    %2247 = vmatpush.msra.mxu0 0.0
    %2248 = vmatpush.msra.mxu0 0.0
    %2249 = vmatpush.msra.mxu0 %v1305
    %2250 = vmatpush.msra.mxu0 %v1303
    %2251 = vmatpush.msra.mxu0 %v1301
    %2252 = vmatpush.msra.mxu0 %v1299
    %2253 = vmatpush.msra.mxu0 %v1297
    %2254 = vmatpush.msra.mxu0 %v1295
    %2255 = vmatpush.msra.mxu0 %v1293
    %2256 = vmatpush.msra.mxu0 %v1291
    %2257 = vmatmul.f32.gmra.mxu0 %v2239
    %v2258 = vpop.f32.mrf.mxu0
    %v2259 = vadd.f32 0.0, %v2258
    %2260 = vdwg.mxu0
    %2261 = vmatpush.msra.mxu0 0.0
    %2262 = vmatpush.msra.mxu0 0.0
    %2263 = vmatpush.msra.mxu0 0.0
    %2264 = vmatpush.msra.mxu0 0.0
    %2265 = vmatpush.msra.mxu0 0.0
    %2266 = vmatpush.msra.mxu0 0.0
    %2267 = vmatpush.msra.mxu0 0.0
    %2268 = vmatpush.msra.mxu0 0.0
    %2269 = vmatpush.msra.mxu0 %v1306
    %2270 = vmatpush.msra.mxu0 %v1304
    %2271 = vmatpush.msra.mxu0 %v1302
    %2272 = vmatpush.msra.mxu0 %v1300
    %2273 = vmatpush.msra.mxu0 %v1298
    %2274 = vmatpush.msra.mxu0 %v1296
    %2275 = vmatpush.msra.mxu0 %v1294
    %2276 = vmatpush.msra.mxu0 %v1292
    %2277 = vmatmul.f32.gmra.mxu0 %v2239
    %v2278 = vpop.f32.mrf.mxu0
    %v2279 = vadd.f32 0.0, %v2278
    %2280 = vdwg.mxu0
    %v2283 = vrot.slane %v2259, 2
    %v2284 = vrot.slane %v2279, 2
    %v2287 = vadd.f32 %v1986, %v2283
    %v2288 = vadd.f32 %v1987, %v2284
    %v2289 = vxor.u32 %v2287, 2147483648
    %v2290 = vxor.u32 %v2288, 2147483648
    %v2291 = vmul.f32 %v2289, 1.442695
    %v2292 = vpow.pop %v2291
    %v2293 = vmul.f32 %v2290, 1.442695
    %v2294 = vpow.pop %v2293
    %v2295 = vadd.f32 %v2292, 1.0
    %v2296 = vadd.f32 %v2294, 1.0
    %v2297 = vrcp.pop %v2295
    %v2298 = vmul.f32 %v2295, %v2297
    %v2299 = vsub.f32 1.0, %v2298
    %v2300 = vmul.f32 %v2297, %v2299
    %v2301 = vadd.f32 %v2297, %v2300
    %vm2302 = vweird.f32 %v2295
    %vm2303 = vweird.f32 %v2297
    %vm2304 = vmor %vm2302, %vm2303
    %v2305 = vsel %vm2304, %v2297, %v2301
    %v2306 = vand.u32 2147483647, %v2295
    %vm2307 = vcmp.eq.f32.partialorder %v2306, 8.507059e+37
    %v2308 = vand.u32 %v2295, 2147483648
    %v2309 = vor.u32 1.1754944e-38, %v2308
    %v2310 = vsel %vm2307, %v2309, %v2305
    %v2311 = vmul.f32 1.0, %v2310
    %v2312 = vrcp.pop %v2296
    %v2313 = vmul.f32 %v2296, %v2312
    %v2314 = vsub.f32 1.0, %v2313
    %v2315 = vmul.f32 %v2312, %v2314
    %v2316 = vadd.f32 %v2312, %v2315
    %vm2317 = vweird.f32 %v2296
    %vm2318 = vweird.f32 %v2312
    %vm2319 = vmor %vm2317, %vm2318
    %v2320 = vsel %vm2319, %v2312, %v2316
    %v2321 = vand.u32 2147483647, %v2296
    %vm2322 = vcmp.eq.f32.partialorder %v2321, 8.507059e+37
    %v2323 = vand.u32 %v2296, 2147483648
    %v2324 = vor.u32 1.1754944e-38, %v2323
    %v2325 = vsel %vm2322, %v2324, %v2320
    %v2326 = vmul.f32 1.0, %v2325
    %v2327 = vtanh.pop %v2288
    %v2329 = vrot.slane %v2230, 2
    %2330 = vrot.lane.b32.xlu0 %v2329, 64
    %v2331 = vpop.permute.xlu0 %2330
    %v2333 = vmul.f32 %v2311, %v2331
    %2335 = vrot.lane.b32.xlu0 %v2327, 64
    %v2336 = vpop.permute.xlu0 %2335
    %v2338 = vmul.f32 %v2311, %v2336
    %2340 = vrot.lane.b32.xlu0 %v2338, 64
    %v2341 = vpop.permute.xlu0 %2340
    %v2343 = vadd.f32 %v2333, %v2341
    %v2344 = vtanh.pop %v2343
    %2346 = vrot.lane.b32.xlu0 %v2344, 64
    %v2347 = vpop.permute.xlu0 %2346
    %v2349 = vmul.f32 %v2326, %v2347
    %v2351 = vrot.slane %v2349, 6
    %v2353 = vsel %vm1233, %v2351, 0.0
    %v2354 = vsel %vm346, %v2353, 0.0
    %v2355 = vsel %vm346, 0.0, %v2353
    %v2356 = vadd.f32 %v1477, %v2355
    %v2357 = vadd.f32 %v1608, %v2237
    %v2358 = vadd.f32 %v1733, %v2112
    %v2359 = vadd.f32 %v1858, %v1981
    %v2360 = vadd.f32 %v1980, %v1859
    %v2361 = vadd.f32 %v2111, %v1734
    %v2362 = vadd.f32 %v2236, %v1609
    %v2363 = vadd.f32 %v2354, %v1478
    %v2365 = vrot.slane %v2357, 6
    %v2368 = vrot.slane %v2358, 4
    %v2371 = vrot.slane %v2359, 2
    %v2374 = vrot.slane %v2361, 6
    %v2377 = vrot.slane %v2362, 4
    %v2380 = vrot.slane %v2363, 2
    %v2382 = vsel %vm1266, %v2356, %v2365
    %v2383 = vsel %vm1268, %v2382, %v2368
    %v2384 = vsel %vm1270, %v2383, %v2371
    %v2385 = vsel %vm1266, %v2360, %v2374
    %v2386 = vsel %vm1268, %v2385, %v2377
    %v2387 = vsel %vm1270, %v2386, %v2380
    %v2388 = vld [vmem:[%s8] sm:$0xff]
    %v2389 = vld [vmem:[%s8 + $0x8] sm:$0xff]
    %v2390 = vld [vmem:[%s8 + $0x10] sm:$0xff]
    %v2391 = vld [vmem:[%s8 + $0x18] sm:$0xff]
    %v2392 = vld [vmem:[%s8 + $0x20] sm:$0xff]
    %v2393 = vld [vmem:[%s8 + $0x28] sm:$0xff]
    %v2394 = vld [vmem:[%s8 + $0x30] sm:$0xff]
    %v2395 = vld [vmem:[%s8 + $0x38] sm:$0xff]
    %v2396 = vld [vmem:[%s9] sm:$0xff]
    %v2397 = vld [vmem:[%s10] sm:$0x1]
    %v2399 = vperm.slane %v2397, 0
    %v2402 = vsel %vm232, %v2384, 0
    %v2405 = vsel %vm232, %v2387, 0
    %2407 = vmatpush.msra.mxu0 0.0
    %2408 = vmatpush.msra.mxu0 0.0
    %2409 = vmatpush.msra.mxu0 0.0
    %2410 = vmatpush.msra.mxu0 0.0
    %2411 = vmatpush.msra.mxu0 0.0
    %2412 = vmatpush.msra.mxu0 0.0
    %2413 = vmatpush.msra.mxu0 0.0
    %2414 = vmatpush.msra.mxu0 0.0
    %2415 = vmatpush.msra.mxu0 %v2395
    %2416 = vmatpush.msra.mxu0 %v2394
    %2417 = vmatpush.msra.mxu0 %v2393
    %2418 = vmatpush.msra.mxu0 %v2392
    %2419 = vmatpush.msra.mxu0 %v2391
    %2420 = vmatpush.msra.mxu0 %v2390
    %2421 = vmatpush.msra.mxu0 %v2389
    %2422 = vmatpush.msra.mxu0 %v2388
    %2423 = vmatmul.f32.gmra.mxu0 %v2402
    %v2424 = vpop.f32.mrf.mxu0
    %v2425 = vadd.f32 %v2399, %v2424
    %2426 = vmatmul.f32.gmra.mxu0 %v2405
    %v2427 = vpop.f32.mrf.mxu0
    %v2428 = vadd.f32 %v2399, %v2427
    %2429 = vdwg.mxu0
    %vm2430 = vcmask 64512
    %v2431 = vsel %vm2430, 0.0, 0
    %2433 = vmatpush.msra.mxu0 0.0
    %2434 = vmatpush.msra.mxu0 0.0
    %2435 = vmatpush.msra.mxu0 0.0
    %2436 = vmatpush.msra.mxu0 0.0
    %2437 = vmatpush.msra.mxu0 0.0
    %2438 = vmatpush.msra.mxu0 0.0
    %2439 = vmatpush.msra.mxu0 0.0
    %2440 = vmatpush.msra.mxu0 0.0
    %2441 = vmatpush.msra.mxu0 0.0
    %2442 = vmatpush.msra.mxu0 0.0
    %2443 = vmatpush.msra.mxu0 0.0
    %2444 = vmatpush.msra.mxu0 0.0
    %2445 = vmatpush.msra.mxu0 0.0
    %2446 = vmatpush.msra.mxu0 0.0
    %2447 = vmatpush.msra.mxu0 0.0
    %2448 = vmatpush.msra.mxu0 %v2396
    %2449 = vmatmul.f32.gmra.mxu0 %v2431
    %v2450 = vpop.f32.mrf.mxu0
    %v2451 = vadd.f32 0.0, %v2450
    %2452 = vdwg.mxu0
    %v2453 = vadd.f32 %v2425, %v2451
    %v2454 = vxor.u32 %v2453, 2147483648
    %v2455 = vmul.f32 %v2454, 1.442695
    %v2456 = vpow.pop %v2455
    %v2457 = vadd.f32 %v2456, 1.0
    %v2458 = vrcp.pop %v2457
    %v2459 = vmul.f32 %v2457, %v2458
    %v2460 = vsub.f32 1.0, %v2459
    %v2461 = vmul.f32 %v2458, %v2460
    %v2462 = vadd.f32 %v2458, %v2461
    %vm2463 = vweird.f32 %v2457
    %vm2464 = vweird.f32 %v2458
    %vm2465 = vmor %vm2463, %vm2464
    %v2466 = vsel %vm2465, %v2458, %v2462
    %v2467 = vand.u32 2147483647, %v2457
    %vm2468 = vcmp.eq.f32.partialorder %v2467, 8.507059e+37
    %v2469 = vand.u32 %v2457, 2147483648
    %v2470 = vor.u32 1.1754944e-38, %v2469
    %v2471 = vsel %vm2468, %v2470, %v2466
    %v2472 = vmul.f32 1.0, %v2471
    %v2473 = vtanh.pop %v2453
    %v2474 = vmul.f32 %v2472, 0.0
    %2476 = vrot.lane.b32.xlu0 %v2473, 104
    %v2477 = vpop.permute.xlu0 %2476
    %v2479 = vmul.f32 %v2472, %v2477
    %2481 = vrot.lane.b32.xlu0 %v2479, 8
    %v2482 = vpop.permute.xlu0 %2481
    %v2484 = vadd.f32 %v2474, %v2482
    %v2485 = vtanh.pop %v2484
    %2487 = vrot.lane.b32.xlu0 %v2485, 8
    %v2488 = vpop.permute.xlu0 %2487
    %v2490 = vmul.f32 %v2472, %v2488
    %v2491 = vsel %vm101, 1, 0
    %2492 = vset.pattern.permute.xlu0 0
    %2493 = vperm.xlu0 %2492, %v2491
    %v2494 = vpop.permute.xlu0 %2493
    %vm2495 = vcmp.eq.s32.totalorder %v2494, 1
    %v2496 = vsel %vm2495, %v2484, 0.0
    %v2497 = vsel %vm2495, %v2490, 0.0
    %2499 = vrot.lane.b32.xlu0 %v2497, 112
    %v2500 = vpop.permute.xlu0 %2499
    %v2501 = vsel %vm2430, %v2500, 0
    %2503 = vmatpush.msra.mxu0 0.0
    %2504 = vmatpush.msra.mxu0 0.0
    %2505 = vmatpush.msra.mxu0 0.0
    %2506 = vmatpush.msra.mxu0 0.0
    %2507 = vmatpush.msra.mxu0 0.0
    %2508 = vmatpush.msra.mxu0 0.0
    %2509 = vmatpush.msra.mxu0 0.0
    %2510 = vmatpush.msra.mxu0 0.0
    %2511 = vmatpush.msra.mxu0 0.0
    %2512 = vmatpush.msra.mxu0 0.0
    %2513 = vmatpush.msra.mxu0 0.0
    %2514 = vmatpush.msra.mxu0 0.0
    %2515 = vmatpush.msra.mxu0 0.0
    %2516 = vmatpush.msra.mxu0 0.0
    %2517 = vmatpush.msra.mxu0 0.0
    %2518 = vmatpush.msra.mxu0 %v2396
    %2519 = vmatmul.f32.gmra.mxu0 %v2501
    %v2520 = vpop.f32.mrf.mxu0
    %v2521 = vadd.f32 0.0, %v2520
    %2522 = vdwg.mxu0
    %v2524 = vrot.slane %v2521, 6
    %v2526 = vadd.f32 %v2425, %v2524
    %v2527 = vxor.u32 %v2526, 2147483648
    %v2528 = vmul.f32 %v2527, 1.442695
    %v2529 = vpow.pop %v2528
    %v2530 = vadd.f32 %v2529, 1.0
    %v2531 = vrcp.pop %v2530
    %v2532 = vmul.f32 %v2530, %v2531
    %v2533 = vsub.f32 1.0, %v2532
    %v2534 = vmul.f32 %v2531, %v2533
    %v2535 = vadd.f32 %v2531, %v2534
    %vm2536 = vweird.f32 %v2530
    %vm2537 = vweird.f32 %v2531
    %vm2538 = vmor %vm2536, %vm2537
    %v2539 = vsel %vm2538, %v2531, %v2535
    %v2540 = vand.u32 2147483647, %v2530
    %vm2541 = vcmp.eq.f32.partialorder %v2540, 8.507059e+37
    %v2542 = vand.u32 %v2530, 2147483648
    %v2543 = vor.u32 1.1754944e-38, %v2542
    %v2544 = vsel %vm2541, %v2543, %v2539
    %v2545 = vmul.f32 1.0, %v2544
    %v2546 = vtanh.pop %v2526
    %v2548 = vrot.slane %v2496, 6
    %v2550 = vmul.f32 %v2545, %v2548
    %2552 = vrot.lane.b32.xlu0 %v2546, 104
    %v2553 = vpop.permute.xlu0 %2552
    %v2555 = vmul.f32 %v2545, %v2553
    %2557 = vrot.lane.b32.xlu0 %v2555, 8
    %v2558 = vpop.permute.xlu0 %2557
    %v2560 = vadd.f32 %v2550, %v2558
    %v2561 = vtanh.pop %v2560
    %2563 = vrot.lane.b32.xlu0 %v2561, 8
    %v2564 = vpop.permute.xlu0 %2563
    %v2566 = vmul.f32 %v2545, %v2564
    %v2567 = vsel %vm102, 1, 0
    %2568 = vset.pattern.permute.xlu0 0
    %2569 = vperm.xlu0 %2568, %v2567
    %v2570 = vpop.permute.xlu0 %2569
    %vm2571 = vcmp.eq.s32.totalorder %v2570, 1
    %v2573 = vrot.slane %v2560, 2
    %2574 = vrot.lane.b32.xlu0 %v2573, 120
    %v2575 = vpop.permute.xlu0 %2574
    %2577 = vrot.lane.b32.xlu0 %v2496, 120
    %v2578 = vpop.permute.xlu0 %2577
    %v2580 = vsel %vm2571, %v2575, %v2578
    %v2582 = vrot.slane %v2566, 2
    %2583 = vrot.lane.b32.xlu0 %v2582, 112
    %v2584 = vpop.permute.xlu0 %2583
    %v2587 = vsel %vm2571, %v2584, %v2500
    %v2588 = vsel %vm2571, %v2584, 0.0
    %v2590 = vsel %vm2430, %v2587, 0
    %2592 = vmatpush.msra.mxu0 0.0
    %2593 = vmatpush.msra.mxu0 0.0
    %2594 = vmatpush.msra.mxu0 0.0
    %2595 = vmatpush.msra.mxu0 0.0
    %2596 = vmatpush.msra.mxu0 0.0
    %2597 = vmatpush.msra.mxu0 0.0
    %2598 = vmatpush.msra.mxu0 0.0
    %2599 = vmatpush.msra.mxu0 0.0
    %2600 = vmatpush.msra.mxu0 0.0
    %2601 = vmatpush.msra.mxu0 0.0
    %2602 = vmatpush.msra.mxu0 0.0
    %2603 = vmatpush.msra.mxu0 0.0
    %2604 = vmatpush.msra.mxu0 0.0
    %2605 = vmatpush.msra.mxu0 0.0
    %2606 = vmatpush.msra.mxu0 0.0
    %2607 = vmatpush.msra.mxu0 %v2396
    %2608 = vmatmul.f32.gmra.mxu0 %v2590
    %v2609 = vpop.f32.mrf.mxu0
    %v2610 = vadd.f32 0.0, %v2609
    %2611 = vdwg.mxu0
    %v2613 = vrot.slane %v2610, 4
    %v2615 = vadd.f32 %v2425, %v2613
    %v2616 = vxor.u32 %v2615, 2147483648
    %v2617 = vmul.f32 %v2616, 1.442695
    %v2618 = vpow.pop %v2617
    %v2619 = vadd.f32 %v2618, 1.0
    %v2620 = vrcp.pop %v2619
    %v2621 = vmul.f32 %v2619, %v2620
    %v2622 = vsub.f32 1.0, %v2621
    %v2623 = vmul.f32 %v2620, %v2622
    %v2624 = vadd.f32 %v2620, %v2623
    %vm2625 = vweird.f32 %v2619
    %vm2626 = vweird.f32 %v2620
    %vm2627 = vmor %vm2625, %vm2626
    %v2628 = vsel %vm2627, %v2620, %v2624
    %v2629 = vand.u32 2147483647, %v2619
    %vm2630 = vcmp.eq.f32.partialorder %v2629, 8.507059e+37
    %v2631 = vand.u32 %v2619, 2147483648
    %v2632 = vor.u32 1.1754944e-38, %v2631
    %v2633 = vsel %vm2630, %v2632, %v2628
    %v2634 = vmul.f32 1.0, %v2633
    %v2635 = vtanh.pop %v2615
    %v2637 = vrot.slane %v2580, 4
    %2638 = vrot.lane.b32.xlu0 %v2637, 8
    %v2639 = vpop.permute.xlu0 %2638
    %v2641 = vmul.f32 %v2634, %v2639
    %2643 = vrot.lane.b32.xlu0 %v2635, 104
    %v2644 = vpop.permute.xlu0 %2643
    %v2646 = vmul.f32 %v2634, %v2644
    %2648 = vrot.lane.b32.xlu0 %v2646, 8
    %v2649 = vpop.permute.xlu0 %2648
    %v2651 = vadd.f32 %v2641, %v2649
    %v2652 = vtanh.pop %v2651
    %2654 = vrot.lane.b32.xlu0 %v2652, 8
    %v2655 = vpop.permute.xlu0 %2654
    %v2657 = vmul.f32 %v2634, %v2655
    %v2658 = vsel %vm103, 1, 0
    %2659 = vset.pattern.permute.xlu0 0
    %2660 = vperm.xlu0 %2659, %v2658
    %v2661 = vpop.permute.xlu0 %2660
    %vm2662 = vcmp.eq.s32.totalorder %v2661, 1
    %v2664 = vrot.slane %v2651, 4
    %2665 = vrot.lane.b32.xlu0 %v2664, 120
    %v2666 = vpop.permute.xlu0 %2665
    %v2668 = vsel %vm2662, %v2666, %v2580
    %v2670 = vrot.slane %v2657, 4
    %2671 = vrot.lane.b32.xlu0 %v2670, 112
    %v2672 = vpop.permute.xlu0 %2671
    %v2674 = vsel %vm2662, %v2672, %v2587
    %v2675 = vsel %vm2662, %v2672, 0.0
    %v2677 = vsel %vm2430, %v2674, 0
    %2679 = vmatpush.msra.mxu0 0.0
    %2680 = vmatpush.msra.mxu0 0.0
    %2681 = vmatpush.msra.mxu0 0.0
    %2682 = vmatpush.msra.mxu0 0.0
    %2683 = vmatpush.msra.mxu0 0.0
    %2684 = vmatpush.msra.mxu0 0.0
    %2685 = vmatpush.msra.mxu0 0.0
    %2686 = vmatpush.msra.mxu0 0.0
    %2687 = vmatpush.msra.mxu0 0.0
    %2688 = vmatpush.msra.mxu0 0.0
    %2689 = vmatpush.msra.mxu0 0.0
    %2690 = vmatpush.msra.mxu0 0.0
    %2691 = vmatpush.msra.mxu0 0.0
    %2692 = vmatpush.msra.mxu0 0.0
    %2693 = vmatpush.msra.mxu0 0.0
    %2694 = vmatpush.msra.mxu0 %v2396
    %2695 = vmatmul.f32.gmra.mxu0 %v2677
    %v2696 = vpop.f32.mrf.mxu0
    %v2697 = vadd.f32 0.0, %v2696
    %2698 = vdwg.mxu0
    %v2700 = vrot.slane %v2697, 2
    %v2702 = vadd.f32 %v2425, %v2700
    %v2703 = vxor.u32 %v2702, 2147483648
    %v2704 = vmul.f32 %v2703, 1.442695
    %v2705 = vpow.pop %v2704
    %v2706 = vadd.f32 %v2705, 1.0
    %v2707 = vrcp.pop %v2706
    %v2708 = vmul.f32 %v2706, %v2707
    %v2709 = vsub.f32 1.0, %v2708
    %v2710 = vmul.f32 %v2707, %v2709
    %v2711 = vadd.f32 %v2707, %v2710
    %vm2712 = vweird.f32 %v2706
    %vm2713 = vweird.f32 %v2707
    %vm2714 = vmor %vm2712, %vm2713
    %v2715 = vsel %vm2714, %v2707, %v2711
    %v2716 = vand.u32 2147483647, %v2706
    %vm2717 = vcmp.eq.f32.partialorder %v2716, 8.507059e+37
    %v2718 = vand.u32 %v2706, 2147483648
    %v2719 = vor.u32 1.1754944e-38, %v2718
    %v2720 = vsel %vm2717, %v2719, %v2715
    %v2721 = vmul.f32 1.0, %v2720
    %v2722 = vtanh.pop %v2702
    %v2724 = vrot.slane %v2668, 2
    %2725 = vrot.lane.b32.xlu0 %v2724, 8
    %v2726 = vpop.permute.xlu0 %2725
    %v2728 = vmul.f32 %v2721, %v2726
    %2730 = vrot.lane.b32.xlu0 %v2722, 104
    %v2731 = vpop.permute.xlu0 %2730
    %v2733 = vmul.f32 %v2721, %v2731
    %2735 = vrot.lane.b32.xlu0 %v2733, 8
    %v2736 = vpop.permute.xlu0 %2735
    %v2738 = vadd.f32 %v2728, %v2736
    %v2739 = vtanh.pop %v2738
    %2741 = vrot.lane.b32.xlu0 %v2739, 8
    %v2742 = vpop.permute.xlu0 %2741
    %v2744 = vmul.f32 %v2721, %v2742
    %v2745 = vsel %vm104, 1, 0
    %2746 = vset.pattern.permute.xlu0 0
    %2747 = vperm.xlu0 %2746, %v2745
    %v2748 = vpop.permute.xlu0 %2747
    %vm2749 = vcmp.eq.s32.totalorder %v2748, 1
    %v2751 = vrot.slane %v2738, 6
    %2752 = vrot.lane.b32.xlu0 %v2751, 120
    %v2753 = vpop.permute.xlu0 %2752
    %v2755 = vsel %vm2749, %v2753, %v2668
    %v2757 = vrot.slane %v2744, 6
    %2758 = vrot.lane.b32.xlu0 %v2757, 112
    %v2759 = vpop.permute.xlu0 %2758
    %v2761 = vsel %vm2749, %v2759, %v2674
    %v2762 = vsel %vm2749, %v2759, 0.0
    %v2764 = vsel %vm2430, %v2761, 0
    %2766 = vmatpush.msra.mxu0 0.0
    %2767 = vmatpush.msra.mxu0 0.0
    %2768 = vmatpush.msra.mxu0 0.0
    %2769 = vmatpush.msra.mxu0 0.0
    %2770 = vmatpush.msra.mxu0 0.0
    %2771 = vmatpush.msra.mxu0 0.0
    %2772 = vmatpush.msra.mxu0 0.0
    %2773 = vmatpush.msra.mxu0 0.0
    %2774 = vmatpush.msra.mxu0 0.0
    %2775 = vmatpush.msra.mxu0 0.0
    %2776 = vmatpush.msra.mxu0 0.0
    %2777 = vmatpush.msra.mxu0 0.0
    %2778 = vmatpush.msra.mxu0 0.0
    %2779 = vmatpush.msra.mxu0 0.0
    %2780 = vmatpush.msra.mxu0 0.0
    %2781 = vmatpush.msra.mxu0 %v2396
    %2782 = vmatmul.f32.gmra.mxu0 %v2764
    %v2783 = vpop.f32.mrf.mxu0
    %v2784 = vadd.f32 0.0, %v2783
    %2785 = vdwg.mxu0
    %v2786 = vadd.f32 %v2428, %v2784
    %v2787 = vxor.u32 %v2786, 2147483648
    %v2788 = vmul.f32 %v2787, 1.442695
    %v2789 = vpow.pop %v2788
    %v2790 = vadd.f32 %v2789, 1.0
    %v2791 = vrcp.pop %v2790
    %v2792 = vmul.f32 %v2790, %v2791
    %v2793 = vsub.f32 1.0, %v2792
    %v2794 = vmul.f32 %v2791, %v2793
    %v2795 = vadd.f32 %v2791, %v2794
    %vm2796 = vweird.f32 %v2790
    %vm2797 = vweird.f32 %v2791
    %vm2798 = vmor %vm2796, %vm2797
    %v2799 = vsel %vm2798, %v2791, %v2795
    %v2800 = vand.u32 2147483647, %v2790
    %vm2801 = vcmp.eq.f32.partialorder %v2800, 8.507059e+37
    %v2802 = vand.u32 %v2790, 2147483648
    %v2803 = vor.u32 1.1754944e-38, %v2802
    %v2804 = vsel %vm2801, %v2803, %v2799
    %v2805 = vmul.f32 1.0, %v2804
    %v2806 = vtanh.pop %v2786
    %2808 = vrot.lane.b32.xlu0 %v2755, 8
    %v2809 = vpop.permute.xlu0 %2808
    %v2811 = vmul.f32 %v2805, %v2809
    %2813 = vrot.lane.b32.xlu0 %v2806, 104
    %v2814 = vpop.permute.xlu0 %2813
    %v2816 = vmul.f32 %v2805, %v2814
    %2818 = vrot.lane.b32.xlu0 %v2816, 8
    %v2819 = vpop.permute.xlu0 %2818
    %v2821 = vadd.f32 %v2811, %v2819
    %v2822 = vtanh.pop %v2821
    %2824 = vrot.lane.b32.xlu0 %v2822, 8
    %v2825 = vpop.permute.xlu0 %2824
    %v2827 = vmul.f32 %v2805, %v2825
    %v2828 = vsel %vm105, 1, 0
    %2829 = vset.pattern.permute.xlu0 0
    %2830 = vperm.xlu0 %2829, %v2828
    %v2831 = vpop.permute.xlu0 %2830
    %vm2832 = vcmp.eq.s32.totalorder %v2831, 1
    %v2833 = vsel %vm2832, %v2821, %v2809
    %2834 = vrot.lane.b32.xlu0 %v2761, 16
    %v2835 = vpop.permute.xlu0 %2834
    %v2837 = vsel %vm2832, %v2827, %v2835
    %v2838 = vsel %vm2832, %v2827, 0.0
    %2840 = vrot.lane.b32.xlu0 %v2837, 112
    %v2841 = vpop.permute.xlu0 %2840
    %v2842 = vsel %vm2430, %v2841, 0
    %2844 = vmatpush.msra.mxu0 0.0
    %2845 = vmatpush.msra.mxu0 0.0
    %2846 = vmatpush.msra.mxu0 0.0
    %2847 = vmatpush.msra.mxu0 0.0
    %2848 = vmatpush.msra.mxu0 0.0
    %2849 = vmatpush.msra.mxu0 0.0
    %2850 = vmatpush.msra.mxu0 0.0
    %2851 = vmatpush.msra.mxu0 0.0
    %2852 = vmatpush.msra.mxu0 0.0
    %2853 = vmatpush.msra.mxu0 0.0
    %2854 = vmatpush.msra.mxu0 0.0
    %2855 = vmatpush.msra.mxu0 0.0
    %2856 = vmatpush.msra.mxu0 0.0
    %2857 = vmatpush.msra.mxu0 0.0
    %2858 = vmatpush.msra.mxu0 0.0
    %2859 = vmatpush.msra.mxu0 %v2396
    %2860 = vmatmul.f32.gmra.mxu0 %v2842
    %v2861 = vpop.f32.mrf.mxu0
    %v2862 = vadd.f32 0.0, %v2861
    %2863 = vdwg.mxu0
    %v2865 = vrot.slane %v2862, 6
    %v2867 = vadd.f32 %v2428, %v2865
    %v2868 = vxor.u32 %v2867, 2147483648
    %v2869 = vmul.f32 %v2868, 1.442695
    %v2870 = vpow.pop %v2869
    %v2871 = vadd.f32 %v2870, 1.0
    %v2872 = vrcp.pop %v2871
    %v2873 = vmul.f32 %v2871, %v2872
    %v2874 = vsub.f32 1.0, %v2873
    %v2875 = vmul.f32 %v2872, %v2874
    %v2876 = vadd.f32 %v2872, %v2875
    %vm2877 = vweird.f32 %v2871
    %vm2878 = vweird.f32 %v2872
    %vm2879 = vmor %vm2877, %vm2878
    %v2880 = vsel %vm2879, %v2872, %v2876
    %v2881 = vand.u32 2147483647, %v2871
    %vm2882 = vcmp.eq.f32.partialorder %v2881, 8.507059e+37
    %v2883 = vand.u32 %v2871, 2147483648
    %v2884 = vor.u32 1.1754944e-38, %v2883
    %v2885 = vsel %vm2882, %v2884, %v2880
    %v2886 = vmul.f32 1.0, %v2885
    %v2887 = vtanh.pop %v2867
    %v2889 = vrot.slane %v2833, 6
    %v2891 = vmul.f32 %v2886, %v2889
    %2893 = vrot.lane.b32.xlu0 %v2887, 104
    %v2894 = vpop.permute.xlu0 %2893
    %v2896 = vmul.f32 %v2886, %v2894
    %2898 = vrot.lane.b32.xlu0 %v2896, 8
    %v2899 = vpop.permute.xlu0 %2898
    %v2901 = vadd.f32 %v2891, %v2899
    %v2902 = vtanh.pop %v2901
    %2904 = vrot.lane.b32.xlu0 %v2902, 8
    %v2905 = vpop.permute.xlu0 %2904
    %v2907 = vmul.f32 %v2886, %v2905
    %v2908 = vsel %vm106, 1, 0
    %2909 = vset.pattern.permute.xlu0 0
    %2910 = vperm.xlu0 %2909, %v2908
    %v2911 = vpop.permute.xlu0 %2910
    %vm2912 = vcmp.eq.s32.totalorder %v2911, 1
    %v2914 = vrot.slane %v2901, 2
    %2915 = vrot.lane.b32.xlu0 %v2914, 120
    %v2916 = vpop.permute.xlu0 %2915
    %2918 = vrot.lane.b32.xlu0 %v2833, 120
    %v2919 = vpop.permute.xlu0 %2918
    %v2921 = vsel %vm2912, %v2916, %v2919
    %v2923 = vrot.slane %v2907, 2
    %2924 = vrot.lane.b32.xlu0 %v2923, 112
    %v2925 = vpop.permute.xlu0 %2924
    %v2928 = vsel %vm2912, %v2925, %v2841
    %v2929 = vsel %vm2912, %v2925, 0.0
    %v2931 = vsel %vm2430, %v2928, 0
    %2933 = vmatpush.msra.mxu0 0.0
    %2934 = vmatpush.msra.mxu0 0.0
    %2935 = vmatpush.msra.mxu0 0.0
    %2936 = vmatpush.msra.mxu0 0.0
    %2937 = vmatpush.msra.mxu0 0.0
    %2938 = vmatpush.msra.mxu0 0.0
    %2939 = vmatpush.msra.mxu0 0.0
    %2940 = vmatpush.msra.mxu0 0.0
    %2941 = vmatpush.msra.mxu0 0.0
    %2942 = vmatpush.msra.mxu0 0.0
    %2943 = vmatpush.msra.mxu0 0.0
    %2944 = vmatpush.msra.mxu0 0.0
    %2945 = vmatpush.msra.mxu0 0.0
    %2946 = vmatpush.msra.mxu0 0.0
    %2947 = vmatpush.msra.mxu0 0.0
    %2948 = vmatpush.msra.mxu0 %v2396
    %2949 = vmatmul.f32.gmra.mxu0 %v2931
    %v2950 = vpop.f32.mrf.mxu0
    %v2951 = vadd.f32 0.0, %v2950
    %2952 = vdwg.mxu0
    %v2954 = vrot.slane %v2951, 4
    %v2956 = vadd.f32 %v2428, %v2954
    %v2957 = vxor.u32 %v2956, 2147483648
    %v2958 = vmul.f32 %v2957, 1.442695
    %v2959 = vpow.pop %v2958
    %v2960 = vadd.f32 %v2959, 1.0
    %v2961 = vrcp.pop %v2960
    %v2962 = vmul.f32 %v2960, %v2961
    %v2963 = vsub.f32 1.0, %v2962
    %v2964 = vmul.f32 %v2961, %v2963
    %v2965 = vadd.f32 %v2961, %v2964
    %vm2966 = vweird.f32 %v2960
    %vm2967 = vweird.f32 %v2961
    %vm2968 = vmor %vm2966, %vm2967
    %v2969 = vsel %vm2968, %v2961, %v2965
    %v2970 = vand.u32 2147483647, %v2960
    %vm2971 = vcmp.eq.f32.partialorder %v2970, 8.507059e+37
    %v2972 = vand.u32 %v2960, 2147483648
    %v2973 = vor.u32 1.1754944e-38, %v2972
    %v2974 = vsel %vm2971, %v2973, %v2969
    %v2975 = vmul.f32 1.0, %v2974
    %v2976 = vtanh.pop %v2956
    %v2978 = vrot.slane %v2921, 4
    %2979 = vrot.lane.b32.xlu0 %v2978, 8
    %v2980 = vpop.permute.xlu0 %2979
    %v2982 = vmul.f32 %v2975, %v2980
    %2984 = vrot.lane.b32.xlu0 %v2976, 104
    %v2985 = vpop.permute.xlu0 %2984
    %v2987 = vmul.f32 %v2975, %v2985
    %2989 = vrot.lane.b32.xlu0 %v2987, 8
    %v2990 = vpop.permute.xlu0 %2989
    %v2992 = vadd.f32 %v2982, %v2990
    %v2993 = vtanh.pop %v2992
    %2995 = vrot.lane.b32.xlu0 %v2993, 8
    %v2996 = vpop.permute.xlu0 %2995
    %v2998 = vmul.f32 %v2975, %v2996
    %v2999 = vsel %vm107, 1, 0
    %3000 = vset.pattern.permute.xlu0 0
    %3001 = vperm.xlu0 %3000, %v2999
    %v3002 = vpop.permute.xlu0 %3001
    %vm3003 = vcmp.eq.s32.totalorder %v3002, 1
    %v3005 = vrot.slane %v2992, 4
    %3006 = vrot.lane.b32.xlu0 %v3005, 120
    %v3007 = vpop.permute.xlu0 %3006
    %v3009 = vsel %vm3003, %v3007, %v2921
    %v3011 = vrot.slane %v2998, 4
    %3012 = vrot.lane.b32.xlu0 %v3011, 112
    %v3013 = vpop.permute.xlu0 %3012
    %v3015 = vsel %vm3003, %v3013, %v2928
    %v3016 = vsel %vm3003, %v3013, 0.0
    %v3018 = vsel %vm2430, %v3015, 0
    %3020 = vmatpush.msra.mxu0 0.0
    %3021 = vmatpush.msra.mxu0 0.0
    %3022 = vmatpush.msra.mxu0 0.0
    %3023 = vmatpush.msra.mxu0 0.0
    %3024 = vmatpush.msra.mxu0 0.0
    %3025 = vmatpush.msra.mxu0 0.0
    %3026 = vmatpush.msra.mxu0 0.0
    %3027 = vmatpush.msra.mxu0 0.0
    %3028 = vmatpush.msra.mxu0 0.0
    %3029 = vmatpush.msra.mxu0 0.0
    %3030 = vmatpush.msra.mxu0 0.0
    %3031 = vmatpush.msra.mxu0 0.0
    %3032 = vmatpush.msra.mxu0 0.0
    %3033 = vmatpush.msra.mxu0 0.0
    %3034 = vmatpush.msra.mxu0 0.0
    %3035 = vmatpush.msra.mxu0 %v2396
    %3036 = vmatmul.f32.gmra.mxu0 %v3018
    %v3037 = vpop.f32.mrf.mxu0
    %v3038 = vadd.f32 0.0, %v3037
    %3039 = vdwg.mxu0
    %v3041 = vrot.slane %v3038, 2
    %v3043 = vadd.f32 %v2428, %v3041
    %v3044 = vxor.u32 %v3043, 2147483648
    %v3045 = vmul.f32 %v3044, 1.442695
    %v3046 = vpow.pop %v3045
    %v3047 = vadd.f32 %v3046, 1.0
    %v3048 = vrcp.pop %v3047
    %v3049 = vmul.f32 %v3047, %v3048
    %v3050 = vsub.f32 1.0, %v3049
    %v3051 = vmul.f32 %v3048, %v3050
    %v3052 = vadd.f32 %v3048, %v3051
    %vm3053 = vweird.f32 %v3047
    %vm3054 = vweird.f32 %v3048
    %vm3055 = vmor %vm3053, %vm3054
    %v3056 = vsel %vm3055, %v3048, %v3052
    %v3057 = vand.u32 2147483647, %v3047
    %vm3058 = vcmp.eq.f32.partialorder %v3057, 8.507059e+37
    %v3059 = vand.u32 %v3047, 2147483648
    %v3060 = vor.u32 1.1754944e-38, %v3059
    %v3061 = vsel %vm3058, %v3060, %v3056
    %v3062 = vmul.f32 1.0, %v3061
    %v3063 = vtanh.pop %v3043
    %v3065 = vrot.slane %v3009, 2
    %3066 = vrot.lane.b32.xlu0 %v3065, 8
    %v3067 = vpop.permute.xlu0 %3066
    %v3069 = vmul.f32 %v3062, %v3067
    %3071 = vrot.lane.b32.xlu0 %v3063, 104
    %v3072 = vpop.permute.xlu0 %3071
    %v3074 = vmul.f32 %v3062, %v3072
    %3076 = vrot.lane.b32.xlu0 %v3074, 8
    %v3077 = vpop.permute.xlu0 %3076
    %v3079 = vadd.f32 %v3069, %v3077
    %v3080 = vtanh.pop %v3079
    %3082 = vrot.lane.b32.xlu0 %v3080, 8
    %v3083 = vpop.permute.xlu0 %3082
    %v3085 = vmul.f32 %v3062, %v3083
    %v3086 = vsel %vm108, 1, 0
    %3087 = vset.pattern.permute.xlu0 0
    %3088 = vperm.xlu0 %3087, %v3086
    %v3089 = vpop.permute.xlu0 %3088
    %vm3090 = vcmp.eq.s32.totalorder %v3089, 1
    %v3092 = vrot.slane %v3085, 6
    %3093 = vrot.lane.b32.xlu0 %v3092, 112
    %v3094 = vpop.permute.xlu0 %3093
    %v3096 = vsel %vm3090, %v3094, 0.0
    %v3098 = vrot.slane %v2588, 6
    %3099 = vrot.lane.b32.xlu0 %v3098, 16
    %v3100 = vpop.permute.xlu0 %3099
    %v3103 = vrot.slane %v2675, 4
    %3104 = vrot.lane.b32.xlu0 %v3103, 16
    %v3105 = vpop.permute.xlu0 %3104
    %v3108 = vrot.slane %v2762, 2
    %3109 = vrot.lane.b32.xlu0 %v3108, 16
    %v3110 = vpop.permute.xlu0 %3109
    %v3113 = vrot.slane %v2929, 6
    %3114 = vrot.lane.b32.xlu0 %v3113, 16
    %v3115 = vpop.permute.xlu0 %3114
    %v3118 = vrot.slane %v3016, 4
    %3119 = vrot.lane.b32.xlu0 %v3118, 16
    %v3120 = vpop.permute.xlu0 %3119
    %v3123 = vrot.slane %v3096, 2
    %3124 = vrot.lane.b32.xlu0 %v3123, 16
    %v3125 = vpop.permute.xlu0 %3124
    %v3127 = vsel %vm1266, %v2497, %v3100
    %v3128 = vsel %vm1268, %v3127, %v3105
    %v3129 = vsel %vm1270, %v3128, %v3110
    %v3130 = vsel %vm1266, %v2838, %v3115
    %v3131 = vsel %vm1268, %v3130, %v3120
    %v3132 = vsel %vm1270, %v3131, %v3125
    %v3133 = vld [vmem:[%s11] sm:$0xff]
    %v3134 = vld [vmem:[%s12] sm:$0xff]
    %v3135 = vld [vmem:[%s13] sm:$0x1]
    %v3137 = vperm.slane %v3135, 0
    %3141 = vrot.lane.b32.xlu0 %v3129, 112
    %v3142 = vpop.permute.xlu0 %3141
    %3143 = vrot.lane.b32.xlu0 %v3132, 112
    %v3144 = vpop.permute.xlu0 %3143
    %v3145 = vsel %vm2430, %v3142, 0
    %v3147 = vsel %vm2430, %v3144, 0
    %3149 = vmatpush.msra.mxu0 0.0
    %3150 = vmatpush.msra.mxu0 0.0
    %3151 = vmatpush.msra.mxu0 0.0
    %3152 = vmatpush.msra.mxu0 0.0
    %3153 = vmatpush.msra.mxu0 0.0
    %3154 = vmatpush.msra.mxu0 0.0
    %3155 = vmatpush.msra.mxu0 0.0
    %3156 = vmatpush.msra.mxu0 0.0
    %3157 = vmatpush.msra.mxu0 0.0
    %3158 = vmatpush.msra.mxu0 0.0
    %3159 = vmatpush.msra.mxu0 0.0
    %3160 = vmatpush.msra.mxu0 0.0
    %3161 = vmatpush.msra.mxu0 0.0
    %3162 = vmatpush.msra.mxu0 0.0
    %3163 = vmatpush.msra.mxu0 0.0
    %3164 = vmatpush.msra.mxu0 %v3133
    %3165 = vmatmul.f32.gmra.mxu0 %v3145
    %v3166 = vpop.f32.mrf.mxu0
    %v3167 = vadd.f32 %v3137, %v3166
    %3168 = vmatmul.f32.gmra.mxu0 %v3147
    %v3169 = vpop.f32.mrf.mxu0
    %v3170 = vadd.f32 %v3137, %v3169
    %3171 = vdwg.mxu0
    %3172 = vmatpush.msra.mxu0 0.0
    %3173 = vmatpush.msra.mxu0 0.0
    %3174 = vmatpush.msra.mxu0 0.0
    %3175 = vmatpush.msra.mxu0 0.0
    %3176 = vmatpush.msra.mxu0 0.0
    %3177 = vmatpush.msra.mxu0 0.0
    %3178 = vmatpush.msra.mxu0 0.0
    %3179 = vmatpush.msra.mxu0 0.0
    %3180 = vmatpush.msra.mxu0 0.0
    %3181 = vmatpush.msra.mxu0 0.0
    %3182 = vmatpush.msra.mxu0 0.0
    %3183 = vmatpush.msra.mxu0 0.0
    %3184 = vmatpush.msra.mxu0 0.0
    %3185 = vmatpush.msra.mxu0 0.0
    %3186 = vmatpush.msra.mxu0 0.0
    %3187 = vmatpush.msra.mxu0 %v3134
    %3188 = vmatmul.f32.gmra.mxu0 %v2431
    %v3189 = vpop.f32.mrf.mxu0
    %v3190 = vadd.f32 0.0, %v3189
    %3191 = vdwg.mxu0
    %v3192 = vadd.f32 %v3167, %v3190
    %v3193 = vxor.u32 %v3192, 2147483648
    %v3194 = vmul.f32 %v3193, 1.442695
    %v3195 = vpow.pop %v3194
    %v3196 = vadd.f32 %v3195, 1.0
    %v3197 = vrcp.pop %v3196
    %v3198 = vmul.f32 %v3196, %v3197
    %v3199 = vsub.f32 1.0, %v3198
    %v3200 = vmul.f32 %v3197, %v3199
    %v3201 = vadd.f32 %v3197, %v3200
    %vm3202 = vweird.f32 %v3196
    %vm3203 = vweird.f32 %v3197
    %vm3204 = vmor %vm3202, %vm3203
    %v3205 = vsel %vm3204, %v3197, %v3201
    %v3206 = vand.u32 2147483647, %v3196
    %vm3207 = vcmp.eq.f32.partialorder %v3206, 8.507059e+37
    %v3208 = vand.u32 %v3196, 2147483648
    %v3209 = vor.u32 1.1754944e-38, %v3208
    %v3210 = vsel %vm3207, %v3209, %v3205
    %v3211 = vmul.f32 1.0, %v3210
    %v3212 = vtanh.pop %v3192
    %v3213 = vmul.f32 %v3211, 0.0
    %3215 = vrot.lane.b32.xlu0 %v3212, 104
    %v3216 = vpop.permute.xlu0 %3215
    %v3218 = vmul.f32 %v3211, %v3216
    %3220 = vrot.lane.b32.xlu0 %v3218, 8
    %v3221 = vpop.permute.xlu0 %3220
    %v3223 = vadd.f32 %v3213, %v3221
    %v3224 = vtanh.pop %v3223
    %3226 = vrot.lane.b32.xlu0 %v3224, 8
    %v3227 = vpop.permute.xlu0 %3226
    %v3229 = vmul.f32 %v3211, %v3227
    %v3230 = vsel %vm2495, %v3223, 0.0
    %v3231 = vsel %vm2495, %v3229, 0.0
    %3233 = vrot.lane.b32.xlu0 %v3231, 112
    %v3234 = vpop.permute.xlu0 %3233
    %v3235 = vsel %vm2430, %v3234, 0
    %3237 = vmatpush.msra.mxu0 0.0
    %3238 = vmatpush.msra.mxu0 0.0
    %3239 = vmatpush.msra.mxu0 0.0
    %3240 = vmatpush.msra.mxu0 0.0
    %3241 = vmatpush.msra.mxu0 0.0
    %3242 = vmatpush.msra.mxu0 0.0
    %3243 = vmatpush.msra.mxu0 0.0
    %3244 = vmatpush.msra.mxu0 0.0
    %3245 = vmatpush.msra.mxu0 0.0
    %3246 = vmatpush.msra.mxu0 0.0
    %3247 = vmatpush.msra.mxu0 0.0
    %3248 = vmatpush.msra.mxu0 0.0
    %3249 = vmatpush.msra.mxu0 0.0
    %3250 = vmatpush.msra.mxu0 0.0
    %3251 = vmatpush.msra.mxu0 0.0
    %3252 = vmatpush.msra.mxu0 %v3134
    %3253 = vmatmul.f32.gmra.mxu0 %v3235
    %v3254 = vpop.f32.mrf.mxu0
    %v3255 = vadd.f32 0.0, %v3254
    %3256 = vdwg.mxu0
    %v3258 = vrot.slane %v3255, 6
    %v3260 = vadd.f32 %v3167, %v3258
    %v3261 = vxor.u32 %v3260, 2147483648
    %v3262 = vmul.f32 %v3261, 1.442695
    %v3263 = vpow.pop %v3262
    %v3264 = vadd.f32 %v3263, 1.0
    %v3265 = vrcp.pop %v3264
    %v3266 = vmul.f32 %v3264, %v3265
    %v3267 = vsub.f32 1.0, %v3266
    %v3268 = vmul.f32 %v3265, %v3267
    %v3269 = vadd.f32 %v3265, %v3268
    %vm3270 = vweird.f32 %v3264
    %vm3271 = vweird.f32 %v3265
    %vm3272 = vmor %vm3270, %vm3271
    %v3273 = vsel %vm3272, %v3265, %v3269
    %v3274 = vand.u32 2147483647, %v3264
    %vm3275 = vcmp.eq.f32.partialorder %v3274, 8.507059e+37
    %v3276 = vand.u32 %v3264, 2147483648
    %v3277 = vor.u32 1.1754944e-38, %v3276
    %v3278 = vsel %vm3275, %v3277, %v3273
    %v3279 = vmul.f32 1.0, %v3278
    %v3280 = vtanh.pop %v3260
    %v3282 = vrot.slane %v3230, 6
    %v3284 = vmul.f32 %v3279, %v3282
    %3286 = vrot.lane.b32.xlu0 %v3280, 104
    %v3287 = vpop.permute.xlu0 %3286
    %v3289 = vmul.f32 %v3279, %v3287
    %3291 = vrot.lane.b32.xlu0 %v3289, 8
    %v3292 = vpop.permute.xlu0 %3291
    %v3294 = vadd.f32 %v3284, %v3292
    %v3295 = vtanh.pop %v3294
    %3297 = vrot.lane.b32.xlu0 %v3295, 8
    %v3298 = vpop.permute.xlu0 %3297
    %v3300 = vmul.f32 %v3279, %v3298
    %v3302 = vrot.slane %v3294, 2
    %3303 = vrot.lane.b32.xlu0 %v3302, 120
    %v3304 = vpop.permute.xlu0 %3303
    %3306 = vrot.lane.b32.xlu0 %v3230, 120
    %v3307 = vpop.permute.xlu0 %3306
    %v3309 = vsel %vm2571, %v3304, %v3307
    %v3311 = vrot.slane %v3300, 2
    %3312 = vrot.lane.b32.xlu0 %v3311, 112
    %v3313 = vpop.permute.xlu0 %3312
    %v3316 = vsel %vm2571, %v3313, %v3234
    %v3317 = vsel %vm2571, %v3313, 0.0
    %v3319 = vsel %vm2430, %v3316, 0
    %3321 = vmatpush.msra.mxu0 0.0
    %3322 = vmatpush.msra.mxu0 0.0
    %3323 = vmatpush.msra.mxu0 0.0
    %3324 = vmatpush.msra.mxu0 0.0
    %3325 = vmatpush.msra.mxu0 0.0
    %3326 = vmatpush.msra.mxu0 0.0
    %3327 = vmatpush.msra.mxu0 0.0
    %3328 = vmatpush.msra.mxu0 0.0
    %3329 = vmatpush.msra.mxu0 0.0
    %3330 = vmatpush.msra.mxu0 0.0
    %3331 = vmatpush.msra.mxu0 0.0
    %3332 = vmatpush.msra.mxu0 0.0
    %3333 = vmatpush.msra.mxu0 0.0
    %3334 = vmatpush.msra.mxu0 0.0
    %3335 = vmatpush.msra.mxu0 0.0
    %3336 = vmatpush.msra.mxu0 %v3134
    %3337 = vmatmul.f32.gmra.mxu0 %v3319
    %v3338 = vpop.f32.mrf.mxu0
    %v3339 = vadd.f32 0.0, %v3338
    %3340 = vdwg.mxu0
    %v3342 = vrot.slane %v3339, 4
    %v3344 = vadd.f32 %v3167, %v3342
    %v3345 = vxor.u32 %v3344, 2147483648
    %v3346 = vmul.f32 %v3345, 1.442695
    %v3347 = vpow.pop %v3346
    %v3348 = vadd.f32 %v3347, 1.0
    %v3349 = vrcp.pop %v3348
    %v3350 = vmul.f32 %v3348, %v3349
    %v3351 = vsub.f32 1.0, %v3350
    %v3352 = vmul.f32 %v3349, %v3351
    %v3353 = vadd.f32 %v3349, %v3352
    %vm3354 = vweird.f32 %v3348
    %vm3355 = vweird.f32 %v3349
    %vm3356 = vmor %vm3354, %vm3355
    %v3357 = vsel %vm3356, %v3349, %v3353
    %v3358 = vand.u32 2147483647, %v3348
    %vm3359 = vcmp.eq.f32.partialorder %v3358, 8.507059e+37
    %v3360 = vand.u32 %v3348, 2147483648
    %v3361 = vor.u32 1.1754944e-38, %v3360
    %v3362 = vsel %vm3359, %v3361, %v3357
    %v3363 = vmul.f32 1.0, %v3362
    %v3364 = vtanh.pop %v3344
    %v3366 = vrot.slane %v3309, 4
    %3367 = vrot.lane.b32.xlu0 %v3366, 8
    %v3368 = vpop.permute.xlu0 %3367
    %v3370 = vmul.f32 %v3363, %v3368
    %3372 = vrot.lane.b32.xlu0 %v3364, 104
    %v3373 = vpop.permute.xlu0 %3372
    %v3375 = vmul.f32 %v3363, %v3373
    %3377 = vrot.lane.b32.xlu0 %v3375, 8
    %v3378 = vpop.permute.xlu0 %3377
    %v3380 = vadd.f32 %v3370, %v3378
    %v3381 = vtanh.pop %v3380
    %3383 = vrot.lane.b32.xlu0 %v3381, 8
    %v3384 = vpop.permute.xlu0 %3383
    %v3386 = vmul.f32 %v3363, %v3384
    %v3388 = vrot.slane %v3380, 4
    %3389 = vrot.lane.b32.xlu0 %v3388, 120
    %v3390 = vpop.permute.xlu0 %3389
    %v3392 = vsel %vm2662, %v3390, %v3309
    %v3394 = vrot.slane %v3386, 4
    %3395 = vrot.lane.b32.xlu0 %v3394, 112
    %v3396 = vpop.permute.xlu0 %3395
    %v3398 = vsel %vm2662, %v3396, %v3316
    %v3399 = vsel %vm2662, %v3396, 0.0
    %v3401 = vsel %vm2430, %v3398, 0
    %3403 = vmatpush.msra.mxu0 0.0
    %3404 = vmatpush.msra.mxu0 0.0
    %3405 = vmatpush.msra.mxu0 0.0
    %3406 = vmatpush.msra.mxu0 0.0
    %3407 = vmatpush.msra.mxu0 0.0
    %3408 = vmatpush.msra.mxu0 0.0
    %3409 = vmatpush.msra.mxu0 0.0
    %3410 = vmatpush.msra.mxu0 0.0
    %3411 = vmatpush.msra.mxu0 0.0
    %3412 = vmatpush.msra.mxu0 0.0
    %3413 = vmatpush.msra.mxu0 0.0
    %3414 = vmatpush.msra.mxu0 0.0
    %3415 = vmatpush.msra.mxu0 0.0
    %3416 = vmatpush.msra.mxu0 0.0
    %3417 = vmatpush.msra.mxu0 0.0
    %3418 = vmatpush.msra.mxu0 %v3134
    %3419 = vmatmul.f32.gmra.mxu0 %v3401
    %v3420 = vpop.f32.mrf.mxu0
    %v3421 = vadd.f32 0.0, %v3420
    %3422 = vdwg.mxu0
    %v3424 = vrot.slane %v3421, 2
    %v3426 = vadd.f32 %v3167, %v3424
    %v3427 = vxor.u32 %v3426, 2147483648
    %v3428 = vmul.f32 %v3427, 1.442695
    %v3429 = vpow.pop %v3428
    %v3430 = vadd.f32 %v3429, 1.0
    %v3431 = vrcp.pop %v3430
    %v3432 = vmul.f32 %v3430, %v3431
    %v3433 = vsub.f32 1.0, %v3432
    %v3434 = vmul.f32 %v3431, %v3433
    %v3435 = vadd.f32 %v3431, %v3434
    %vm3436 = vweird.f32 %v3430
    %vm3437 = vweird.f32 %v3431
    %vm3438 = vmor %vm3436, %vm3437
    %v3439 = vsel %vm3438, %v3431, %v3435
    %v3440 = vand.u32 2147483647, %v3430
    %vm3441 = vcmp.eq.f32.partialorder %v3440, 8.507059e+37
    %v3442 = vand.u32 %v3430, 2147483648
    %v3443 = vor.u32 1.1754944e-38, %v3442
    %v3444 = vsel %vm3441, %v3443, %v3439
    %v3445 = vmul.f32 1.0, %v3444
    %v3446 = vtanh.pop %v3426
    %v3448 = vrot.slane %v3392, 2
    %3449 = vrot.lane.b32.xlu0 %v3448, 8
    %v3450 = vpop.permute.xlu0 %3449
    %v3452 = vmul.f32 %v3445, %v3450
    %3454 = vrot.lane.b32.xlu0 %v3446, 104
    %v3455 = vpop.permute.xlu0 %3454
    %v3457 = vmul.f32 %v3445, %v3455
    %3459 = vrot.lane.b32.xlu0 %v3457, 8
    %v3460 = vpop.permute.xlu0 %3459
    %v3462 = vadd.f32 %v3452, %v3460
    %v3463 = vtanh.pop %v3462
    %3465 = vrot.lane.b32.xlu0 %v3463, 8
    %v3466 = vpop.permute.xlu0 %3465
    %v3468 = vmul.f32 %v3445, %v3466
    %v3470 = vrot.slane %v3462, 6
    %3471 = vrot.lane.b32.xlu0 %v3470, 120
    %v3472 = vpop.permute.xlu0 %3471
    %v3474 = vsel %vm2749, %v3472, %v3392
    %v3476 = vrot.slane %v3468, 6
    %3477 = vrot.lane.b32.xlu0 %v3476, 112
    %v3478 = vpop.permute.xlu0 %3477
    %v3480 = vsel %vm2749, %v3478, %v3398
    %v3481 = vsel %vm2749, %v3478, 0.0
    %v3483 = vsel %vm2430, %v3480, 0
    %3485 = vmatpush.msra.mxu0 0.0
    %3486 = vmatpush.msra.mxu0 0.0
    %3487 = vmatpush.msra.mxu0 0.0
    %3488 = vmatpush.msra.mxu0 0.0
    %3489 = vmatpush.msra.mxu0 0.0
    %3490 = vmatpush.msra.mxu0 0.0
    %3491 = vmatpush.msra.mxu0 0.0
    %3492 = vmatpush.msra.mxu0 0.0
    %3493 = vmatpush.msra.mxu0 0.0
    %3494 = vmatpush.msra.mxu0 0.0
    %3495 = vmatpush.msra.mxu0 0.0
    %3496 = vmatpush.msra.mxu0 0.0
    %3497 = vmatpush.msra.mxu0 0.0
    %3498 = vmatpush.msra.mxu0 0.0
    %3499 = vmatpush.msra.mxu0 0.0
    %3500 = vmatpush.msra.mxu0 %v3134
    %3501 = vmatmul.f32.gmra.mxu0 %v3483
    %v3502 = vpop.f32.mrf.mxu0
    %v3503 = vadd.f32 0.0, %v3502
    %3504 = vdwg.mxu0
    %v3505 = vadd.f32 %v3170, %v3503
    %v3506 = vxor.u32 %v3505, 2147483648
    %v3507 = vmul.f32 %v3506, 1.442695
    %v3508 = vpow.pop %v3507
    %v3509 = vadd.f32 %v3508, 1.0
    %v3510 = vrcp.pop %v3509
    %v3511 = vmul.f32 %v3509, %v3510
    %v3512 = vsub.f32 1.0, %v3511
    %v3513 = vmul.f32 %v3510, %v3512
    %v3514 = vadd.f32 %v3510, %v3513
    %vm3515 = vweird.f32 %v3509
    %vm3516 = vweird.f32 %v3510
    %vm3517 = vmor %vm3515, %vm3516
    %v3518 = vsel %vm3517, %v3510, %v3514
    %v3519 = vand.u32 2147483647, %v3509
    %vm3520 = vcmp.eq.f32.partialorder %v3519, 8.507059e+37
    %v3521 = vand.u32 %v3509, 2147483648
    %v3522 = vor.u32 1.1754944e-38, %v3521
    %v3523 = vsel %vm3520, %v3522, %v3518
    %v3524 = vmul.f32 1.0, %v3523
    %v3525 = vtanh.pop %v3505
    %3527 = vrot.lane.b32.xlu0 %v3474, 8
    %v3528 = vpop.permute.xlu0 %3527
    %v3530 = vmul.f32 %v3524, %v3528
    %3532 = vrot.lane.b32.xlu0 %v3525, 104
    %v3533 = vpop.permute.xlu0 %3532
    %v3535 = vmul.f32 %v3524, %v3533
    %3537 = vrot.lane.b32.xlu0 %v3535, 8
    %v3538 = vpop.permute.xlu0 %3537
    %v3540 = vadd.f32 %v3530, %v3538
    %v3541 = vtanh.pop %v3540
    %3543 = vrot.lane.b32.xlu0 %v3541, 8
    %v3544 = vpop.permute.xlu0 %3543
    %v3546 = vmul.f32 %v3524, %v3544
    %v3547 = vsel %vm2832, %v3540, %v3528
    %3548 = vrot.lane.b32.xlu0 %v3480, 16
    %v3549 = vpop.permute.xlu0 %3548
    %v3551 = vsel %vm2832, %v3546, %v3549
    %v3552 = vsel %vm2832, %v3546, 0.0
    %3554 = vrot.lane.b32.xlu0 %v3551, 112
    %v3555 = vpop.permute.xlu0 %3554
    %v3556 = vsel %vm2430, %v3555, 0
    %3558 = vmatpush.msra.mxu0 0.0
    %3559 = vmatpush.msra.mxu0 0.0
    %3560 = vmatpush.msra.mxu0 0.0
    %3561 = vmatpush.msra.mxu0 0.0
    %3562 = vmatpush.msra.mxu0 0.0
    %3563 = vmatpush.msra.mxu0 0.0
    %3564 = vmatpush.msra.mxu0 0.0
    %3565 = vmatpush.msra.mxu0 0.0
    %3566 = vmatpush.msra.mxu0 0.0
    %3567 = vmatpush.msra.mxu0 0.0
    %3568 = vmatpush.msra.mxu0 0.0
    %3569 = vmatpush.msra.mxu0 0.0
    %3570 = vmatpush.msra.mxu0 0.0
    %3571 = vmatpush.msra.mxu0 0.0
    %3572 = vmatpush.msra.mxu0 0.0
    %3573 = vmatpush.msra.mxu0 %v3134
    %3574 = vmatmul.f32.gmra.mxu0 %v3556
    %v3575 = vpop.f32.mrf.mxu0
    %v3576 = vadd.f32 0.0, %v3575
    %3577 = vdwg.mxu0
    %v3579 = vrot.slane %v3576, 6
    %v3581 = vadd.f32 %v3170, %v3579
    %v3582 = vxor.u32 %v3581, 2147483648
    %v3583 = vmul.f32 %v3582, 1.442695
    %v3584 = vpow.pop %v3583
    %v3585 = vadd.f32 %v3584, 1.0
    %v3586 = vrcp.pop %v3585
    %v3587 = vmul.f32 %v3585, %v3586
    %v3588 = vsub.f32 1.0, %v3587
    %v3589 = vmul.f32 %v3586, %v3588
    %v3590 = vadd.f32 %v3586, %v3589
    %vm3591 = vweird.f32 %v3585
    %vm3592 = vweird.f32 %v3586
    %vm3593 = vmor %vm3591, %vm3592
    %v3594 = vsel %vm3593, %v3586, %v3590
    %v3595 = vand.u32 2147483647, %v3585
    %vm3596 = vcmp.eq.f32.partialorder %v3595, 8.507059e+37
    %v3597 = vand.u32 %v3585, 2147483648
    %v3598 = vor.u32 1.1754944e-38, %v3597
    %v3599 = vsel %vm3596, %v3598, %v3594
    %v3600 = vmul.f32 1.0, %v3599
    %v3601 = vtanh.pop %v3581
    %v3603 = vrot.slane %v3547, 6
    %v3605 = vmul.f32 %v3600, %v3603
    %3607 = vrot.lane.b32.xlu0 %v3601, 104
    %v3608 = vpop.permute.xlu0 %3607
    %v3610 = vmul.f32 %v3600, %v3608
    %3612 = vrot.lane.b32.xlu0 %v3610, 8
    %v3613 = vpop.permute.xlu0 %3612
    %v3615 = vadd.f32 %v3605, %v3613
    %v3616 = vtanh.pop %v3615
    %3618 = vrot.lane.b32.xlu0 %v3616, 8
    %v3619 = vpop.permute.xlu0 %3618
    %v3621 = vmul.f32 %v3600, %v3619
    %v3623 = vrot.slane %v3615, 2
    %3624 = vrot.lane.b32.xlu0 %v3623, 120
    %v3625 = vpop.permute.xlu0 %3624
    %3627 = vrot.lane.b32.xlu0 %v3547, 120
    %v3628 = vpop.permute.xlu0 %3627
    %v3630 = vsel %vm2912, %v3625, %v3628
    %v3632 = vrot.slane %v3621, 2
    %3633 = vrot.lane.b32.xlu0 %v3632, 112
    %v3634 = vpop.permute.xlu0 %3633
    %v3637 = vsel %vm2912, %v3634, %v3555
    %v3638 = vsel %vm2912, %v3634, 0.0
    %v3640 = vsel %vm2430, %v3637, 0
    %3642 = vmatpush.msra.mxu0 0.0
    %3643 = vmatpush.msra.mxu0 0.0
    %3644 = vmatpush.msra.mxu0 0.0
    %3645 = vmatpush.msra.mxu0 0.0
    %3646 = vmatpush.msra.mxu0 0.0
    %3647 = vmatpush.msra.mxu0 0.0
    %3648 = vmatpush.msra.mxu0 0.0
    %3649 = vmatpush.msra.mxu0 0.0
    %3650 = vmatpush.msra.mxu0 0.0
    %3651 = vmatpush.msra.mxu0 0.0
    %3652 = vmatpush.msra.mxu0 0.0
    %3653 = vmatpush.msra.mxu0 0.0
    %3654 = vmatpush.msra.mxu0 0.0
    %3655 = vmatpush.msra.mxu0 0.0
    %3656 = vmatpush.msra.mxu0 0.0
    %3657 = vmatpush.msra.mxu0 %v3134
    %3658 = vmatmul.f32.gmra.mxu0 %v3640
    %v3659 = vpop.f32.mrf.mxu0
    %v3660 = vadd.f32 0.0, %v3659
    %3661 = vdwg.mxu0
    %v3663 = vrot.slane %v3660, 4
    %v3665 = vadd.f32 %v3170, %v3663
    %v3666 = vxor.u32 %v3665, 2147483648
    %v3667 = vmul.f32 %v3666, 1.442695
    %v3668 = vpow.pop %v3667
    %v3669 = vadd.f32 %v3668, 1.0
    %v3670 = vrcp.pop %v3669
    %v3671 = vmul.f32 %v3669, %v3670
    %v3672 = vsub.f32 1.0, %v3671
    %v3673 = vmul.f32 %v3670, %v3672
    %v3674 = vadd.f32 %v3670, %v3673
    %vm3675 = vweird.f32 %v3669
    %vm3676 = vweird.f32 %v3670
    %vm3677 = vmor %vm3675, %vm3676
    %v3678 = vsel %vm3677, %v3670, %v3674
    %v3679 = vand.u32 2147483647, %v3669
    %vm3680 = vcmp.eq.f32.partialorder %v3679, 8.507059e+37
    %v3681 = vand.u32 %v3669, 2147483648
    %v3682 = vor.u32 1.1754944e-38, %v3681
    %v3683 = vsel %vm3680, %v3682, %v3678
    %v3684 = vmul.f32 1.0, %v3683
    %v3685 = vtanh.pop %v3665
    %v3687 = vrot.slane %v3630, 4
    %3688 = vrot.lane.b32.xlu0 %v3687, 8
    %v3689 = vpop.permute.xlu0 %3688
    %v3691 = vmul.f32 %v3684, %v3689
    %3693 = vrot.lane.b32.xlu0 %v3685, 104
    %v3694 = vpop.permute.xlu0 %3693
    %v3696 = vmul.f32 %v3684, %v3694
    %3698 = vrot.lane.b32.xlu0 %v3696, 8
    %v3699 = vpop.permute.xlu0 %3698
    %v3701 = vadd.f32 %v3691, %v3699
    %v3702 = vtanh.pop %v3701
    %3704 = vrot.lane.b32.xlu0 %v3702, 8
    %v3705 = vpop.permute.xlu0 %3704
    %v3707 = vmul.f32 %v3684, %v3705
    %v3709 = vrot.slane %v3701, 4
    %3710 = vrot.lane.b32.xlu0 %v3709, 120
    %v3711 = vpop.permute.xlu0 %3710
    %v3713 = vsel %vm3003, %v3711, %v3630
    %v3715 = vrot.slane %v3707, 4
    %3716 = vrot.lane.b32.xlu0 %v3715, 112
    %v3717 = vpop.permute.xlu0 %3716
    %v3719 = vsel %vm3003, %v3717, %v3637
    %v3720 = vsel %vm3003, %v3717, 0.0
    %v3722 = vsel %vm2430, %v3719, 0
    %3724 = vmatpush.msra.mxu0 0.0
    %3725 = vmatpush.msra.mxu0 0.0
    %3726 = vmatpush.msra.mxu0 0.0
    %3727 = vmatpush.msra.mxu0 0.0
    %3728 = vmatpush.msra.mxu0 0.0
    %3729 = vmatpush.msra.mxu0 0.0
    %3730 = vmatpush.msra.mxu0 0.0
    %3731 = vmatpush.msra.mxu0 0.0
    %3732 = vmatpush.msra.mxu0 0.0
    %3733 = vmatpush.msra.mxu0 0.0
    %3734 = vmatpush.msra.mxu0 0.0
    %3735 = vmatpush.msra.mxu0 0.0
    %3736 = vmatpush.msra.mxu0 0.0
    %3737 = vmatpush.msra.mxu0 0.0
    %3738 = vmatpush.msra.mxu0 0.0
    %3739 = vmatpush.msra.mxu0 %v3134
    %3740 = vmatmul.f32.gmra.mxu0 %v3722
    %v3741 = vpop.f32.mrf.mxu0
    %v3742 = vadd.f32 0.0, %v3741
    %3743 = vdwg.mxu0
    %v3745 = vrot.slane %v3742, 2
    %v3747 = vadd.f32 %v3170, %v3745
    %v3748 = vxor.u32 %v3747, 2147483648
    %v3749 = vmul.f32 %v3748, 1.442695
    %v3750 = vpow.pop %v3749
    %v3751 = vadd.f32 %v3750, 1.0
    %v3752 = vrcp.pop %v3751
    %v3753 = vmul.f32 %v3751, %v3752
    %v3754 = vsub.f32 1.0, %v3753
    %v3755 = vmul.f32 %v3752, %v3754
    %v3756 = vadd.f32 %v3752, %v3755
    %vm3757 = vweird.f32 %v3751
    %vm3758 = vweird.f32 %v3752
    %vm3759 = vmor %vm3757, %vm3758
    %v3760 = vsel %vm3759, %v3752, %v3756
    %v3761 = vand.u32 2147483647, %v3751
    %vm3762 = vcmp.eq.f32.partialorder %v3761, 8.507059e+37
    %v3763 = vand.u32 %v3751, 2147483648
    %v3764 = vor.u32 1.1754944e-38, %v3763
    %v3765 = vsel %vm3762, %v3764, %v3760
    %v3766 = vmul.f32 1.0, %v3765
    %v3767 = vtanh.pop %v3747
    %v3769 = vrot.slane %v3713, 2
    %3770 = vrot.lane.b32.xlu0 %v3769, 8
    %v3771 = vpop.permute.xlu0 %3770
    %v3773 = vmul.f32 %v3766, %v3771
    %3775 = vrot.lane.b32.xlu0 %v3767, 104
    %v3776 = vpop.permute.xlu0 %3775
    %v3778 = vmul.f32 %v3766, %v3776
    %3780 = vrot.lane.b32.xlu0 %v3778, 8
    %v3781 = vpop.permute.xlu0 %3780
    %v3783 = vadd.f32 %v3773, %v3781
    %v3784 = vtanh.pop %v3783
    %3786 = vrot.lane.b32.xlu0 %v3784, 8
    %v3787 = vpop.permute.xlu0 %3786
    %v3789 = vmul.f32 %v3766, %v3787
    %v3791 = vrot.slane %v3789, 6
    %3792 = vrot.lane.b32.xlu0 %v3791, 112
    %v3793 = vpop.permute.xlu0 %3792
    %v3795 = vsel %vm3090, %v3793, 0.0
    %v3797 = vrot.slane %v3317, 6
    %3798 = vrot.lane.b32.xlu0 %v3797, 16
    %v3799 = vpop.permute.xlu0 %3798
    %v3802 = vrot.slane %v3399, 4
    %3803 = vrot.lane.b32.xlu0 %v3802, 16
    %v3804 = vpop.permute.xlu0 %3803
    %v3807 = vrot.slane %v3481, 2
    %3808 = vrot.lane.b32.xlu0 %v3807, 16
    %v3809 = vpop.permute.xlu0 %3808
    %v3812 = vrot.slane %v3638, 6
    %3813 = vrot.lane.b32.xlu0 %v3812, 16
    %v3814 = vpop.permute.xlu0 %3813
    %v3817 = vrot.slane %v3720, 4
    %3818 = vrot.lane.b32.xlu0 %v3817, 16
    %v3819 = vpop.permute.xlu0 %3818
    %v3822 = vrot.slane %v3795, 2
    %3823 = vrot.lane.b32.xlu0 %v3822, 16
    %v3824 = vpop.permute.xlu0 %3823
    %v3826 = vsel %vm1266, %v3231, %v3799
    %v3827 = vsel %vm1268, %v3826, %v3804
    %v3828 = vsel %vm1270, %v3827, %v3809
    %v3829 = vsel %vm1266, %v3552, %v3814
    %v3830 = vsel %vm1268, %v3829, %v3819
    %v3831 = vsel %vm1270, %v3830, %v3824
    %v3832 = vld [vmem:[%s14] sm:$0xff]
    %v3833 = vld [vmem:[%s15] sm:$0x1]
    %v3835 = vperm.slane %v3833, 0
    %3839 = vrot.lane.b32.xlu0 %v3828, 112
    %v3840 = vpop.permute.xlu0 %3839
    %3841 = vrot.lane.b32.xlu0 %v3831, 112
    %v3842 = vpop.permute.xlu0 %3841
    %v3843 = vsel %vm2430, %v3840, 0
    %v3845 = vsel %vm2430, %v3842, 0
    %3847 = vmatpush.msra.mxu0 0.0
    %3848 = vmatpush.msra.mxu0 0.0
    %3849 = vmatpush.msra.mxu0 0.0
    %3850 = vmatpush.msra.mxu0 0.0
    %3851 = vmatpush.msra.mxu0 0.0
    %3852 = vmatpush.msra.mxu0 0.0
    %3853 = vmatpush.msra.mxu0 0.0
    %3854 = vmatpush.msra.mxu0 0.0
    %3855 = vmatpush.msra.mxu0 0.0
    %3856 = vmatpush.msra.mxu0 0.0
    %3857 = vmatpush.msra.mxu0 0.0
    %3858 = vmatpush.msra.mxu0 0.0
    %3859 = vmatpush.msra.mxu0 0.0
    %3860 = vmatpush.msra.mxu0 0.0
    %3861 = vmatpush.msra.mxu0 0.0
    %3862 = vmatpush.msra.mxu0 %v3832
    %3863 = vmatmul.f32.gmra.mxu0 %v3843
    %v3864 = vpop.f32.mrf.mxu0
    %v3865 = vadd.f32 %v3835, %v3864
    %3866 = vmatmul.f32.gmra.mxu0 %v3845
    %v3867 = vpop.f32.mrf.mxu0
    %v3868 = vadd.f32 %v3835, %v3867
    %3869 = vdwg.mxu0
    %v3870 = vxor.u32 %v3865, 2147483648
    %v3871 = vxor.u32 %v3868, 2147483648
    %v3872 = vmul.f32 %v3870, 1.442695
    %v3873 = vpow.pop %v3872
    %v3874 = vmul.f32 %v3871, 1.442695
    %v3875 = vpow.pop %v3874
    %v3876 = vadd.f32 %v3873, 1.0
    %v3877 = vadd.f32 %v3875, 1.0
    %v3878 = vrcp.pop %v3876
    %v3879 = vmul.f32 %v3876, %v3878
    %v3880 = vsub.f32 1.0, %v3879
    %v3881 = vmul.f32 %v3878, %v3880
    %v3882 = vadd.f32 %v3878, %v3881
    %vm3883 = vweird.f32 %v3876
    %vm3884 = vweird.f32 %v3878
    %vm3885 = vmor %vm3883, %vm3884
    %v3886 = vsel %vm3885, %v3878, %v3882
    %v3887 = vand.u32 2147483647, %v3876
    %vm3888 = vcmp.eq.f32.partialorder %v3887, 8.507059e+37
    %v3889 = vand.u32 %v3876, 2147483648
    %v3890 = vor.u32 1.1754944e-38, %v3889
    %v3891 = vsel %vm3888, %v3890, %v3886
    %v3892 = vmul.f32 1.0, %v3891
    %v3893 = vrcp.pop %v3877
    %v3894 = vmul.f32 %v3877, %v3893
    %v3895 = vsub.f32 1.0, %v3894
    %v3896 = vmul.f32 %v3893, %v3895
    %v3897 = vadd.f32 %v3893, %v3896
    %vm3898 = vweird.f32 %v3877
    %vm3899 = vweird.f32 %v3893
    %vm3900 = vmor %vm3898, %vm3899
    %v3901 = vsel %vm3900, %v3893, %v3897
    %v3902 = vand.u32 2147483647, %v3877
    %vm3903 = vcmp.eq.f32.partialorder %v3902, 8.507059e+37
    %v3904 = vand.u32 %v3877, 2147483648
    %v3905 = vor.u32 1.1754944e-38, %v3904
    %v3906 = vsel %vm3903, %v3905, %v3901
    %v3907 = vmul.f32 1.0, %v3906
    %3908 = vst.msk [vmem:[%s16] sm:$0xff] %vm2430, %v3892
    %3909 = vst.msk [vmem:[%s16 + $0x8] sm:$0xff] %vm2430, %v3907
    // Predicated region
    $region78: #{deep_classifier_forward.1} parent=1 // pred_check
      _
    $region79: #{deep_classifier_forward.1} parent=1 // pred_check_branch
      %3911 = sbr.rel (0) target = $region81
    $region80: #{deep_classifier_forward.1} parent=1 // pred_region
      _
    $region81: #{deep_classifier_forward.1} parent=1 // pred_fallthru
      _
    // Predicated region
    $region82: #{deep_classifier_forward.1} parent=1 // pred_check
      _
    $region83: #{deep_classifier_forward.1} parent=1 // pred_check_branch
      %3913 = sbr.rel (0) target = $region85
    $region84: #{deep_classifier_forward.1} parent=1 // pred_region
      _
    $region85: #{deep_classifier_forward.1} parent=1 // pred_fallthru
      _
    %3914 = vsyncpa [#allocation3], 1
    %3915 = vsyncpa [#allocation5], 1

</llo_original>
